<compile_context>
chip_gen: v6e
topology: v6e:2x2x1
jax: 0.10.0
libtpu: 0.0.40
codegen_flags: <defaults>
</compile_context>

<pallas_src>
import jax
import jax.numpy as jnp
import numpy as np
from jax.experimental import pallas as pl
from jax.experimental.pallas import tpu as pltpu

# ---------------- synthetic "BERT" config (small) ----------------
VOCAB = 50
TYPE_VOCAB = 2
MAX_POS = 16
HIDDEN = 32          # stand-in for 768
N_HEADS = 2
HEAD_DIM = HIDDEN // N_HEADS
FFN = 64
N_LAYERS = 2
N_CLASSES = 3
VEC_W = 128          # lane-dense width for packed vectors and the two outputs
LN_EPS = 1e-12

# ---- vector-bank row layout (every row zero-padded to VEC_W lanes) ----
ROW_EMB_G = 0
ROW_EMB_B = 1
ROWS_PER_LAYER = 3 * N_HEADS + 7   # bq/bk/bv per head + bo, ln1g, ln1b, b1, b2, ln2g, ln2b
ROW_POOL_B = 2 + N_LAYERS * ROWS_PER_LAYER
ROW_CLS_B = ROW_POOL_B + 1
N_VEC_ROWS = ROW_CLS_B + 1


def _layernorm(x, g, b):
    mu = jnp.mean(x, axis=-1, keepdims=True)
    var = jnp.mean(jnp.square(x - mu), axis=-1, keepdims=True)
    return (x - mu) * jax.lax.rsqrt(var + LN_EPS) * g + b


# ---------------- the one fused kernel ----------------
def _bert_kernel(x_ref, bias_ref, wqkv_ref, wo_ref, w1_ref, w2_ref,
                 vec_ref, fin_ref, pooled_ref, score_ref, x_scr):
    B = pooled_ref.shape[0]
    S = x_ref.shape[0] // B
    scale = 1.0 / float(HEAD_DIM) ** 0.5

    bias = bias_ref[...]                     # (B*S, B*S) block-diag + padding bias

    def vrow(r, w):                          # static (1, w) slice of the vector bank
        return vec_ref[r:r + 1, :w]

    # Embedding LayerNorm.
    x = _layernorm(x_ref[...], vrow(ROW_EMB_G, HIDDEN), vrow(ROW_EMB_B, HIDDEN))

    # Layer loop: statically unrolled (N_LAYERS=2).  For many layers switch to
    # lax.fori_loop with dynamic leading-axis ref indexing over the same
    # stacked weights.
    for l in range(N_LAYERS):
        base = 2 + l * ROWS_PER_LAYER

        # ---- self-attention: batched over B via block-diagonal bias,
        #      per-head weights pre-split (no lane slices / concats) ----
        attn = None
        for h in range(N_HEADS):
            wq = wqkv_ref[(l * 3 + 0) * N_HEADS + h]          # (H, HEAD_DIM)
            wk = wqkv_ref[(l * 3 + 1) * N_HEADS + h]
            wv = wqkv_ref[(l * 3 + 2) * N_HEADS + h]
            q = jnp.dot(x, wq, preferred_element_type=jnp.float32) + vrow(base + 3 * h + 0, HEAD_DIM)
            k = jnp.dot(x, wk, preferred_element_type=jnp.float32) + vrow(base + 3 * h + 1, HEAD_DIM)
            v = jnp.dot(x, wv, preferred_element_type=jnp.float32) + vrow(base + 3 * h + 2, HEAD_DIM)

            s = jax.lax.dot_general(q, k, (((1,), (1,)), ((), ())),
                                    preferred_element_type=jnp.float32)  # (B*S, B*S)
            s = s * scale + bias
            s = s - jnp.max(s, axis=-1, keepdims=True)
            p = jnp.exp(s)
            p = p * pl.reciprocal(jnp.sum(p, axis=-1, keepdims=True), approx=True)

            ctx = jnp.dot(p, v, preferred_element_type=jnp.float32)      # (B*S, HEAD_DIM)
            contrib = jnp.dot(ctx, wo_ref[l * N_HEADS + h],              # head-blocked wo
                              preferred_element_type=jnp.float32)        # (B*S, H)
            attn = contrib if attn is None else attn + contrib

        vb = base + 3 * N_HEADS
        attn = attn + vrow(vb + 0, HIDDEN)                               # bo
        x = _layernorm(attn + x, vrow(vb + 1, HIDDEN), vrow(vb + 2, HIDDEN))

        # ---- GELU feed-forward ----
        # TODO(synk): HF BERT uses exact (erf) GELU; tanh-approx GELU is kept
        # for a simple VPU/EUP lowering, so outputs won't bit-match PyTorch.
        hh = jnp.dot(x, w1_ref[l], preferred_element_type=jnp.float32) + vrow(vb + 3, FFN)
        hh = jax.nn.gelu(hh, approximate=True)
        hh = jnp.dot(hh, w2_ref[l], preferred_element_type=jnp.float32) + vrow(vb + 4, HIDDEN)
        x = _layernorm(hh + x, vrow(vb + 5, HIDDEN), vrow(vb + 6, HIDDEN))

    # ---- CLS gather (single strided read) + tanh pooler + classifier ----
    x_scr[...] = x
    cls = x_scr[pl.ds(0, B, stride=S), :]                                # rows 0, S, 2S, ...

    poolw = fin_ref[0:HIDDEN, :]                                         # (H, 128), lanes>=H are 0
    clsw = fin_ref[HIDDEN:HIDDEN + VEC_W, :]                             # (128, 128), rows>=H are 0
    pooled = jnp.tanh(jnp.dot(cls, poolw, preferred_element_type=jnp.float32)
                      + vrow(ROW_POOL_B, VEC_W))                         # (B, 128) lane-dense
    pooled_ref[...] = pooled.astype(pooled_ref.dtype)
    score = (jnp.dot(pooled, clsw, preferred_element_type=jnp.float32)
             + vrow(ROW_CLS_B, VEC_W))                                   # (B, 128) lane-dense
    score_ref[...] = score.astype(score_ref.dtype)


# ---------------- one-time parameter packing (hoisted out of the hot path) ---
def pack_params(raw, B, S):
    L, H, F, NH, HD = N_LAYERS, HIDDEN, FFN, N_HEADS, HEAD_DIM

    # Per-head Q/K/V weights: (L*3*NH, H, HD); head-blocked wo: (L*NH, HD, H).
    wqkv_heads = jnp.transpose(raw["wqkv"].reshape(L, H, 3, NH, HD),
                               (0, 2, 3, 1, 4)).reshape(L * 3 * NH, H, HD)
    wo_heads = raw["wo"].reshape(L, NH, HD, H).reshape(L * NH, HD, H)

    def pad_row(v):
        v = jnp.ravel(v).astype(jnp.float32)
        return jnp.zeros((VEC_W,), jnp.float32).at[:v.shape[0]].set(v)

    rows = [pad_row(raw["emb_ln_g"]), pad_row(raw["emb_ln_b"])]
    for l in range(L):
        for h in range(NH):
            for t in range(3):                                   # q, k, v bias for head h
                rows.append(pad_row(raw["bqkv"][l, 0, t * H + h * HD: t * H + (h + 1) * HD]))
        rows.append(pad_row(raw["bo"][l]))
        rows.append(pad_row(raw["ln1_g"][l]))
        rows.append(pad_row(raw["ln1_b"][l]))
        rows.append(pad_row(raw["b1"][l]))
        rows.append(pad_row(raw["b2"][l]))
        rows.append(pad_row(raw["ln2_g"][l]))
        rows.append(pad_row(raw["ln2_b"][l]))
    rows.append(pad_row(raw["pool_b"]))
    rows.append(pad_row(raw["cls_b"]))
    vec_bank = jnp.stack(rows, axis=0)
    assert vec_bank.shape == (N_VEC_ROWS, VEC_W)

    # Lane-dense pooler + classifier weights (padding lanes/rows are zero so the
    # padded output lanes are exactly 0 / tanh(0); sliced off in the wrapper).
    poolw_pad = jnp.zeros((H, VEC_W), jnp.float32).at[:, :H].set(raw["pool_w"])
    clsw_pad = jnp.zeros((VEC_W, VEC_W), jnp.float32).at[:H, :N_CLASSES].set(raw["cls_w"])
    final_w = jnp.concatenate([poolw_pad, clsw_pad], axis=0)     # (H+128, 128)

    # Static block-diagonal (cross-batch) part of the attention bias.
    seg = np.arange(B * S) // S
    cross_bias = jnp.asarray(np.where(seg[:, None] == seg[None, :], 0.0, -1e9),
                             dtype=jnp.float32)                  # (B*S, B*S)

    return {
        "word_emb": raw["word_emb"], "pos_emb": raw["pos_emb"], "type_emb": raw["type_emb"],
        "wqkv_heads": wqkv_heads, "wo_heads": wo_heads,
        "w1": raw["w1"], "w2": raw["w2"],
        "vec_bank": vec_bank, "final_w": final_w, "cross_bias": cross_bias,
    }


# ---------------- model wrapper (minimal per-call JAX glue) ----------------
def bert_classify_forward(packed, input_ids, attention_mask, token_type_ids):
    B, S = input_ids.shape

    # Embedding table gathers stay in plain JAX (data-dependent gather).
    pos_ids = jnp.arange(S, dtype=jnp.int32)[None, :]
    emb = (packed["word_emb"][input_ids]
           + packed["pos_emb"][pos_ids]
           + packed["type_emb"][token_type_ids])                 # (B, S, H)
    x0 = emb.reshape(B * S, HIDDEN).astype(jnp.float32)

    # HF-style additive padding bias broadcast over queries + precomputed
    # cross-batch block-diagonal bias.
    key_bias = ((1.0 - attention_mask.astype(jnp.float32)) * -10000.0).reshape(B * S)
    attn_bias = packed["cross_bias"] + key_bias[None, :]         # (B*S, B*S)

    vmem = pl.BlockSpec(memory_space=pltpu.MemorySpace.VMEM)
    inputs = (x0, attn_bias, packed["wqkv_heads"], packed["wo_heads"],
              packed["w1"], packed["w2"], packed["vec_bank"], packed["final_w"])
    pooled_pad, score_pad = pl.pallas_call(
        _bert_kernel,
        out_shape=(jax.ShapeDtypeStruct((B, VEC_W), jnp.float32),
                   jax.ShapeDtypeStruct((B, VEC_W), jnp.float32)),
        in_specs=[vmem] * len(inputs),
        out_specs=(vmem, vmem),
        scratch_shapes=[pltpu.VMEM((B * S, HIDDEN), jnp.float32)],
    )(*inputs)
    return pooled_pad[:, :HIDDEN], score_pad[:, :N_CLASSES]


# ---------------- pure-JAX reference (same synthetic weights & math) ----------
def _reference_forward(params, input_ids, attention_mask, token_type_ids):
    B, S = input_ids.shape
    pos = jnp.arange(S, dtype=jnp.int32)[None, :]
    x = (params["word_emb"][input_ids] + params["pos_emb"][pos]
         + params["type_emb"][token_type_ids]).astype(jnp.float32)

    def ln(x, g, b):
        mu = x.mean(-1, keepdims=True)
        var = jnp.square(x - mu).mean(-1, keepdims=True)
        return (x - mu) * jax.lax.rsqrt(var + LN_EPS) * g + b

    x = ln(x, params["emb_ln_g"], params["emb_ln_b"])            # (B, S, H)
    bias = ((1.0 - attention_mask.astype(jnp.float32)) * -10000.0)[:, None, None, :]
    for l in range(N_LAYERS):
        qkv = x @ params["wqkv"][l] + params["bqkv"][l]
        q, k, v = jnp.split(qkv, 3, axis=-1)

        def heads(t):
            return t.reshape(B, S, N_HEADS, HEAD_DIM).transpose(0, 2, 1, 3)

        q, k, v = heads(q), heads(k), heads(v)
        s = jnp.einsum("bhqd,bhkd->bhqk", q, k) / float(HEAD_DIM) ** 0.5 + bias
        p = jax.nn.softmax(s, axis=-1)
        ctx = jnp.einsum("bhqk,bhkd->bhqd", p, v).transpose(0, 2, 1, 3)
        ctx = ctx.reshape(B, S, HIDDEN)
        attn_out = ctx @ params["wo"][l] + params["bo"][l]
        x = ln(attn_out + x, params["ln1_g"][l], params["ln1_b"][l])
        h = jax.nn.gelu(x @ params["w1"][l] + params["b1"][l], approximate=True)
        h = h @ params["w2"][l] + params["b2"][l]
        x = ln(h + x, params["ln2_g"][l], params["ln2_b"][l])
    cls = x[:, 0, :]
    pooled = jnp.tanh(cls @ params["pool_w"] + params["pool_b"])
    score = pooled @ params["cls_w"] + params["cls_b"]
    return pooled, score


# ---------------- deterministic synthetic parameters (natural layout) ---------
def init_params(key):
    keys = iter(jax.random.split(key, 16))

    def w(shape, scale=0.02):
        return (scale * jax.random.normal(next(keys), shape)).astype(jnp.float32)

    L, H, F = N_LAYERS, HIDDEN, FFN
    return {
        "word_emb": w((VOCAB, H)),
        "pos_emb": w((MAX_POS, H)),
        "type_emb": w((TYPE_VOCAB, H)),
        "emb_ln_g": jnp.ones((H,), jnp.float32),
        "emb_ln_b": jnp.zeros((H,), jnp.float32),
        "wqkv": w((L, H, 3 * H)),                  # fused Q|K|V (split per head at pack time)
        "bqkv": jnp.zeros((L, 1, 3 * H), jnp.float32),
        "wo": w((L, H, H)),
        "bo": jnp.zeros((L, 1, H), jnp.float32),
        "ln1_g": jnp.ones((L, 1, H), jnp.float32),
        "ln1_b": jnp.zeros((L, 1, H), jnp.float32),
        "w1": w((L, H, F)),
        "b1": jnp.zeros((L, 1, F), jnp.float32),
        "w2": w((L, F, H)),
        "b2": jnp.zeros((L, 1, H), jnp.float32),
        "ln2_g": jnp.ones((L, 1, H), jnp.float32),
        "ln2_b": jnp.zeros((L, 1, H), jnp.float32),
        "pool_w": w((H, H)),
        "pool_b": jnp.zeros((H,), jnp.float32),
        "cls_w": w((H, N_CLASSES)),
        "cls_b": jnp.zeros((N_CLASSES,), jnp.float32),
    }


if __name__ == "__main__":
    key = jax.random.PRNGKey(0)
    k_ids, k_params = jax.random.split(key, 2)

    B, S = 2, 8
    input_ids = jax.random.randint(k_ids, (B, S), 0, VOCAB, dtype=jnp.int32)
    attention_mask = jnp.array([[1, 1, 1, 1, 1, 1, 1, 1],
                                [1, 1, 1, 1, 1, 1, 0, 0]], dtype=jnp.int32)
    token_type_ids = jnp.array([[0, 0, 0, 0, 1, 1, 1, 1],
                                [0, 0, 0, 1, 1, 1, 1, 1]], dtype=jnp.int32)

    raw_params = init_params(k_params)
    packed_params = pack_params(raw_params, B, S)   # one-time packing (not in hot path)

    pooled, score = jax.jit(bert_classify_forward)(
        packed_params, input_ids, attention_mask, token_type_ids)
    jax.block_until_ready((pooled, score))

    assert pooled.shape == (B, HIDDEN), pooled.shape
    assert score.shape == (B, N_CLASSES), score.shape
    assert bool(jnp.all(jnp.isfinite(pooled)))
    assert bool(jnp.all(jnp.isfinite(score)))

    # Cross-check the fused kernel against a pure-JAX reference.
    ref_pooled, ref_score = jax.jit(_reference_forward)(
        raw_params, input_ids, attention_mask, token_type_ids)
    assert bool(jnp.allclose(pooled, ref_pooled, atol=2e-2, rtol=2e-2)), (
        float(jnp.max(jnp.abs(pooled - ref_pooled))))
    assert bool(jnp.allclose(score, ref_score, atol=2e-2, rtol=2e-2)), (
        float(jnp.max(jnp.abs(score - ref_score))))

    print("KERNEL_OK")
</pallas_src>

<mosaic_0001>
module attributes {stable_mosaic.version = 11 : i64} {
  func.func @_bert_kernel(%arg0: memref<16x32xf32, #tpu.memory_space<vmem>>, %arg1: memref<16x16xf32, #tpu.memory_space<vmem>>, %arg2: memref<12x32x16xf32, #tpu.memory_space<vmem>>, %arg3: memref<4x16x32xf32, #tpu.memory_space<vmem>>, %arg4: memref<2x32x64xf32, #tpu.memory_space<vmem>>, %arg5: memref<2x64x32xf32, #tpu.memory_space<vmem>>, %arg6: memref<30x128xf32, #tpu.memory_space<vmem>>, %arg7: memref<160x128xf32, #tpu.memory_space<vmem>>, %arg8: memref<2x128xf32, #tpu.memory_space<vmem>>, %arg9: memref<2x128xf32, #tpu.memory_space<vmem>>, %arg10: memref<16x32xf32, #tpu.memory_space<vmem>>) attributes {dimension_semantics = [], scalar_prefetch = 0 : i64, scratch_operands = 1 : i64, tpu.core_type = #tpu.core_type<tc>} {
    %c0 = arith.constant 0 : index
    %c0_0 = arith.constant 0 : index
    %0 = vector.load %arg1[%c0, %c0_0] : memref<16x16xf32, #tpu.memory_space<vmem>>, vector<16x16xf32>
    %c0_1 = arith.constant 0 : index
    %c0_2 = arith.constant 0 : index
    %1 = vector.load %arg0[%c0_1, %c0_2] : memref<16x32xf32, #tpu.memory_space<vmem>>, vector<16x32xf32>
    %c0_3 = arith.constant 0 : index
    %c0_4 = arith.constant 0 : index
    %2 = vector.load %arg6[%c0_3, %c0_4] : memref<30x128xf32, #tpu.memory_space<vmem>>, vector<1x32xf32>
    %c1 = arith.constant 1 : index
    %c0_5 = arith.constant 0 : index
    %3 = vector.load %arg6[%c1, %c0_5] : memref<30x128xf32, #tpu.memory_space<vmem>>, vector<1x32xf32>
    %cst = arith.constant dense<0.000000e+00> : vector<16xf32>
    %4 = vector.multi_reduction <add>, %1, %cst [1] : vector<16x32xf32> to vector<16xf32>
    %5 = vector.shape_cast %4 : vector<16xf32> to vector<16x1xf32>
    %cst_6 = arith.constant 3.200000e+01 : f32
    %6 = vector.broadcast %cst_6 : f32 to vector<16x1xf32>
    %7 = arith.divf %5, %6 : vector<16x1xf32>
    %8 = vector.broadcast %7 : vector<16x1xf32> to vector<16x32xf32>
    %9 = arith.subf %1, %8 : vector<16x32xf32>
    %10 = arith.mulf %9, %9 : vector<16x32xf32>
    %cst_7 = arith.constant dense<0.000000e+00> : vector<16xf32>
    %11 = vector.multi_reduction <add>, %10, %cst_7 [1] : vector<16x32xf32> to vector<16xf32>
    %12 = vector.shape_cast %11 : vector<16xf32> to vector<16x1xf32>
    %cst_8 = arith.constant 3.200000e+01 : f32
    %13 = vector.broadcast %cst_8 : f32 to vector<16x1xf32>
    %14 = arith.divf %12, %13 : vector<16x1xf32>
    %15 = vector.broadcast %7 : vector<16x1xf32> to vector<16x32xf32>
    %16 = arith.subf %1, %15 : vector<16x32xf32>
    %cst_9 = arith.constant 9.99999996E-13 : f32
    %17 = vector.broadcast %cst_9 : f32 to vector<16x1xf32>
    %18 = arith.addf %14, %17 : vector<16x1xf32>
    %19 = math.rsqrt %18 : vector<16x1xf32>
    %20 = vector.broadcast %19 : vector<16x1xf32> to vector<16x32xf32>
    %21 = arith.mulf %16, %20 : vector<16x32xf32>
    %22 = vector.broadcast %2 : vector<1x32xf32> to vector<16x32xf32>
    %23 = arith.mulf %21, %22 : vector<16x32xf32>
    %24 = vector.broadcast %3 : vector<1x32xf32> to vector<16x32xf32>
    %25 = arith.addf %23, %24 : vector<16x32xf32>
    %c0_10 = arith.constant 0 : index
    %c0_11 = arith.constant 0 : index
    %c0_12 = arith.constant 0 : index
    %26 = vector.load %arg2[%c0_10, %c0_11, %c0_12] : memref<12x32x16xf32, #tpu.memory_space<vmem>>, vector<1x32x16xf32>
    %27 = vector.shape_cast %26 : vector<1x32x16xf32> to vector<32x16xf32>
    %c2 = arith.constant 2 : index
    %c0_13 = arith.constant 0 : index
    %c0_14 = arith.constant 0 : index
    %28 = vector.load %arg2[%c2, %c0_13, %c0_14] : memref<12x32x16xf32, #tpu.memory_space<vmem>>, vector<1x32x16xf32>
    %29 = vector.shape_cast %28 : vector<1x32x16xf32> to vector<32x16xf32>
    %c4 = arith.constant 4 : index
    %c0_15 = arith.constant 0 : index
    %c0_16 = arith.constant 0 : index
    %30 = vector.load %arg2[%c4, %c0_15, %c0_16] : memref<12x32x16xf32, #tpu.memory_space<vmem>>, vector<1x32x16xf32>
    %31 = vector.shape_cast %30 : vector<1x32x16xf32> to vector<32x16xf32>
    %cst_17 = arith.constant dense<0.000000e+00> : vector<16x16xf32>
    %32 = tpu.matmul %25, %27, %cst_17 {dimension_numbers = #tpu.dot_dimension_numbers<[1], [0], [0], [1], [0, 0, 1, 1], [], []>} : vector<16x32xf32>, vector<32x16xf32>, vector<16x16xf32> -> vector<16x16xf32>
    %c2_18 = arith.constant 2 : index
    %c0_19 = arith.constant 0 : index
    %33 = vector.load %arg6[%c2_18, %c0_19] : memref<30x128xf32, #tpu.memory_space<vmem>>, vector<1x16xf32>
    %34 = vector.broadcast %33 : vector<1x16xf32> to vector<16x16xf32>
    %35 = arith.addf %32, %34 : vector<16x16xf32>
    %cst_20 = arith.constant dense<0.000000e+00> : vector<16x16xf32>
    %36 = tpu.matmul %25, %29, %cst_20 {dimension_numbers = #tpu.dot_dimension_numbers<[1], [0], [0], [1], [0, 0, 1, 1], [], []>} : vector<16x32xf32>, vector<32x16xf32>, vector<16x16xf32> -> vector<16x16xf32>
    %c3 = arith.constant 3 : index
    %c0_21 = arith.constant 0 : index
    %37 = vector.load %arg6[%c3, %c0_21] : memref<30x128xf32, #tpu.memory_space<vmem>>, vector<1x16xf32>
    %38 = vector.broadcast %37 : vector<1x16xf32> to vector<16x16xf32>
    %39 = arith.addf %36, %38 : vector<16x16xf32>
    %cst_22 = arith.constant dense<0.000000e+00> : vector<16x16xf32>
    %40 = tpu.matmul %25, %31, %cst_22 {dimension_numbers = #tpu.dot_dimension_numbers<[1], [0], [0], [1], [0, 0, 1, 1], [], []>} : vector<16x32xf32>, vector<32x16xf32>, vector<16x16xf32> -> vector<16x16xf32>
    %c4_23 = arith.constant 4 : index
    %c0_24 = arith.constant 0 : index
    %41 = vector.load %arg6[%c4_23, %c0_24] : memref<30x128xf32, #tpu.memory_space<vmem>>, vector<1x16xf32>
    %42 = vector.broadcast %41 : vector<1x16xf32> to vector<16x16xf32>
    %43 = arith.addf %40, %42 : vector<16x16xf32>
    %cst_25 = arith.constant dense<0.000000e+00> : vector<16x16xf32>
    %44 = tpu.matmul %35, %39, %cst_25 {dimension_numbers = #tpu.dot_dimension_numbers<[1], [1], [0], [0], [0, 0, 1, 0], [], []>} : vector<16x16xf32>, vector<16x16xf32>, vector<16x16xf32> -> vector<16x16xf32>
    %cst_26 = arith.constant 2.500000e-01 : f32
    %45 = vector.broadcast %cst_26 : f32 to vector<16x16xf32>
    %46 = arith.mulf %44, %45 : vector<16x16xf32>
    %47 = arith.addf %46, %0 : vector<16x16xf32>
    %cst_27 = arith.constant dense<0xFF800000> : vector<16xf32>
    %48 = vector.multi_reduction <maximumf>, %47, %cst_27 [1] : vector<16x16xf32> to vector<16xf32>
    %49 = vector.shape_cast %48 : vector<16xf32> to vector<16x1xf32>
    %50 = vector.broadcast %49 : vector<16x1xf32> to vector<16x16xf32>
    %51 = arith.subf %47, %50 : vector<16x16xf32>
    %52 = math.exp %51 : vector<16x16xf32>
    %cst_28 = arith.constant dense<0.000000e+00> : vector<16xf32>
    %53 = vector.multi_reduction <add>, %52, %cst_28 [1] : vector<16x16xf32> to vector<16xf32>
    %54 = vector.shape_cast %53 : vector<16xf32> to vector<16x1xf32>
    %55 = tpu.reciprocal %54 {approx = true} : vector<16x1xf32> -> vector<16x1xf32>
    %56 = vector.broadcast %55 : vector<16x1xf32> to vector<16x16xf32>
    %57 = arith.mulf %52, %56 : vector<16x16xf32>
    %cst_29 = arith.constant dense<0.000000e+00> : vector<16x16xf32>
    %58 = tpu.matmul %57, %43, %cst_29 {dimension_numbers = #tpu.dot_dimension_numbers<[1], [0], [0], [1], [0, 0, 1, 1], [], []>} : vector<16x16xf32>, vector<16x16xf32>, vector<16x16xf32> -> vector<16x16xf32>
    %c0_30 = arith.constant 0 : index
    %c0_31 = arith.constant 0 : index
    %c0_32 = arith.constant 0 : index
    %59 = vector.load %arg3[%c0_30, %c0_31, %c0_32] : memref<4x16x32xf32, #tpu.memory_space<vmem>>, vector<1x16x32xf32>
    %60 = vector.shape_cast %59 : vector<1x16x32xf32> to vector<16x32xf32>
    %cst_33 = arith.constant dense<0.000000e+00> : vector<16x32xf32>
    %61 = tpu.matmul %58, %60, %cst_33 {dimension_numbers = #tpu.dot_dimension_numbers<[1], [0], [0], [1], [0, 0, 1, 1], [], []>} : vector<16x16xf32>, vector<16x32xf32>, vector<16x32xf32> -> vector<16x32xf32>
    %c1_34 = arith.constant 1 : index
    %c0_35 = arith.constant 0 : index
    %c0_36 = arith.constant 0 : index
    %62 = vector.load %arg2[%c1_34, %c0_35, %c0_36] : memref<12x32x16xf32, #tpu.memory_space<vmem>>, vector<1x32x16xf32>
    %63 = vector.shape_cast %62 : vector<1x32x16xf32> to vector<32x16xf32>
    %c3_37 = arith.constant 3 : index
    %c0_38 = arith.constant 0 : index
    %c0_39 = arith.constant 0 : index
    %64 = vector.load %arg2[%c3_37, %c0_38, %c0_39] : memref<12x32x16xf32, #tpu.memory_space<vmem>>, vector<1x32x16xf32>
    %65 = vector.shape_cast %64 : vector<1x32x16xf32> to vector<32x16xf32>
    %c5 = arith.constant 5 : index
    %c0_40 = arith.constant 0 : index
    %c0_41 = arith.constant 0 : index
    %66 = vector.load %arg2[%c5, %c0_40, %c0_41] : memref<12x32x16xf32, #tpu.memory_space<vmem>>, vector<1x32x16xf32>
    %67 = vector.shape_cast %66 : vector<1x32x16xf32> to vector<32x16xf32>
    %cst_42 = arith.constant dense<0.000000e+00> : vector<16x16xf32>
    %68 = tpu.matmul %25, %63, %cst_42 {dimension_numbers = #tpu.dot_dimension_numbers<[1], [0], [0], [1], [0, 0, 1, 1], [], []>} : vector<16x32xf32>, vector<32x16xf32>, vector<16x16xf32> -> vector<16x16xf32>
    %c5_43 = arith.constant 5 : index
    %c0_44 = arith.constant 0 : index
    %69 = vector.load %arg6[%c5_43, %c0_44] : memref<30x128xf32, #tpu.memory_space<vmem>>, vector<1x16xf32>
    %70 = vector.broadcast %69 : vector<1x16xf32> to vector<16x16xf32>
    %71 = arith.addf %68, %70 : vector<16x16xf32>
    %cst_45 = arith.constant dense<0.000000e+00> : vector<16x16xf32>
    %72 = tpu.matmul %25, %65, %cst_45 {dimension_numbers = #tpu.dot_dimension_numbers<[1], [0], [0], [1], [0, 0, 1, 1], [], []>} : vector<16x32xf32>, vector<32x16xf32>, vector<16x16xf32> -> vector<16x16xf32>
    %c6 = arith.constant 6 : index
    %c0_46 = arith.constant 0 : index
    %73 = vector.load %arg6[%c6, %c0_46] : memref<30x128xf32, #tpu.memory_space<vmem>>, vector<1x16xf32>
    %74 = vector.broadcast %73 : vector<1x16xf32> to vector<16x16xf32>
    %75 = arith.addf %72, %74 : vector<16x16xf32>
    %cst_47 = arith.constant dense<0.000000e+00> : vector<16x16xf32>
    %76 = tpu.matmul %25, %67, %cst_47 {dimension_numbers = #tpu.dot_dimension_numbers<[1], [0], [0], [1], [0, 0, 1, 1], [], []>} : vector<16x32xf32>, vector<32x16xf32>, vector<16x16xf32> -> vector<16x16xf32>
    %c7 = arith.constant 7 : index
    %c0_48 = arith.constant 0 : index
    %77 = vector.load %arg6[%c7, %c0_48] : memref<30x128xf32, #tpu.memory_space<vmem>>, vector<1x16xf32>
    %78 = vector.broadcast %77 : vector<1x16xf32> to vector<16x16xf32>
    %79 = arith.addf %76, %78 : vector<16x16xf32>
    %cst_49 = arith.constant dense<0.000000e+00> : vector<16x16xf32>
    %80 = tpu.matmul %71, %75, %cst_49 {dimension_numbers = #tpu.dot_dimension_numbers<[1], [1], [0], [0], [0, 0, 1, 0], [], []>} : vector<16x16xf32>, vector<16x16xf32>, vector<16x16xf32> -> vector<16x16xf32>
    %cst_50 = arith.constant 2.500000e-01 : f32
    %81 = vector.broadcast %cst_50 : f32 to vector<16x16xf32>
    %82 = arith.mulf %80, %81 : vector<16x16xf32>
    %83 = arith.addf %82, %0 : vector<16x16xf32>
    %cst_51 = arith.constant dense<0xFF800000> : vector<16xf32>
    %84 = vector.multi_reduction <maximumf>, %83, %cst_51 [1] : vector<16x16xf32> to vector<16xf32>
    %85 = vector.shape_cast %84 : vector<16xf32> to vector<16x1xf32>
    %86 = vector.broadcast %85 : vector<16x1xf32> to vector<16x16xf32>
    %87 = arith.subf %83, %86 : vector<16x16xf32>
    %88 = math.exp %87 : vector<16x16xf32>
    %cst_52 = arith.constant dense<0.000000e+00> : vector<16xf32>
    %89 = vector.multi_reduction <add>, %88, %cst_52 [1] : vector<16x16xf32> to vector<16xf32>
    %90 = vector.shape_cast %89 : vector<16xf32> to vector<16x1xf32>
    %91 = tpu.reciprocal %90 {approx = true} : vector<16x1xf32> -> vector<16x1xf32>
    %92 = vector.broadcast %91 : vector<16x1xf32> to vector<16x16xf32>
    %93 = arith.mulf %88, %92 : vector<16x16xf32>
    %cst_53 = arith.constant dense<0.000000e+00> : vector<16x16xf32>
    %94 = tpu.matmul %93, %79, %cst_53 {dimension_numbers = #tpu.dot_dimension_numbers<[1], [0], [0], [1], [0, 0, 1, 1], [], []>} : vector<16x16xf32>, vector<16x16xf32>, vector<16x16xf32> -> vector<16x16xf32>
    %c1_54 = arith.constant 1 : index
    %c0_55 = arith.constant 0 : index
    %c0_56 = arith.constant 0 : index
    %95 = vector.load %arg3[%c1_54, %c0_55, %c0_56] : memref<4x16x32xf32, #tpu.memory_space<vmem>>, vector<1x16x32xf32>
    %96 = vector.shape_cast %95 : vector<1x16x32xf32> to vector<16x32xf32>
    %cst_57 = arith.constant dense<0.000000e+00> : vector<16x32xf32>
    %97 = tpu.matmul %94, %96, %cst_57 {dimension_numbers = #tpu.dot_dimension_numbers<[1], [0], [0], [1], [0, 0, 1, 1], [], []>} : vector<16x16xf32>, vector<16x32xf32>, vector<16x32xf32> -> vector<16x32xf32>
    %98 = arith.addf %61, %97 : vector<16x32xf32>
    %c8 = arith.constant 8 : index
    %c0_58 = arith.constant 0 : index
    %99 = vector.load %arg6[%c8, %c0_58] : memref<30x128xf32, #tpu.memory_space<vmem>>, vector<1x32xf32>
    %100 = vector.broadcast %99 : vector<1x32xf32> to vector<16x32xf32>
    %101 = arith.addf %98, %100 : vector<16x32xf32>
    %102 = arith.addf %101, %25 : vector<16x32xf32>
    %c9 = arith.constant 9 : index
    %c0_59 = arith.constant 0 : index
    %103 = vector.load %arg6[%c9, %c0_59] : memref<30x128xf32, #tpu.memory_space<vmem>>, vector<1x32xf32>
    %c10 = arith.constant 10 : index
    %c0_60 = arith.constant 0 : index
    %104 = vector.load %arg6[%c10, %c0_60] : memref<30x128xf32, #tpu.memory_space<vmem>>, vector<1x32xf32>
    %cst_61 = arith.constant dense<0.000000e+00> : vector<16xf32>
    %105 = vector.multi_reduction <add>, %102, %cst_61 [1] : vector<16x32xf32> to vector<16xf32>
    %106 = vector.shape_cast %105 : vector<16xf32> to vector<16x1xf32>
    %cst_62 = arith.constant 3.200000e+01 : f32
    %107 = vector.broadcast %cst_62 : f32 to vector<16x1xf32>
    %108 = arith.divf %106, %107 : vector<16x1xf32>
    %109 = vector.broadcast %108 : vector<16x1xf32> to vector<16x32xf32>
    %110 = arith.subf %102, %109 : vector<16x32xf32>
    %111 = arith.mulf %110, %110 : vector<16x32xf32>
    %cst_63 = arith.constant dense<0.000000e+00> : vector<16xf32>
    %112 = vector.multi_reduction <add>, %111, %cst_63 [1] : vector<16x32xf32> to vector<16xf32>
    %113 = vector.shape_cast %112 : vector<16xf32> to vector<16x1xf32>
    %cst_64 = arith.constant 3.200000e+01 : f32
    %114 = vector.broadcast %cst_64 : f32 to vector<16x1xf32>
    %115 = arith.divf %113, %114 : vector<16x1xf32>
    %116 = vector.broadcast %108 : vector<16x1xf32> to vector<16x32xf32>
    %117 = arith.subf %102, %116 : vector<16x32xf32>
    %cst_65 = arith.constant 9.99999996E-13 : f32
    %118 = vector.broadcast %cst_65 : f32 to vector<16x1xf32>
    %119 = arith.addf %115, %118 : vector<16x1xf32>
    %120 = math.rsqrt %119 : vector<16x1xf32>
    %121 = vector.broadcast %120 : vector<16x1xf32> to vector<16x32xf32>
    %122 = arith.mulf %117, %121 : vector<16x32xf32>
    %123 = vector.broadcast %103 : vector<1x32xf32> to vector<16x32xf32>
    %124 = arith.mulf %122, %123 : vector<16x32xf32>
    %125 = vector.broadcast %104 : vector<1x32xf32> to vector<16x32xf32>
    %126 = arith.addf %124, %125 : vector<16x32xf32>
    %c0_66 = arith.constant 0 : index
    %c0_67 = arith.constant 0 : index
    %c0_68 = arith.constant 0 : index
    %127 = vector.load %arg4[%c0_66, %c0_67, %c0_68] : memref<2x32x64xf32, #tpu.memory_space<vmem>>, vector<1x32x64xf32>
    %128 = vector.shape_cast %127 : vector<1x32x64xf32> to vector<32x64xf32>
    %cst_69 = arith.constant dense<0.000000e+00> : vector<16x64xf32>
    %129 = tpu.matmul %126, %128, %cst_69 {dimension_numbers = #tpu.dot_dimension_numbers<[1], [0], [0], [1], [0, 0, 1, 1], [], []>} : vector<16x32xf32>, vector<32x64xf32>, vector<16x64xf32> -> vector<16x64xf32>
    %c11 = arith.constant 11 : index
    %c0_70 = arith.constant 0 : index
    %130 = vector.load %arg6[%c11, %c0_70] : memref<30x128xf32, #tpu.memory_space<vmem>>, vector<1x64xf32>
    %131 = vector.broadcast %130 : vector<1x64xf32> to vector<16x64xf32>
    %132 = arith.addf %129, %131 : vector<16x64xf32>
    %133 = arith.mulf %132, %132 : vector<16x64xf32>
    %134 = arith.mulf %132, %133 : vector<16x64xf32>
    %cst_71 = arith.constant 4.471500e-02 : f32
    %135 = vector.broadcast %cst_71 : f32 to vector<16x64xf32>
    %136 = arith.mulf %135, %134 : vector<16x64xf32>
    %137 = arith.addf %132, %136 : vector<16x64xf32>
    %cst_72 = arith.constant 0.797884583 : f32
    %138 = vector.broadcast %cst_72 : f32 to vector<16x64xf32>
    %139 = arith.mulf %138, %137 : vector<16x64xf32>
    %140 = math.tanh %139 : vector<16x64xf32>
    %cst_73 = arith.constant 1.000000e+00 : f32
    %141 = vector.broadcast %cst_73 : f32 to vector<16x64xf32>
    %142 = arith.addf %141, %140 : vector<16x64xf32>
    %cst_74 = arith.constant 5.000000e-01 : f32
    %143 = vector.broadcast %cst_74 : f32 to vector<16x64xf32>
    %144 = arith.mulf %143, %142 : vector<16x64xf32>
    %145 = arith.mulf %132, %144 : vector<16x64xf32>
    %c0_75 = arith.constant 0 : index
    %c0_76 = arith.constant 0 : index
    %c0_77 = arith.constant 0 : index
    %146 = vector.load %arg5[%c0_75, %c0_76, %c0_77] : memref<2x64x32xf32, #tpu.memory_space<vmem>>, vector<1x64x32xf32>
    %147 = vector.shape_cast %146 : vector<1x64x32xf32> to vector<64x32xf32>
    %cst_78 = arith.constant dense<0.000000e+00> : vector<16x32xf32>
    %148 = tpu.matmul %145, %147, %cst_78 {dimension_numbers = #tpu.dot_dimension_numbers<[1], [0], [0], [1], [0, 0, 1, 1], [], []>} : vector<16x64xf32>, vector<64x32xf32>, vector<16x32xf32> -> vector<16x32xf32>
    %c12 = arith.constant 12 : index
    %c0_79 = arith.constant 0 : index
    %149 = vector.load %arg6[%c12, %c0_79] : memref<30x128xf32, #tpu.memory_space<vmem>>, vector<1x32xf32>
    %150 = vector.broadcast %149 : vector<1x32xf32> to vector<16x32xf32>
    %151 = arith.addf %148, %150 : vector<16x32xf32>
    %152 = arith.addf %151, %126 : vector<16x32xf32>
    %c13 = arith.constant 13 : index
    %c0_80 = arith.constant 0 : index
    %153 = vector.load %arg6[%c13, %c0_80] : memref<30x128xf32, #tpu.memory_space<vmem>>, vector<1x32xf32>
    %c14 = arith.constant 14 : index
    %c0_81 = arith.constant 0 : index
    %154 = vector.load %arg6[%c14, %c0_81] : memref<30x128xf32, #tpu.memory_space<vmem>>, vector<1x32xf32>
    %cst_82 = arith.constant dense<0.000000e+00> : vector<16xf32>
    %155 = vector.multi_reduction <add>, %152, %cst_82 [1] : vector<16x32xf32> to vector<16xf32>
    %156 = vector.shape_cast %155 : vector<16xf32> to vector<16x1xf32>
    %cst_83 = arith.constant 3.200000e+01 : f32
    %157 = vector.broadcast %cst_83 : f32 to vector<16x1xf32>
    %158 = arith.divf %156, %157 : vector<16x1xf32>
    %159 = vector.broadcast %158 : vector<16x1xf32> to vector<16x32xf32>
    %160 = arith.subf %152, %159 : vector<16x32xf32>
    %161 = arith.mulf %160, %160 : vector<16x32xf32>
    %cst_84 = arith.constant dense<0.000000e+00> : vector<16xf32>
    %162 = vector.multi_reduction <add>, %161, %cst_84 [1] : vector<16x32xf32> to vector<16xf32>
    %163 = vector.shape_cast %162 : vector<16xf32> to vector<16x1xf32>
    %cst_85 = arith.constant 3.200000e+01 : f32
    %164 = vector.broadcast %cst_85 : f32 to vector<16x1xf32>
    %165 = arith.divf %163, %164 : vector<16x1xf32>
    %166 = vector.broadcast %158 : vector<16x1xf32> to vector<16x32xf32>
    %167 = arith.subf %152, %166 : vector<16x32xf32>
    %cst_86 = arith.constant 9.99999996E-13 : f32
    %168 = vector.broadcast %cst_86 : f32 to vector<16x1xf32>
    %169 = arith.addf %165, %168 : vector<16x1xf32>
    %170 = math.rsqrt %169 : vector<16x1xf32>
    %171 = vector.broadcast %170 : vector<16x1xf32> to vector<16x32xf32>
    %172 = arith.mulf %167, %171 : vector<16x32xf32>
    %173 = vector.broadcast %153 : vector<1x32xf32> to vector<16x32xf32>
    %174 = arith.mulf %172, %173 : vector<16x32xf32>
    %175 = vector.broadcast %154 : vector<1x32xf32> to vector<16x32xf32>
    %176 = arith.addf %174, %175 : vector<16x32xf32>
    %c6_87 = arith.constant 6 : index
    %c0_88 = arith.constant 0 : index
    %c0_89 = arith.constant 0 : index
    %177 = vector.load %arg2[%c6_87, %c0_88, %c0_89] : memref<12x32x16xf32, #tpu.memory_space<vmem>>, vector<1x32x16xf32>
    %178 = vector.shape_cast %177 : vector<1x32x16xf32> to vector<32x16xf32>
    %c8_90 = arith.constant 8 : index
    %c0_91 = arith.constant 0 : index
    %c0_92 = arith.constant 0 : index
    %179 = vector.load %arg2[%c8_90, %c0_91, %c0_92] : memref<12x32x16xf32, #tpu.memory_space<vmem>>, vector<1x32x16xf32>
    %180 = vector.shape_cast %179 : vector<1x32x16xf32> to vector<32x16xf32>
    %c10_93 = arith.constant 10 : index
    %c0_94 = arith.constant 0 : index
    %c0_95 = arith.constant 0 : index
    %181 = vector.load %arg2[%c10_93, %c0_94, %c0_95] : memref<12x32x16xf32, #tpu.memory_space<vmem>>, vector<1x32x16xf32>
    %182 = vector.shape_cast %181 : vector<1x32x16xf32> to vector<32x16xf32>
    %cst_96 = arith.constant dense<0.000000e+00> : vector<16x16xf32>
    %183 = tpu.matmul %176, %178, %cst_96 {dimension_numbers = #tpu.dot_dimension_numbers<[1], [0], [0], [1], [0, 0, 1, 1], [], []>} : vector<16x32xf32>, vector<32x16xf32>, vector<16x16xf32> -> vector<16x16xf32>
    %c15 = arith.constant 15 : index
    %c0_97 = arith.constant 0 : index
    %184 = vector.load %arg6[%c15, %c0_97] : memref<30x128xf32, #tpu.memory_space<vmem>>, vector<1x16xf32>
    %185 = vector.broadcast %184 : vector<1x16xf32> to vector<16x16xf32>
    %186 = arith.addf %183, %185 : vector<16x16xf32>
    %cst_98 = arith.constant dense<0.000000e+00> : vector<16x16xf32>
    %187 = tpu.matmul %176, %180, %cst_98 {dimension_numbers = #tpu.dot_dimension_numbers<[1], [0], [0], [1], [0, 0, 1, 1], [], []>} : vector<16x32xf32>, vector<32x16xf32>, vector<16x16xf32> -> vector<16x16xf32>
    %c16 = arith.constant 16 : index
    %c0_99 = arith.constant 0 : index
    %188 = vector.load %arg6[%c16, %c0_99] : memref<30x128xf32, #tpu.memory_space<vmem>>, vector<1x16xf32>
    %189 = vector.broadcast %188 : vector<1x16xf32> to vector<16x16xf32>
    %190 = arith.addf %187, %189 : vector<16x16xf32>
    %cst_100 = arith.constant dense<0.000000e+00> : vector<16x16xf32>
    %191 = tpu.matmul %176, %182, %cst_100 {dimension_numbers = #tpu.dot_dimension_numbers<[1], [0], [0], [1], [0, 0, 1, 1], [], []>} : vector<16x32xf32>, vector<32x16xf32>, vector<16x16xf32> -> vector<16x16xf32>
    %c17 = arith.constant 17 : index
    %c0_101 = arith.constant 0 : index
    %192 = vector.load %arg6[%c17, %c0_101] : memref<30x128xf32, #tpu.memory_space<vmem>>, vector<1x16xf32>
    %193 = vector.broadcast %192 : vector<1x16xf32> to vector<16x16xf32>
    %194 = arith.addf %191, %193 : vector<16x16xf32>
    %cst_102 = arith.constant dense<0.000000e+00> : vector<16x16xf32>
    %195 = tpu.matmul %186, %190, %cst_102 {dimension_numbers = #tpu.dot_dimension_numbers<[1], [1], [0], [0], [0, 0, 1, 0], [], []>} : vector<16x16xf32>, vector<16x16xf32>, vector<16x16xf32> -> vector<16x16xf32>
    %cst_103 = arith.constant 2.500000e-01 : f32
    %196 = vector.broadcast %cst_103 : f32 to vector<16x16xf32>
    %197 = arith.mulf %195, %196 : vector<16x16xf32>
    %198 = arith.addf %197, %0 : vector<16x16xf32>
    %cst_104 = arith.constant dense<0xFF800000> : vector<16xf32>
    %199 = vector.multi_reduction <maximumf>, %198, %cst_104 [1] : vector<16x16xf32> to vector<16xf32>
    %200 = vector.shape_cast %199 : vector<16xf32> to vector<16x1xf32>
    %201 = vector.broadcast %200 : vector<16x1xf32> to vector<16x16xf32>
    %202 = arith.subf %198, %201 : vector<16x16xf32>
    %203 = math.exp %202 : vector<16x16xf32>
    %cst_105 = arith.constant dense<0.000000e+00> : vector<16xf32>
    %204 = vector.multi_reduction <add>, %203, %cst_105 [1] : vector<16x16xf32> to vector<16xf32>
    %205 = vector.shape_cast %204 : vector<16xf32> to vector<16x1xf32>
    %206 = tpu.reciprocal %205 {approx = true} : vector<16x1xf32> -> vector<16x1xf32>
    %207 = vector.broadcast %206 : vector<16x1xf32> to vector<16x16xf32>
    %208 = arith.mulf %203, %207 : vector<16x16xf32>
    %cst_106 = arith.constant dense<0.000000e+00> : vector<16x16xf32>
    %209 = tpu.matmul %208, %194, %cst_106 {dimension_numbers = #tpu.dot_dimension_numbers<[1], [0], [0], [1], [0, 0, 1, 1], [], []>} : vector<16x16xf32>, vector<16x16xf32>, vector<16x16xf32> -> vector<16x16xf32>
    %c2_107 = arith.constant 2 : index
    %c0_108 = arith.constant 0 : index
    %c0_109 = arith.constant 0 : index
    %210 = vector.load %arg3[%c2_107, %c0_108, %c0_109] : memref<4x16x32xf32, #tpu.memory_space<vmem>>, vector<1x16x32xf32>
    %211 = vector.shape_cast %210 : vector<1x16x32xf32> to vector<16x32xf32>
    %cst_110 = arith.constant dense<0.000000e+00> : vector<16x32xf32>
    %212 = tpu.matmul %209, %211, %cst_110 {dimension_numbers = #tpu.dot_dimension_numbers<[1], [0], [0], [1], [0, 0, 1, 1], [], []>} : vector<16x16xf32>, vector<16x32xf32>, vector<16x32xf32> -> vector<16x32xf32>
    %c7_111 = arith.constant 7 : index
    %c0_112 = arith.constant 0 : index
    %c0_113 = arith.constant 0 : index
    %213 = vector.load %arg2[%c7_111, %c0_112, %c0_113] : memref<12x32x16xf32, #tpu.memory_space<vmem>>, vector<1x32x16xf32>
    %214 = vector.shape_cast %213 : vector<1x32x16xf32> to vector<32x16xf32>
    %c9_114 = arith.constant 9 : index
    %c0_115 = arith.constant 0 : index
    %c0_116 = arith.constant 0 : index
    %215 = vector.load %arg2[%c9_114, %c0_115, %c0_116] : memref<12x32x16xf32, #tpu.memory_space<vmem>>, vector<1x32x16xf32>
    %216 = vector.shape_cast %215 : vector<1x32x16xf32> to vector<32x16xf32>
    %c11_117 = arith.constant 11 : index
    %c0_118 = arith.constant 0 : index
    %c0_119 = arith.constant 0 : index
    %217 = vector.load %arg2[%c11_117, %c0_118, %c0_119] : memref<12x32x16xf32, #tpu.memory_space<vmem>>, vector<1x32x16xf32>
    %218 = vector.shape_cast %217 : vector<1x32x16xf32> to vector<32x16xf32>
    %cst_120 = arith.constant dense<0.000000e+00> : vector<16x16xf32>
    %219 = tpu.matmul %176, %214, %cst_120 {dimension_numbers = #tpu.dot_dimension_numbers<[1], [0], [0], [1], [0, 0, 1, 1], [], []>} : vector<16x32xf32>, vector<32x16xf32>, vector<16x16xf32> -> vector<16x16xf32>
    %c18 = arith.constant 18 : index
    %c0_121 = arith.constant 0 : index
    %220 = vector.load %arg6[%c18, %c0_121] : memref<30x128xf32, #tpu.memory_space<vmem>>, vector<1x16xf32>
    %221 = vector.broadcast %220 : vector<1x16xf32> to vector<16x16xf32>
    %222 = arith.addf %219, %221 : vector<16x16xf32>
    %cst_122 = arith.constant dense<0.000000e+00> : vector<16x16xf32>
    %223 = tpu.matmul %176, %216, %cst_122 {dimension_numbers = #tpu.dot_dimension_numbers<[1], [0], [0], [1], [0, 0, 1, 1], [], []>} : vector<16x32xf32>, vector<32x16xf32>, vector<16x16xf32> -> vector<16x16xf32>
    %c19 = arith.constant 19 : index
    %c0_123 = arith.constant 0 : index
    %224 = vector.load %arg6[%c19, %c0_123] : memref<30x128xf32, #tpu.memory_space<vmem>>, vector<1x16xf32>
    %225 = vector.broadcast %224 : vector<1x16xf32> to vector<16x16xf32>
    %226 = arith.addf %223, %225 : vector<16x16xf32>
    %cst_124 = arith.constant dense<0.000000e+00> : vector<16x16xf32>
    %227 = tpu.matmul %176, %218, %cst_124 {dimension_numbers = #tpu.dot_dimension_numbers<[1], [0], [0], [1], [0, 0, 1, 1], [], []>} : vector<16x32xf32>, vector<32x16xf32>, vector<16x16xf32> -> vector<16x16xf32>
    %c20 = arith.constant 20 : index
    %c0_125 = arith.constant 0 : index
    %228 = vector.load %arg6[%c20, %c0_125] : memref<30x128xf32, #tpu.memory_space<vmem>>, vector<1x16xf32>
    %229 = vector.broadcast %228 : vector<1x16xf32> to vector<16x16xf32>
    %230 = arith.addf %227, %229 : vector<16x16xf32>
    %cst_126 = arith.constant dense<0.000000e+00> : vector<16x16xf32>
    %231 = tpu.matmul %222, %226, %cst_126 {dimension_numbers = #tpu.dot_dimension_numbers<[1], [1], [0], [0], [0, 0, 1, 0], [], []>} : vector<16x16xf32>, vector<16x16xf32>, vector<16x16xf32> -> vector<16x16xf32>
    %cst_127 = arith.constant 2.500000e-01 : f32
    %232 = vector.broadcast %cst_127 : f32 to vector<16x16xf32>
    %233 = arith.mulf %231, %232 : vector<16x16xf32>
    %234 = arith.addf %233, %0 : vector<16x16xf32>
    %cst_128 = arith.constant dense<0xFF800000> : vector<16xf32>
    %235 = vector.multi_reduction <maximumf>, %234, %cst_128 [1] : vector<16x16xf32> to vector<16xf32>
    %236 = vector.shape_cast %235 : vector<16xf32> to vector<16x1xf32>
    %237 = vector.broadcast %236 : vector<16x1xf32> to vector<16x16xf32>
    %238 = arith.subf %234, %237 : vector<16x16xf32>
    %239 = math.exp %238 : vector<16x16xf32>
    %cst_129 = arith.constant dense<0.000000e+00> : vector<16xf32>
    %240 = vector.multi_reduction <add>, %239, %cst_129 [1] : vector<16x16xf32> to vector<16xf32>
    %241 = vector.shape_cast %240 : vector<16xf32> to vector<16x1xf32>
    %242 = tpu.reciprocal %241 {approx = true} : vector<16x1xf32> -> vector<16x1xf32>
    %243 = vector.broadcast %242 : vector<16x1xf32> to vector<16x16xf32>
    %244 = arith.mulf %239, %243 : vector<16x16xf32>
    %cst_130 = arith.constant dense<0.000000e+00> : vector<16x16xf32>
    %245 = tpu.matmul %244, %230, %cst_130 {dimension_numbers = #tpu.dot_dimension_numbers<[1], [0], [0], [1], [0, 0, 1, 1], [], []>} : vector<16x16xf32>, vector<16x16xf32>, vector<16x16xf32> -> vector<16x16xf32>
    %c3_131 = arith.constant 3 : index
    %c0_132 = arith.constant 0 : index
    %c0_133 = arith.constant 0 : index
    %246 = vector.load %arg3[%c3_131, %c0_132, %c0_133] : memref<4x16x32xf32, #tpu.memory_space<vmem>>, vector<1x16x32xf32>
    %247 = vector.shape_cast %246 : vector<1x16x32xf32> to vector<16x32xf32>
    %cst_134 = arith.constant dense<0.000000e+00> : vector<16x32xf32>
    %248 = tpu.matmul %245, %247, %cst_134 {dimension_numbers = #tpu.dot_dimension_numbers<[1], [0], [0], [1], [0, 0, 1, 1], [], []>} : vector<16x16xf32>, vector<16x32xf32>, vector<16x32xf32> -> vector<16x32xf32>
    %249 = arith.addf %212, %248 : vector<16x32xf32>
    %c21 = arith.constant 21 : index
    %c0_135 = arith.constant 0 : index
    %250 = vector.load %arg6[%c21, %c0_135] : memref<30x128xf32, #tpu.memory_space<vmem>>, vector<1x32xf32>
    %251 = vector.broadcast %250 : vector<1x32xf32> to vector<16x32xf32>
    %252 = arith.addf %249, %251 : vector<16x32xf32>
    %253 = arith.addf %252, %176 : vector<16x32xf32>
    %c22 = arith.constant 22 : index
    %c0_136 = arith.constant 0 : index
    %254 = vector.load %arg6[%c22, %c0_136] : memref<30x128xf32, #tpu.memory_space<vmem>>, vector<1x32xf32>
    %c23 = arith.constant 23 : index
    %c0_137 = arith.constant 0 : index
    %255 = vector.load %arg6[%c23, %c0_137] : memref<30x128xf32, #tpu.memory_space<vmem>>, vector<1x32xf32>
    %cst_138 = arith.constant dense<0.000000e+00> : vector<16xf32>
    %256 = vector.multi_reduction <add>, %253, %cst_138 [1] : vector<16x32xf32> to vector<16xf32>
    %257 = vector.shape_cast %256 : vector<16xf32> to vector<16x1xf32>
    %cst_139 = arith.constant 3.200000e+01 : f32
    %258 = vector.broadcast %cst_139 : f32 to vector<16x1xf32>
    %259 = arith.divf %257, %258 : vector<16x1xf32>
    %260 = vector.broadcast %259 : vector<16x1xf32> to vector<16x32xf32>
    %261 = arith.subf %253, %260 : vector<16x32xf32>
    %262 = arith.mulf %261, %261 : vector<16x32xf32>
    %cst_140 = arith.constant dense<0.000000e+00> : vector<16xf32>
    %263 = vector.multi_reduction <add>, %262, %cst_140 [1] : vector<16x32xf32> to vector<16xf32>
    %264 = vector.shape_cast %263 : vector<16xf32> to vector<16x1xf32>
    %cst_141 = arith.constant 3.200000e+01 : f32
    %265 = vector.broadcast %cst_141 : f32 to vector<16x1xf32>
    %266 = arith.divf %264, %265 : vector<16x1xf32>
    %267 = vector.broadcast %259 : vector<16x1xf32> to vector<16x32xf32>
    %268 = arith.subf %253, %267 : vector<16x32xf32>
    %cst_142 = arith.constant 9.99999996E-13 : f32
    %269 = vector.broadcast %cst_142 : f32 to vector<16x1xf32>
    %270 = arith.addf %266, %269 : vector<16x1xf32>
    %271 = math.rsqrt %270 : vector<16x1xf32>
    %272 = vector.broadcast %271 : vector<16x1xf32> to vector<16x32xf32>
    %273 = arith.mulf %268, %272 : vector<16x32xf32>
    %274 = vector.broadcast %254 : vector<1x32xf32> to vector<16x32xf32>
    %275 = arith.mulf %273, %274 : vector<16x32xf32>
    %276 = vector.broadcast %255 : vector<1x32xf32> to vector<16x32xf32>
    %277 = arith.addf %275, %276 : vector<16x32xf32>
    %c1_143 = arith.constant 1 : index
    %c0_144 = arith.constant 0 : index
    %c0_145 = arith.constant 0 : index
    %278 = vector.load %arg4[%c1_143, %c0_144, %c0_145] : memref<2x32x64xf32, #tpu.memory_space<vmem>>, vector<1x32x64xf32>
    %279 = vector.shape_cast %278 : vector<1x32x64xf32> to vector<32x64xf32>
    %cst_146 = arith.constant dense<0.000000e+00> : vector<16x64xf32>
    %280 = tpu.matmul %277, %279, %cst_146 {dimension_numbers = #tpu.dot_dimension_numbers<[1], [0], [0], [1], [0, 0, 1, 1], [], []>} : vector<16x32xf32>, vector<32x64xf32>, vector<16x64xf32> -> vector<16x64xf32>
    %c24 = arith.constant 24 : index
    %c0_147 = arith.constant 0 : index
    %281 = vector.load %arg6[%c24, %c0_147] : memref<30x128xf32, #tpu.memory_space<vmem>>, vector<1x64xf32>
    %282 = vector.broadcast %281 : vector<1x64xf32> to vector<16x64xf32>
    %283 = arith.addf %280, %282 : vector<16x64xf32>
    %284 = arith.mulf %283, %283 : vector<16x64xf32>
    %285 = arith.mulf %283, %284 : vector<16x64xf32>
    %cst_148 = arith.constant 4.471500e-02 : f32
    %286 = vector.broadcast %cst_148 : f32 to vector<16x64xf32>
    %287 = arith.mulf %286, %285 : vector<16x64xf32>
    %288 = arith.addf %283, %287 : vector<16x64xf32>
    %cst_149 = arith.constant 0.797884583 : f32
    %289 = vector.broadcast %cst_149 : f32 to vector<16x64xf32>
    %290 = arith.mulf %289, %288 : vector<16x64xf32>
    %291 = math.tanh %290 : vector<16x64xf32>
    %cst_150 = arith.constant 1.000000e+00 : f32
    %292 = vector.broadcast %cst_150 : f32 to vector<16x64xf32>
    %293 = arith.addf %292, %291 : vector<16x64xf32>
    %cst_151 = arith.constant 5.000000e-01 : f32
    %294 = vector.broadcast %cst_151 : f32 to vector<16x64xf32>
    %295 = arith.mulf %294, %293 : vector<16x64xf32>
    %296 = arith.mulf %283, %295 : vector<16x64xf32>
    %c1_152 = arith.constant 1 : index
    %c0_153 = arith.constant 0 : index
    %c0_154 = arith.constant 0 : index
    %297 = vector.load %arg5[%c1_152, %c0_153, %c0_154] : memref<2x64x32xf32, #tpu.memory_space<vmem>>, vector<1x64x32xf32>
    %298 = vector.shape_cast %297 : vector<1x64x32xf32> to vector<64x32xf32>
    %cst_155 = arith.constant dense<0.000000e+00> : vector<16x32xf32>
    %299 = tpu.matmul %296, %298, %cst_155 {dimension_numbers = #tpu.dot_dimension_numbers<[1], [0], [0], [1], [0, 0, 1, 1], [], []>} : vector<16x64xf32>, vector<64x32xf32>, vector<16x32xf32> -> vector<16x32xf32>
    %c25 = arith.constant 25 : index
    %c0_156 = arith.constant 0 : index
    %300 = vector.load %arg6[%c25, %c0_156] : memref<30x128xf32, #tpu.memory_space<vmem>>, vector<1x32xf32>
    %301 = vector.broadcast %300 : vector<1x32xf32> to vector<16x32xf32>
    %302 = arith.addf %299, %301 : vector<16x32xf32>
    %303 = arith.addf %302, %277 : vector<16x32xf32>
    %c26 = arith.constant 26 : index
    %c0_157 = arith.constant 0 : index
    %304 = vector.load %arg6[%c26, %c0_157] : memref<30x128xf32, #tpu.memory_space<vmem>>, vector<1x32xf32>
    %c27 = arith.constant 27 : index
    %c0_158 = arith.constant 0 : index
    %305 = vector.load %arg6[%c27, %c0_158] : memref<30x128xf32, #tpu.memory_space<vmem>>, vector<1x32xf32>
    %cst_159 = arith.constant dense<0.000000e+00> : vector<16xf32>
    %306 = vector.multi_reduction <add>, %303, %cst_159 [1] : vector<16x32xf32> to vector<16xf32>
    %307 = vector.shape_cast %306 : vector<16xf32> to vector<16x1xf32>
    %cst_160 = arith.constant 3.200000e+01 : f32
    %308 = vector.broadcast %cst_160 : f32 to vector<16x1xf32>
    %309 = arith.divf %307, %308 : vector<16x1xf32>
    %310 = vector.broadcast %309 : vector<16x1xf32> to vector<16x32xf32>
    %311 = arith.subf %303, %310 : vector<16x32xf32>
    %312 = arith.mulf %311, %311 : vector<16x32xf32>
    %cst_161 = arith.constant dense<0.000000e+00> : vector<16xf32>
    %313 = vector.multi_reduction <add>, %312, %cst_161 [1] : vector<16x32xf32> to vector<16xf32>
    %314 = vector.shape_cast %313 : vector<16xf32> to vector<16x1xf32>
    %cst_162 = arith.constant 3.200000e+01 : f32
    %315 = vector.broadcast %cst_162 : f32 to vector<16x1xf32>
    %316 = arith.divf %314, %315 : vector<16x1xf32>
    %317 = vector.broadcast %309 : vector<16x1xf32> to vector<16x32xf32>
    %318 = arith.subf %303, %317 : vector<16x32xf32>
    %cst_163 = arith.constant 9.99999996E-13 : f32
    %319 = vector.broadcast %cst_163 : f32 to vector<16x1xf32>
    %320 = arith.addf %316, %319 : vector<16x1xf32>
    %321 = math.rsqrt %320 : vector<16x1xf32>
    %322 = vector.broadcast %321 : vector<16x1xf32> to vector<16x32xf32>
    %323 = arith.mulf %318, %322 : vector<16x32xf32>
    %324 = vector.broadcast %304 : vector<1x32xf32> to vector<16x32xf32>
    %325 = arith.mulf %323, %324 : vector<16x32xf32>
    %326 = vector.broadcast %305 : vector<1x32xf32> to vector<16x32xf32>
    %327 = arith.addf %325, %326 : vector<16x32xf32>
    %c0_164 = arith.constant 0 : index
    %c0_165 = arith.constant 0 : index
    %328 = vector.load %arg10[%c0_164, %c0_165] : memref<16x32xf32, #tpu.memory_space<vmem>>, vector<16x32xf32>
    tpu.vector_store %arg10[%c0_164, %c0_165], %327 {strides = array<i32>} : memref<16x32xf32, #tpu.memory_space<vmem>>, vector<16x32xf32>,
    %c0_166 = arith.constant 0 : index
    %c0_167 = arith.constant 0 : index
    %329 = tpu.strided_load %arg10[%c0_166, %c0_167] {strides = array<i32: 8, 1>} : memref<16x32xf32, #tpu.memory_space<vmem>>, vector<2x32xf32>
    %c0_168 = arith.constant 0 : index
    %c0_169 = arith.constant 0 : index
    %330 = vector.load %arg7[%c0_168, %c0_169] : memref<160x128xf32, #tpu.memory_space<vmem>>, vector<32x128xf32>
    %c32 = arith.constant 32 : index
    %c0_170 = arith.constant 0 : index
    %331 = vector.load %arg7[%c32, %c0_170] : memref<160x128xf32, #tpu.memory_space<vmem>>, vector<128x128xf32>
    %cst_171 = arith.constant dense<0.000000e+00> : vector<2x128xf32>
    %332 = tpu.matmul %329, %330, %cst_171 {dimension_numbers = #tpu.dot_dimension_numbers<[1], [0], [0], [1], [0, 0, 1, 1], [], []>} : vector<2x32xf32>, vector<32x128xf32>, vector<2x128xf32> -> vector<2x128xf32>
    %c28 = arith.constant 28 : index
    %c0_172 = arith.constant 0 : index
    %333 = vector.load %arg6[%c28, %c0_172] : memref<30x128xf32, #tpu.memory_space<vmem>>, vector<1x128xf32>
    %334 = vector.broadcast %333 : vector<1x128xf32> to vector<2x128xf32>
    %335 = arith.addf %332, %334 : vector<2x128xf32>
    %336 = math.tanh %335 : vector<2x128xf32>
    %c0_173 = arith.constant 0 : index
    %c0_174 = arith.constant 0 : index
    %337 = vector.load %arg8[%c0_173, %c0_174] : memref<2x128xf32, #tpu.memory_space<vmem>>, vector<2x128xf32>
    tpu.vector_store %arg8[%c0_173, %c0_174], %336 {strides = array<i32>} : memref<2x128xf32, #tpu.memory_space<vmem>>, vector<2x128xf32>,
    %cst_175 = arith.constant dense<0.000000e+00> : vector<2x128xf32>
    %338 = tpu.matmul %336, %331, %cst_175 {dimension_numbers = #tpu.dot_dimension_numbers<[1], [0], [0], [1], [0, 0, 1, 1], [], []>} : vector<2x128xf32>, vector<128x128xf32>, vector<2x128xf32> -> vector<2x128xf32>
    %c29 = arith.constant 29 : index
    %c0_176 = arith.constant 0 : index
    %339 = vector.load %arg6[%c29, %c0_176] : memref<30x128xf32, #tpu.memory_space<vmem>>, vector<1x128xf32>
    %340 = vector.broadcast %339 : vector<1x128xf32> to vector<2x128xf32>
    %341 = arith.addf %338, %340 : vector<2x128xf32>
    %c0_177 = arith.constant 0 : index
    %c0_178 = arith.constant 0 : index
    %342 = vector.load %arg9[%c0_177, %c0_178] : memref<2x128xf32, #tpu.memory_space<vmem>>, vector<2x128xf32>
    tpu.vector_store %arg9[%c0_177, %c0_178], %341 {strides = array<i32>} : memref<2x128xf32, #tpu.memory_space<vmem>>, vector<2x128xf32>,
    return
  }
}

</mosaic_0001>

<llo_original>
// kernel: bert_classify_forward.1
$region0: #{bert_classify_forward.1}
  #allocation0 [shape = 'u32[]', space=smem, size = 0x4, offset = 0x4, fixed_abs, tag = 'smem constant byte address 0x4 - core index']
  #allocation1 [shape = 'u32[144,128]{1,0:T(1,128)}', space=vmem, size = 0x12000, scoped, tag = 'internal scratch']
  #allocation2 [shape = 'f32[16,32]{1,0:T(8,128)}', space=vmem, size = 0x2000, scoped, tag = 'scratch operand']
  %s0 = inlined_call_operand.vmem [shape: f32[16,32], index: 0, kind: input, shape index: {}]
  %s1 = inlined_call_operand.vmem [shape: f32[16,16], index: 1, kind: input, shape index: {}]
  %s2 = inlined_call_operand.vmem [shape: f32[12,32,16], index: 2, kind: input, shape index: {}]
  %s3 = inlined_call_operand.vmem [shape: f32[4,16,32], index: 3, kind: input, shape index: {}]
  %s4 = inlined_call_operand.vmem [shape: f32[2,32,64], index: 4, kind: input, shape index: {}]
  %s5 = inlined_call_operand.vmem [shape: f32[2,64,32], index: 5, kind: input, shape index: {}]
  %s6 = inlined_call_operand.vmem [shape: f32[30,128], index: 6, kind: input, shape index: {}]
  %s7 = inlined_call_operand.vmem [shape: f32[160,128], index: 7, kind: input, shape index: {}]
  %s8 = inlined_call_operand.hbm [shape: f32[2,128], index: 8, kind: output, shape index: {0}]
  %s9 = inlined_call_operand.hbm [shape: f32[2,128], index: 9, kind: output, shape index: {1}]
  %10 = xla_tuple %s8, %s9
  %s11 = sld [smem:[#allocation0]]
  $region50: #{bert_classify_forward.1} parent=0
    _
  %s13 = ssub.s32 1, %s11
  %s14 = scalar_select 0, %s13, %s11
  $region1: #{bert_classify_forward.1} parent=0
    #allocation3 [shape = 'u8[1024]{0}', space=vmem, size = 0x400, scoped, tag = 'output window, operand 0, single buffered']
    #allocation4 [shape = 's32[1]{0}', space=sflag, size = 0x4, scoped, tag = 'scoped memory for bert_classify_forward.1']
    #allocation5 [shape = 'u8[1024]{0}', space=vmem, size = 0x400, scoped, tag = 'output window, operand 1, single buffered']
    #allocation6 [shape = 's32[1]{0}', space=sflag, size = 0x4, scoped, tag = 'scoped memory for bert_classify_forward.1']
    %15 = vsyncpa [#allocation4], 0
    %16 = vsyncpa [#allocation6], 0
    // Predicated region
    $region2: #{bert_classify_forward.1} parent=1 // pred_check
      _
    $region3: #{bert_classify_forward.1} parent=1 // pred_check_branch
      %18 = sbr.rel (0) target = $region5
    $region4: #{bert_classify_forward.1} parent=1 // pred_region
      _
    $region5: #{bert_classify_forward.1} parent=1 // pred_fallthru
      _
    // Predicated region
    $region6: #{bert_classify_forward.1} parent=1 // pred_check
      _
    $region7: #{bert_classify_forward.1} parent=1 // pred_check_branch
      %20 = sbr.rel (0) target = $region9
    $region8: #{bert_classify_forward.1} parent=1 // pred_region
      _
    $region9: #{bert_classify_forward.1} parent=1 // pred_fallthru
      _
    // Predicated region
    $region10: #{bert_classify_forward.1} parent=1 // pred_check
      _
    $region11: #{bert_classify_forward.1} parent=1 // pred_check_branch
      %22 = sbr.rel (0) target = $region13
    $region12: #{bert_classify_forward.1} parent=1 // pred_region
      _
    $region13: #{bert_classify_forward.1} parent=1 // pred_fallthru
      _
    // Predicated region
    $region14: #{bert_classify_forward.1} parent=1 // pred_check
      _
    $region15: #{bert_classify_forward.1} parent=1 // pred_check_branch
      %24 = sbr.rel (0) target = $region17
    $region16: #{bert_classify_forward.1} parent=1 // pred_region
      _
    $region17: #{bert_classify_forward.1} parent=1 // pred_fallthru
      _
    // Predicated region
    $region18: #{bert_classify_forward.1} parent=1 // pred_check
      _
    $region19: #{bert_classify_forward.1} parent=1 // pred_check_branch
      %26 = sbr.rel (0) target = $region21
    $region20: #{bert_classify_forward.1} parent=1 // pred_region
      _
    $region21: #{bert_classify_forward.1} parent=1 // pred_fallthru
      _
    // Predicated region
    $region22: #{bert_classify_forward.1} parent=1 // pred_check
      _
    $region23: #{bert_classify_forward.1} parent=1 // pred_check_branch
      %28 = sbr.rel (0) target = $region25
    $region24: #{bert_classify_forward.1} parent=1 // pred_region
      _
    $region25: #{bert_classify_forward.1} parent=1 // pred_fallthru
      _
    // Predicated region
    $region26: #{bert_classify_forward.1} parent=1 // pred_check
      _
    $region27: #{bert_classify_forward.1} parent=1 // pred_check_branch
      %30 = sbr.rel (0) target = $region29
    $region28: #{bert_classify_forward.1} parent=1 // pred_region
      _
    $region29: #{bert_classify_forward.1} parent=1 // pred_fallthru
      _
    // Predicated region
    $region30: #{bert_classify_forward.1} parent=1 // pred_check
      _
    $region31: #{bert_classify_forward.1} parent=1 // pred_check_branch
      %32 = sbr.rel (0) target = $region33
    $region32: #{bert_classify_forward.1} parent=1 // pred_region
      _
    $region33: #{bert_classify_forward.1} parent=1 // pred_fallthru
      _
    %v33 = vld [vmem:[%s1] sm:$0xff]
    %v34 = vld [vmem:[%s1 + $0x8] sm:$0xff]
    %v35 = vld [vmem:[%s0] sm:$0xff]
    %v36 = vld [vmem:[%s0 + $0x8] sm:$0xff]
    %v37 = vld [vmem:[%s6] sm:$0x1]
    %v38 = vld [vmem:[%s6 + $0x1] sm:$0x1]
    %vm39 = vcmask 261120
    %v40 = vsel %vm39, %v35, 0.0
    %41 = vadd.xlane.f32.xlu0 %v40
    %v42 = vpop.xlane.xlu0 %41
    %v43 = vsel %vm39, %v36, 0.0
    %44 = vadd.xlane.f32.xlu0 %v43
    %v45 = vpop.xlane.xlu0 %44
    %v46 = vrcp.pop 32.0
    %v47 = vmul.f32 %v42, %v46
    %v48 = vmul.f32 %v45, %v46
    %v49 = vsub.f32 %v35, %v47
    %v50 = vsub.f32 %v36, %v48
    %v51 = vmul.f32 %v49, %v49
    %v52 = vmul.f32 %v50, %v50
    %v53 = vsel %vm39, %v51, 0.0
    %54 = vadd.xlane.f32.xlu0 %v53
    %v55 = vpop.xlane.xlu0 %54
    %v56 = vsel %vm39, %v52, 0.0
    %57 = vadd.xlane.f32.xlu0 %v56
    %v58 = vpop.xlane.xlu0 %57
    %v59 = vmul.f32 %v55, %v46
    %v60 = vmul.f32 %v58, %v46
    %v61 = vadd.f32 %v59, 1e-12
    %v62 = vadd.f32 %v60, 1e-12
    %v63 = vrsqrt.pop %v61
    %v64 = vrsqrt.pop %v62
    %v65 = vmul.f32 %v49, %v63
    %v66 = vmul.f32 %v50, %v64
    %v67 = vlaneseq
    %v68 = vshrl.u32 %v67, 7
    %v69 = vsub.s32 0, %v68
    %v70 = vrot.slane %v37, %v69
    %v71 = vmul.f32 %v65, %v70
    %v72 = vmul.f32 %v66, %v70
    %v73 = vlaneseq
    %v74 = vshrl.u32 %v73, 7
    %v75 = vsub.s32 0, %v74
    %v76 = vrot.slane %v38, %v75
    %v77 = vadd.f32 %v71, %v76
    %v78 = vadd.f32 %v72, %v76
    %v79 = vld [vmem:[%s2] sm:$0xff]
    %v80 = vld [vmem:[%s2 + $0x8] sm:$0xff]
    %v81 = vld [vmem:[%s2 + $0x10] sm:$0xff]
    %v82 = vld [vmem:[%s2 + $0x18] sm:$0xff]
    %s83 = scalar_lea.vmem %s2, 64
    %v84 = vld [vmem:[%s83] sm:$0xff]
    %v85 = vld [vmem:[%s83 + $0x8] sm:$0xff]
    %v86 = vld [vmem:[%s83 + $0x10] sm:$0xff]
    %v87 = vld [vmem:[%s83 + $0x18] sm:$0xff]
    %s88 = scalar_lea.vmem %s2, 128
    %v89 = vld [vmem:[%s88] sm:$0xff]
    %v90 = vld [vmem:[%s88 + $0x8] sm:$0xff]
    %v91 = vld [vmem:[%s88 + $0x10] sm:$0xff]
    %v92 = vld [vmem:[%s88 + $0x18] sm:$0xff]
    %v93 = vld [vmem:[%s6 + $0x2] sm:$0x1]
    %v94 = vlaneseq
    %v95 = vshrl.u32 %v94, 7
    %v96 = vsub.s32 0, %v95
    %v97 = vrot.slane %v93, %v96
    %v99 = vsel %vm39, %v77, 0
    %v102 = vsel %vm39, %v78, 0
    %104 = vmatprep.subr.mxu0 0.0
    %105 = vmatpush1.msra.mxu0 0.0
    %106 = vmatprep.subr.mxu0 0.0
    %107 = vmatpush1.msra.mxu0 0.0
    %108 = vmatprep.subr.mxu0 0.0
    %109 = vmatpush1.msra.mxu0 0.0
    %110 = vmatprep.subr.mxu0 0.0
    %111 = vmatpush1.msra.mxu0 0.0
    %112 = vmatprep.subr.mxu0 0.0
    %113 = vmatpush1.msra.mxu0 0.0
    %114 = vmatprep.subr.mxu0 0.0
    %115 = vmatpush1.msra.mxu0 0.0
    %116 = vmatprep.subr.mxu0 0.0
    %117 = vmatpush1.msra.mxu0 0.0
    %118 = vmatprep.subr.mxu0 0.0
    %119 = vmatpush1.msra.mxu0 0.0
    %120 = vmatprep.subr.mxu0 0.0
    %121 = vmatpush1.msra.mxu0 0.0
    %122 = vmatprep.subr.mxu0 0.0
    %123 = vmatpush1.msra.mxu0 0.0
    %124 = vmatprep.subr.mxu0 0.0
    %125 = vmatpush1.msra.mxu0 0.0
    %126 = vmatprep.subr.mxu0 0.0
    %127 = vmatpush1.msra.mxu0 0.0
    %128 = vmatprep.subr.mxu0 0.0
    %129 = vmatpush1.msra.mxu0 %v82
    %130 = vmatprep.subr.mxu0 0.0
    %131 = vmatpush1.msra.mxu0 %v81
    %132 = vmatprep.subr.mxu0 0.0
    %133 = vmatpush1.msra.mxu0 %v80
    %134 = vmatprep.subr.mxu0 0.0
    %135 = vmatpush1.msra.mxu0 %v79
    %136 = vmatprep.subr.mxu0 0.0
    %137 = vmatpush2.msra.mxu0 0.0
    %138 = vmatprep.subr.mxu0 0.0
    %139 = vmatpush2.msra.mxu0 0.0
    %140 = vmatprep.subr.mxu0 0.0
    %141 = vmatpush2.msra.mxu0 0.0
    %142 = vmatprep.subr.mxu0 0.0
    %143 = vmatpush2.msra.mxu0 0.0
    %144 = vmatprep.subr.mxu0 0.0
    %145 = vmatpush2.msra.mxu0 0.0
    %146 = vmatprep.subr.mxu0 0.0
    %147 = vmatpush2.msra.mxu0 0.0
    %148 = vmatprep.subr.mxu0 0.0
    %149 = vmatpush2.msra.mxu0 0.0
    %150 = vmatprep.subr.mxu0 0.0
    %151 = vmatpush2.msra.mxu0 0.0
    %152 = vmatprep.subr.mxu0 0.0
    %153 = vmatpush2.msra.mxu0 0.0
    %154 = vmatprep.subr.mxu0 0.0
    %155 = vmatpush2.msra.mxu0 0.0
    %156 = vmatprep.subr.mxu0 0.0
    %157 = vmatpush2.msra.mxu0 0.0
    %158 = vmatprep.subr.mxu0 0.0
    %159 = vmatpush2.msra.mxu0 0.0
    %160 = vmatprep.subr.mxu0 0.0
    %161 = vmatpush2.msra.mxu0 0.0
    %162 = vmatprep.subr.mxu0 0.0
    %163 = vmatpush2.msra.mxu0 0.0
    %164 = vmatprep.subr.mxu0 0.0
    %165 = vmatpush2.msra.mxu0 0.0
    %166 = vmatprep.subr.mxu0 0.0
    %167 = vmatpush2.msra.mxu0 0.0
    %168 = vmatprep.mubr.f32.mxu0 0.0
    %169 = vmatmul.mubr.f32.gmra.mxu0 %v99
    %v170 = vpop.f32.mrf.mxu0
    %v171 = vadd.f32 %v97, %v170
    %v172 = vpop.f32.mrf.mxu0
    %173 = vmatprep.mubr.f32.mxu0 0.0
    %174 = vmatmul.mubr.f32.gmra.mxu0 %v102
    %v175 = vpop.f32.mrf.mxu0
    %v176 = vadd.f32 %v97, %v175
    %v177 = vpop.f32.mrf.mxu0
    %178 = vdwg.mxu0
    %v179 = vld [vmem:[%s6 + $0x3] sm:$0x1]
    %v180 = vlaneseq
    %v181 = vshrl.u32 %v180, 7
    %v182 = vsub.s32 0, %v181
    %v183 = vrot.slane %v179, %v182
    %184 = vmatprep.subr.mxu0 0.0
    %185 = vmatpush1.msra.mxu0 0.0
    %186 = vmatprep.subr.mxu0 0.0
    %187 = vmatpush1.msra.mxu0 0.0
    %188 = vmatprep.subr.mxu0 0.0
    %189 = vmatpush1.msra.mxu0 0.0
    %190 = vmatprep.subr.mxu0 0.0
    %191 = vmatpush1.msra.mxu0 0.0
    %192 = vmatprep.subr.mxu0 0.0
    %193 = vmatpush1.msra.mxu0 0.0
    %194 = vmatprep.subr.mxu0 0.0
    %195 = vmatpush1.msra.mxu0 0.0
    %196 = vmatprep.subr.mxu0 0.0
    %197 = vmatpush1.msra.mxu0 0.0
    %198 = vmatprep.subr.mxu0 0.0
    %199 = vmatpush1.msra.mxu0 0.0
    %200 = vmatprep.subr.mxu0 0.0
    %201 = vmatpush1.msra.mxu0 0.0
    %202 = vmatprep.subr.mxu0 0.0
    %203 = vmatpush1.msra.mxu0 0.0
    %204 = vmatprep.subr.mxu0 0.0
    %205 = vmatpush1.msra.mxu0 0.0
    %206 = vmatprep.subr.mxu0 0.0
    %207 = vmatpush1.msra.mxu0 0.0
    %208 = vmatprep.subr.mxu0 0.0
    %209 = vmatpush1.msra.mxu0 %v87
    %210 = vmatprep.subr.mxu0 0.0
    %211 = vmatpush1.msra.mxu0 %v86
    %212 = vmatprep.subr.mxu0 0.0
    %213 = vmatpush1.msra.mxu0 %v85
    %214 = vmatprep.subr.mxu0 0.0
    %215 = vmatpush1.msra.mxu0 %v84
    %216 = vmatprep.subr.mxu0 0.0
    %217 = vmatpush2.msra.mxu0 0.0
    %218 = vmatprep.subr.mxu0 0.0
    %219 = vmatpush2.msra.mxu0 0.0
    %220 = vmatprep.subr.mxu0 0.0
    %221 = vmatpush2.msra.mxu0 0.0
    %222 = vmatprep.subr.mxu0 0.0
    %223 = vmatpush2.msra.mxu0 0.0
    %224 = vmatprep.subr.mxu0 0.0
    %225 = vmatpush2.msra.mxu0 0.0
    %226 = vmatprep.subr.mxu0 0.0
    %227 = vmatpush2.msra.mxu0 0.0
    %228 = vmatprep.subr.mxu0 0.0
    %229 = vmatpush2.msra.mxu0 0.0
    %230 = vmatprep.subr.mxu0 0.0
    %231 = vmatpush2.msra.mxu0 0.0
    %232 = vmatprep.subr.mxu0 0.0
    %233 = vmatpush2.msra.mxu0 0.0
    %234 = vmatprep.subr.mxu0 0.0
    %235 = vmatpush2.msra.mxu0 0.0
    %236 = vmatprep.subr.mxu0 0.0
    %237 = vmatpush2.msra.mxu0 0.0
    %238 = vmatprep.subr.mxu0 0.0
    %239 = vmatpush2.msra.mxu0 0.0
    %240 = vmatprep.subr.mxu0 0.0
    %241 = vmatpush2.msra.mxu0 0.0
    %242 = vmatprep.subr.mxu0 0.0
    %243 = vmatpush2.msra.mxu0 0.0
    %244 = vmatprep.subr.mxu0 0.0
    %245 = vmatpush2.msra.mxu0 0.0
    %246 = vmatprep.subr.mxu0 0.0
    %247 = vmatpush2.msra.mxu0 0.0
    %248 = vmatprep.mubr.f32.mxu0 0.0
    %249 = vmatmul.mubr.f32.gmra.mxu0 %v99
    %v250 = vpop.f32.mrf.mxu0
    %v251 = vadd.f32 %v183, %v250
    %v252 = vpop.f32.mrf.mxu0
    %253 = vmatprep.mubr.f32.mxu0 0.0
    %254 = vmatmul.mubr.f32.gmra.mxu0 %v102
    %v255 = vpop.f32.mrf.mxu0
    %v256 = vadd.f32 %v183, %v255
    %v257 = vpop.f32.mrf.mxu0
    %258 = vdwg.mxu0
    %v259 = vld [vmem:[%s6 + $0x4] sm:$0x1]
    %v260 = vlaneseq
    %v261 = vshrl.u32 %v260, 7
    %v262 = vsub.s32 0, %v261
    %v263 = vrot.slane %v259, %v262
    %264 = vmatprep.subr.mxu0 0.0
    %265 = vmatpush1.msra.mxu0 0.0
    %266 = vmatprep.subr.mxu0 0.0
    %267 = vmatpush1.msra.mxu0 0.0
    %268 = vmatprep.subr.mxu0 0.0
    %269 = vmatpush1.msra.mxu0 0.0
    %270 = vmatprep.subr.mxu0 0.0
    %271 = vmatpush1.msra.mxu0 0.0
    %272 = vmatprep.subr.mxu0 0.0
    %273 = vmatpush1.msra.mxu0 0.0
    %274 = vmatprep.subr.mxu0 0.0
    %275 = vmatpush1.msra.mxu0 0.0
    %276 = vmatprep.subr.mxu0 0.0
    %277 = vmatpush1.msra.mxu0 0.0
    %278 = vmatprep.subr.mxu0 0.0
    %279 = vmatpush1.msra.mxu0 0.0
    %280 = vmatprep.subr.mxu0 0.0
    %281 = vmatpush1.msra.mxu0 0.0
    %282 = vmatprep.subr.mxu0 0.0
    %283 = vmatpush1.msra.mxu0 0.0
    %284 = vmatprep.subr.mxu0 0.0
    %285 = vmatpush1.msra.mxu0 0.0
    %286 = vmatprep.subr.mxu0 0.0
    %287 = vmatpush1.msra.mxu0 0.0
    %288 = vmatprep.subr.mxu0 0.0
    %289 = vmatpush1.msra.mxu0 %v92
    %290 = vmatprep.subr.mxu0 0.0
    %291 = vmatpush1.msra.mxu0 %v91
    %292 = vmatprep.subr.mxu0 0.0
    %293 = vmatpush1.msra.mxu0 %v90
    %294 = vmatprep.subr.mxu0 0.0
    %295 = vmatpush1.msra.mxu0 %v89
    %296 = vmatprep.subr.mxu0 0.0
    %297 = vmatpush2.msra.mxu0 0.0
    %298 = vmatprep.subr.mxu0 0.0
    %299 = vmatpush2.msra.mxu0 0.0
    %300 = vmatprep.subr.mxu0 0.0
    %301 = vmatpush2.msra.mxu0 0.0
    %302 = vmatprep.subr.mxu0 0.0
    %303 = vmatpush2.msra.mxu0 0.0
    %304 = vmatprep.subr.mxu0 0.0
    %305 = vmatpush2.msra.mxu0 0.0
    %306 = vmatprep.subr.mxu0 0.0
    %307 = vmatpush2.msra.mxu0 0.0
    %308 = vmatprep.subr.mxu0 0.0
    %309 = vmatpush2.msra.mxu0 0.0
    %310 = vmatprep.subr.mxu0 0.0
    %311 = vmatpush2.msra.mxu0 0.0
    %312 = vmatprep.subr.mxu0 0.0
    %313 = vmatpush2.msra.mxu0 0.0
    %314 = vmatprep.subr.mxu0 0.0
    %315 = vmatpush2.msra.mxu0 0.0
    %316 = vmatprep.subr.mxu0 0.0
    %317 = vmatpush2.msra.mxu0 0.0
    %318 = vmatprep.subr.mxu0 0.0
    %319 = vmatpush2.msra.mxu0 0.0
    %320 = vmatprep.subr.mxu0 0.0
    %321 = vmatpush2.msra.mxu0 0.0
    %322 = vmatprep.subr.mxu0 0.0
    %323 = vmatpush2.msra.mxu0 0.0
    %324 = vmatprep.subr.mxu0 0.0
    %325 = vmatpush2.msra.mxu0 0.0
    %326 = vmatprep.subr.mxu0 0.0
    %327 = vmatpush2.msra.mxu0 0.0
    %328 = vmatprep.mubr.f32.mxu0 0.0
    %329 = vmatmul.mubr.f32.gmra.mxu0 %v99
    %v330 = vpop.f32.mrf.mxu0
    %v331 = vadd.f32 %v263, %v330
    %v332 = vpop.f32.mrf.mxu0
    %333 = vmatprep.mubr.f32.mxu0 0.0
    %334 = vmatmul.mubr.f32.gmra.mxu0 %v102
    %v335 = vpop.f32.mrf.mxu0
    %v336 = vadd.f32 %v263, %v335
    %v337 = vpop.f32.mrf.mxu0
    %338 = vdwg.mxu0
    %vm339 = vcmask 130048
    %v341 = vsel %vm339, %v171, 0
    %v344 = vsel %vm339, %v176, 0
    %v347 = vsel %vm339, %v251, 0
    %v350 = vsel %vm339, %v256, 0
    %352 = vmatprep.subr.mxu0 0.0
    %353 = vmatpush1.xpose.msra.mxu0 0.0
    %354 = vmatprep.subr.mxu0 0.0
    %355 = vmatpush1.xpose.msra.mxu0 0.0
    %356 = vmatprep.subr.mxu0 0.0
    %357 = vmatpush1.xpose.msra.mxu0 0.0
    %358 = vmatprep.subr.mxu0 0.0
    %359 = vmatpush1.xpose.msra.mxu0 0.0
    %360 = vmatprep.subr.mxu0 0.0
    %361 = vmatpush1.xpose.msra.mxu0 0.0
    %362 = vmatprep.subr.mxu0 0.0
    %363 = vmatpush1.xpose.msra.mxu0 0.0
    %364 = vmatprep.subr.mxu0 0.0
    %365 = vmatpush1.xpose.msra.mxu0 0.0
    %366 = vmatprep.subr.mxu0 0.0
    %367 = vmatpush1.xpose.msra.mxu0 0.0
    %368 = vmatprep.subr.mxu0 0.0
    %369 = vmatpush1.xpose.msra.mxu0 0.0
    %370 = vmatprep.subr.mxu0 0.0
    %371 = vmatpush1.xpose.msra.mxu0 0.0
    %372 = vmatprep.subr.mxu0 0.0
    %373 = vmatpush1.xpose.msra.mxu0 0.0
    %374 = vmatprep.subr.mxu0 0.0
    %375 = vmatpush1.xpose.msra.mxu0 0.0
    %376 = vmatprep.subr.mxu0 0.0
    %377 = vmatpush1.xpose.msra.mxu0 0.0
    %378 = vmatprep.subr.mxu0 0.0
    %379 = vmatpush1.xpose.msra.mxu0 0.0
    %380 = vmatprep.subr.mxu0 0.0
    %381 = vmatpush1.xpose.msra.mxu0 %v350
    %382 = vmatprep.subr.mxu0 0.0
    %383 = vmatpush1.xpose.msra.mxu0 %v347
    %384 = vmatprep.subr.mxu0 0.0
    %385 = vmatpush2.xpose.msra.mxu0 0.0
    %386 = vmatprep.subr.mxu0 0.0
    %387 = vmatpush2.xpose.msra.mxu0 0.0
    %388 = vmatprep.subr.mxu0 0.0
    %389 = vmatpush2.xpose.msra.mxu0 0.0
    %390 = vmatprep.subr.mxu0 0.0
    %391 = vmatpush2.xpose.msra.mxu0 0.0
    %392 = vmatprep.subr.mxu0 0.0
    %393 = vmatpush2.xpose.msra.mxu0 0.0
    %394 = vmatprep.subr.mxu0 0.0
    %395 = vmatpush2.xpose.msra.mxu0 0.0
    %396 = vmatprep.subr.mxu0 0.0
    %397 = vmatpush2.xpose.msra.mxu0 0.0
    %398 = vmatprep.subr.mxu0 0.0
    %399 = vmatpush2.xpose.msra.mxu0 0.0
    %400 = vmatprep.subr.mxu0 0.0
    %401 = vmatpush2.xpose.msra.mxu0 0.0
    %402 = vmatprep.subr.mxu0 0.0
    %403 = vmatpush2.xpose.msra.mxu0 0.0
    %404 = vmatprep.subr.mxu0 0.0
    %405 = vmatpush2.xpose.msra.mxu0 0.0
    %406 = vmatprep.subr.mxu0 0.0
    %407 = vmatpush2.xpose.msra.mxu0 0.0
    %408 = vmatprep.subr.mxu0 0.0
    %409 = vmatpush2.xpose.msra.mxu0 0.0
    %410 = vmatprep.subr.mxu0 0.0
    %411 = vmatpush2.xpose.msra.mxu0 0.0
    %412 = vmatprep.subr.mxu0 0.0
    %413 = vmatpush2.xpose.msra.mxu0 0.0
    %414 = vmatprep.subr.mxu0 0.0
    %415 = vmatpush2.xpose.msra.mxu0 0.0
    %416 = vmatprep.mubr.f32.mxu0 0.0
    %417 = vmatmul.mubr.f32.gmra.mxu0 %v341
    %v418 = vpop.f32.mrf.mxu0
    %v419 = vadd.f32 0.0, %v418
    %v420 = vpop.f32.mrf.mxu0
    %421 = vmatprep.mubr.f32.mxu0 0.0
    %422 = vmatmul.mubr.f32.gmra.mxu0 %v344
    %v423 = vpop.f32.mrf.mxu0
    %v424 = vadd.f32 0.0, %v423
    %v425 = vpop.f32.mrf.mxu0
    %426 = vdwg.mxu0
    %v427 = vmul.f32 %v419, 0.25
    %v428 = vmul.f32 %v424, 0.25
    %v429 = vadd.f32 %v427, %v33
    %v430 = vadd.f32 %v428, %v34
    %v431 = vsel %vm339, %v429, -inf
    %432 = vmax.xlane.f32.xlu0 %v431
    %v433 = vpop.xlane.xlu0 %432
    %v434 = vsel %vm339, %v430, -inf
    %435 = vmax.xlane.f32.xlu0 %v434
    %v436 = vpop.xlane.xlu0 %435
    %v437 = vsub.f32 %v429, %v433
    %v438 = vsub.f32 %v430, %v436
    %v439 = vmul.f32 %v437, 1.442695
    %v440 = vpow.pop %v439
    %v441 = vmul.f32 %v438, 1.442695
    %v442 = vpow.pop %v441
    %v443 = vsel %vm339, %v440, 0.0
    %444 = vadd.xlane.f32.xlu0 %v443
    %v445 = vpop.xlane.xlu0 %444
    %v446 = vsel %vm339, %v442, 0.0
    %447 = vadd.xlane.f32.xlu0 %v446
    %v448 = vpop.xlane.xlu0 %447
    %v449 = vrcp.pop %v445
    %v450 = vrcp.pop %v448
    %v451 = vmul.f32 %v440, %v449
    %v452 = vmul.f32 %v442, %v450
    %v454 = vsel %vm339, %v451, 0
    %v457 = vsel %vm339, %v452, 0
    %459 = vmatprep.subr.mxu0 0.0
    %460 = vmatpush1.msra.mxu0 0.0
    %461 = vmatprep.subr.mxu0 0.0
    %462 = vmatpush1.msra.mxu0 0.0
    %463 = vmatprep.subr.mxu0 0.0
    %464 = vmatpush1.msra.mxu0 0.0
    %465 = vmatprep.subr.mxu0 0.0
    %466 = vmatpush1.msra.mxu0 0.0
    %467 = vmatprep.subr.mxu0 0.0
    %468 = vmatpush1.msra.mxu0 0.0
    %469 = vmatprep.subr.mxu0 0.0
    %470 = vmatpush1.msra.mxu0 0.0
    %471 = vmatprep.subr.mxu0 0.0
    %472 = vmatpush1.msra.mxu0 0.0
    %473 = vmatprep.subr.mxu0 0.0
    %474 = vmatpush1.msra.mxu0 0.0
    %475 = vmatprep.subr.mxu0 0.0
    %476 = vmatpush1.msra.mxu0 0.0
    %477 = vmatprep.subr.mxu0 0.0
    %478 = vmatpush1.msra.mxu0 0.0
    %479 = vmatprep.subr.mxu0 0.0
    %480 = vmatpush1.msra.mxu0 0.0
    %481 = vmatprep.subr.mxu0 0.0
    %482 = vmatpush1.msra.mxu0 0.0
    %483 = vmatprep.subr.mxu0 0.0
    %484 = vmatpush1.msra.mxu0 0.0
    %485 = vmatprep.subr.mxu0 0.0
    %486 = vmatpush1.msra.mxu0 0.0
    %487 = vmatprep.subr.mxu0 0.0
    %488 = vmatpush1.msra.mxu0 %v336
    %489 = vmatprep.subr.mxu0 0.0
    %490 = vmatpush1.msra.mxu0 %v331
    %491 = vmatprep.subr.mxu0 0.0
    %492 = vmatpush2.msra.mxu0 0.0
    %493 = vmatprep.subr.mxu0 0.0
    %494 = vmatpush2.msra.mxu0 0.0
    %495 = vmatprep.subr.mxu0 0.0
    %496 = vmatpush2.msra.mxu0 0.0
    %497 = vmatprep.subr.mxu0 0.0
    %498 = vmatpush2.msra.mxu0 0.0
    %499 = vmatprep.subr.mxu0 0.0
    %500 = vmatpush2.msra.mxu0 0.0
    %501 = vmatprep.subr.mxu0 0.0
    %502 = vmatpush2.msra.mxu0 0.0
    %503 = vmatprep.subr.mxu0 0.0
    %504 = vmatpush2.msra.mxu0 0.0
    %505 = vmatprep.subr.mxu0 0.0
    %506 = vmatpush2.msra.mxu0 0.0
    %507 = vmatprep.subr.mxu0 0.0
    %508 = vmatpush2.msra.mxu0 0.0
    %509 = vmatprep.subr.mxu0 0.0
    %510 = vmatpush2.msra.mxu0 0.0
    %511 = vmatprep.subr.mxu0 0.0
    %512 = vmatpush2.msra.mxu0 0.0
    %513 = vmatprep.subr.mxu0 0.0
    %514 = vmatpush2.msra.mxu0 0.0
    %515 = vmatprep.subr.mxu0 0.0
    %516 = vmatpush2.msra.mxu0 0.0
    %517 = vmatprep.subr.mxu0 0.0
    %518 = vmatpush2.msra.mxu0 0.0
    %519 = vmatprep.subr.mxu0 0.0
    %520 = vmatpush2.msra.mxu0 0.0
    %521 = vmatprep.subr.mxu0 0.0
    %522 = vmatpush2.msra.mxu0 0.0
    %523 = vmatprep.mubr.f32.mxu0 0.0
    %524 = vmatmul.mubr.f32.gmra.mxu0 %v454
    %v525 = vpop.f32.mrf.mxu0
    %v526 = vadd.f32 0.0, %v525
    %v527 = vpop.f32.mrf.mxu0
    %528 = vmatprep.mubr.f32.mxu0 0.0
    %529 = vmatmul.mubr.f32.gmra.mxu0 %v457
    %v530 = vpop.f32.mrf.mxu0
    %v531 = vadd.f32 0.0, %v530
    %v532 = vpop.f32.mrf.mxu0
    %533 = vdwg.mxu0
    %v534 = vld [vmem:[%s3] sm:$0xff]
    %v535 = vld [vmem:[%s3 + $0x8] sm:$0xff]
    %s536 = scalar_lea.vmem %s2, 32
    %v537 = vld [vmem:[%s536] sm:$0xff]
    %v538 = vld [vmem:[%s536 + $0x8] sm:$0xff]
    %v539 = vld [vmem:[%s536 + $0x10] sm:$0xff]
    %v540 = vld [vmem:[%s536 + $0x18] sm:$0xff]
    %s541 = scalar_lea.vmem %s2, 96
    %v542 = vld [vmem:[%s541] sm:$0xff]
    %v543 = vld [vmem:[%s541 + $0x8] sm:$0xff]
    %v544 = vld [vmem:[%s541 + $0x10] sm:$0xff]
    %v545 = vld [vmem:[%s541 + $0x18] sm:$0xff]
    %s546 = scalar_lea.vmem %s2, 160
    %v547 = vld [vmem:[%s546] sm:$0xff]
    %v548 = vld [vmem:[%s546 + $0x8] sm:$0xff]
    %v549 = vld [vmem:[%s546 + $0x10] sm:$0xff]
    %v550 = vld [vmem:[%s546 + $0x18] sm:$0xff]
    %v551 = vld [vmem:[%s6 + $0x5] sm:$0x1]
    %v552 = vlaneseq
    %v553 = vshrl.u32 %v552, 7
    %v554 = vsub.s32 0, %v553
    %v555 = vrot.slane %v551, %v554
    %556 = vmatprep.subr.mxu0 0.0
    %557 = vmatpush1.msra.mxu0 0.0
    %558 = vmatprep.subr.mxu0 0.0
    %559 = vmatpush1.msra.mxu0 0.0
    %560 = vmatprep.subr.mxu0 0.0
    %561 = vmatpush1.msra.mxu0 0.0
    %562 = vmatprep.subr.mxu0 0.0
    %563 = vmatpush1.msra.mxu0 0.0
    %564 = vmatprep.subr.mxu0 0.0
    %565 = vmatpush1.msra.mxu0 0.0
    %566 = vmatprep.subr.mxu0 0.0
    %567 = vmatpush1.msra.mxu0 0.0
    %568 = vmatprep.subr.mxu0 0.0
    %569 = vmatpush1.msra.mxu0 0.0
    %570 = vmatprep.subr.mxu0 0.0
    %571 = vmatpush1.msra.mxu0 0.0
    %572 = vmatprep.subr.mxu0 0.0
    %573 = vmatpush1.msra.mxu0 0.0
    %574 = vmatprep.subr.mxu0 0.0
    %575 = vmatpush1.msra.mxu0 0.0
    %576 = vmatprep.subr.mxu0 0.0
    %577 = vmatpush1.msra.mxu0 0.0
    %578 = vmatprep.subr.mxu0 0.0
    %579 = vmatpush1.msra.mxu0 0.0
    %580 = vmatprep.subr.mxu0 0.0
    %581 = vmatpush1.msra.mxu0 %v540
    %582 = vmatprep.subr.mxu0 0.0
    %583 = vmatpush1.msra.mxu0 %v539
    %584 = vmatprep.subr.mxu0 0.0
    %585 = vmatpush1.msra.mxu0 %v538
    %586 = vmatprep.subr.mxu0 0.0
    %587 = vmatpush1.msra.mxu0 %v537
    %588 = vmatprep.subr.mxu0 0.0
    %589 = vmatpush2.msra.mxu0 0.0
    %590 = vmatprep.subr.mxu0 0.0
    %591 = vmatpush2.msra.mxu0 0.0
    %592 = vmatprep.subr.mxu0 0.0
    %593 = vmatpush2.msra.mxu0 0.0
    %594 = vmatprep.subr.mxu0 0.0
    %595 = vmatpush2.msra.mxu0 0.0
    %596 = vmatprep.subr.mxu0 0.0
    %597 = vmatpush2.msra.mxu0 0.0
    %598 = vmatprep.subr.mxu0 0.0
    %599 = vmatpush2.msra.mxu0 0.0
    %600 = vmatprep.subr.mxu0 0.0
    %601 = vmatpush2.msra.mxu0 0.0
    %602 = vmatprep.subr.mxu0 0.0
    %603 = vmatpush2.msra.mxu0 0.0
    %604 = vmatprep.subr.mxu0 0.0
    %605 = vmatpush2.msra.mxu0 0.0
    %606 = vmatprep.subr.mxu0 0.0
    %607 = vmatpush2.msra.mxu0 0.0
    %608 = vmatprep.subr.mxu0 0.0
    %609 = vmatpush2.msra.mxu0 0.0
    %610 = vmatprep.subr.mxu0 0.0
    %611 = vmatpush2.msra.mxu0 0.0
    %612 = vmatprep.subr.mxu0 0.0
    %613 = vmatpush2.msra.mxu0 0.0
    %614 = vmatprep.subr.mxu0 0.0
    %615 = vmatpush2.msra.mxu0 0.0
    %616 = vmatprep.subr.mxu0 0.0
    %617 = vmatpush2.msra.mxu0 0.0
    %618 = vmatprep.subr.mxu0 0.0
    %619 = vmatpush2.msra.mxu0 0.0
    %620 = vmatprep.mubr.f32.mxu0 0.0
    %621 = vmatmul.mubr.f32.gmra.mxu0 %v99
    %v622 = vpop.f32.mrf.mxu0
    %v623 = vadd.f32 %v555, %v622
    %v624 = vpop.f32.mrf.mxu0
    %625 = vmatprep.mubr.f32.mxu0 0.0
    %626 = vmatmul.mubr.f32.gmra.mxu0 %v102
    %v627 = vpop.f32.mrf.mxu0
    %v628 = vadd.f32 %v555, %v627
    %v629 = vpop.f32.mrf.mxu0
    %630 = vdwg.mxu0
    %v631 = vld [vmem:[%s6 + $0x6] sm:$0x1]
    %v632 = vlaneseq
    %v633 = vshrl.u32 %v632, 7
    %v634 = vsub.s32 0, %v633
    %v635 = vrot.slane %v631, %v634
    %636 = vmatprep.subr.mxu0 0.0
    %637 = vmatpush1.msra.mxu0 0.0
    %638 = vmatprep.subr.mxu0 0.0
    %639 = vmatpush1.msra.mxu0 0.0
    %640 = vmatprep.subr.mxu0 0.0
    %641 = vmatpush1.msra.mxu0 0.0
    %642 = vmatprep.subr.mxu0 0.0
    %643 = vmatpush1.msra.mxu0 0.0
    %644 = vmatprep.subr.mxu0 0.0
    %645 = vmatpush1.msra.mxu0 0.0
    %646 = vmatprep.subr.mxu0 0.0
    %647 = vmatpush1.msra.mxu0 0.0
    %648 = vmatprep.subr.mxu0 0.0
    %649 = vmatpush1.msra.mxu0 0.0
    %650 = vmatprep.subr.mxu0 0.0
    %651 = vmatpush1.msra.mxu0 0.0
    %652 = vmatprep.subr.mxu0 0.0
    %653 = vmatpush1.msra.mxu0 0.0
    %654 = vmatprep.subr.mxu0 0.0
    %655 = vmatpush1.msra.mxu0 0.0
    %656 = vmatprep.subr.mxu0 0.0
    %657 = vmatpush1.msra.mxu0 0.0
    %658 = vmatprep.subr.mxu0 0.0
    %659 = vmatpush1.msra.mxu0 0.0
    %660 = vmatprep.subr.mxu0 0.0
    %661 = vmatpush1.msra.mxu0 %v545
    %662 = vmatprep.subr.mxu0 0.0
    %663 = vmatpush1.msra.mxu0 %v544
    %664 = vmatprep.subr.mxu0 0.0
    %665 = vmatpush1.msra.mxu0 %v543
    %666 = vmatprep.subr.mxu0 0.0
    %667 = vmatpush1.msra.mxu0 %v542
    %668 = vmatprep.subr.mxu0 0.0
    %669 = vmatpush2.msra.mxu0 0.0
    %670 = vmatprep.subr.mxu0 0.0
    %671 = vmatpush2.msra.mxu0 0.0
    %672 = vmatprep.subr.mxu0 0.0
    %673 = vmatpush2.msra.mxu0 0.0
    %674 = vmatprep.subr.mxu0 0.0
    %675 = vmatpush2.msra.mxu0 0.0
    %676 = vmatprep.subr.mxu0 0.0
    %677 = vmatpush2.msra.mxu0 0.0
    %678 = vmatprep.subr.mxu0 0.0
    %679 = vmatpush2.msra.mxu0 0.0
    %680 = vmatprep.subr.mxu0 0.0
    %681 = vmatpush2.msra.mxu0 0.0
    %682 = vmatprep.subr.mxu0 0.0
    %683 = vmatpush2.msra.mxu0 0.0
    %684 = vmatprep.subr.mxu0 0.0
    %685 = vmatpush2.msra.mxu0 0.0
    %686 = vmatprep.subr.mxu0 0.0
    %687 = vmatpush2.msra.mxu0 0.0
    %688 = vmatprep.subr.mxu0 0.0
    %689 = vmatpush2.msra.mxu0 0.0
    %690 = vmatprep.subr.mxu0 0.0
    %691 = vmatpush2.msra.mxu0 0.0
    %692 = vmatprep.subr.mxu0 0.0
    %693 = vmatpush2.msra.mxu0 0.0
    %694 = vmatprep.subr.mxu0 0.0
    %695 = vmatpush2.msra.mxu0 0.0
    %696 = vmatprep.subr.mxu0 0.0
    %697 = vmatpush2.msra.mxu0 0.0
    %698 = vmatprep.subr.mxu0 0.0
    %699 = vmatpush2.msra.mxu0 0.0
    %700 = vmatprep.mubr.f32.mxu0 0.0
    %701 = vmatmul.mubr.f32.gmra.mxu0 %v99
    %v702 = vpop.f32.mrf.mxu0
    %v703 = vadd.f32 %v635, %v702
    %v704 = vpop.f32.mrf.mxu0
    %705 = vmatprep.mubr.f32.mxu0 0.0
    %706 = vmatmul.mubr.f32.gmra.mxu0 %v102
    %v707 = vpop.f32.mrf.mxu0
    %v708 = vadd.f32 %v635, %v707
    %v709 = vpop.f32.mrf.mxu0
    %710 = vdwg.mxu0
    %v711 = vld [vmem:[%s6 + $0x7] sm:$0x1]
    %v712 = vlaneseq
    %v713 = vshrl.u32 %v712, 7
    %v714 = vsub.s32 0, %v713
    %v715 = vrot.slane %v711, %v714
    %716 = vmatprep.subr.mxu0 0.0
    %717 = vmatpush1.msra.mxu0 0.0
    %718 = vmatprep.subr.mxu0 0.0
    %719 = vmatpush1.msra.mxu0 0.0
    %720 = vmatprep.subr.mxu0 0.0
    %721 = vmatpush1.msra.mxu0 0.0
    %722 = vmatprep.subr.mxu0 0.0
    %723 = vmatpush1.msra.mxu0 0.0
    %724 = vmatprep.subr.mxu0 0.0
    %725 = vmatpush1.msra.mxu0 0.0
    %726 = vmatprep.subr.mxu0 0.0
    %727 = vmatpush1.msra.mxu0 0.0
    %728 = vmatprep.subr.mxu0 0.0
    %729 = vmatpush1.msra.mxu0 0.0
    %730 = vmatprep.subr.mxu0 0.0
    %731 = vmatpush1.msra.mxu0 0.0
    %732 = vmatprep.subr.mxu0 0.0
    %733 = vmatpush1.msra.mxu0 0.0
    %734 = vmatprep.subr.mxu0 0.0
    %735 = vmatpush1.msra.mxu0 0.0
    %736 = vmatprep.subr.mxu0 0.0
    %737 = vmatpush1.msra.mxu0 0.0
    %738 = vmatprep.subr.mxu0 0.0
    %739 = vmatpush1.msra.mxu0 0.0
    %740 = vmatprep.subr.mxu0 0.0
    %741 = vmatpush1.msra.mxu0 %v550
    %742 = vmatprep.subr.mxu0 0.0
    %743 = vmatpush1.msra.mxu0 %v549
    %744 = vmatprep.subr.mxu0 0.0
    %745 = vmatpush1.msra.mxu0 %v548
    %746 = vmatprep.subr.mxu0 0.0
    %747 = vmatpush1.msra.mxu0 %v547
    %748 = vmatprep.subr.mxu0 0.0
    %749 = vmatpush2.msra.mxu0 0.0
    %750 = vmatprep.subr.mxu0 0.0
    %751 = vmatpush2.msra.mxu0 0.0
    %752 = vmatprep.subr.mxu0 0.0
    %753 = vmatpush2.msra.mxu0 0.0
    %754 = vmatprep.subr.mxu0 0.0
    %755 = vmatpush2.msra.mxu0 0.0
    %756 = vmatprep.subr.mxu0 0.0
    %757 = vmatpush2.msra.mxu0 0.0
    %758 = vmatprep.subr.mxu0 0.0
    %759 = vmatpush2.msra.mxu0 0.0
    %760 = vmatprep.subr.mxu0 0.0
    %761 = vmatpush2.msra.mxu0 0.0
    %762 = vmatprep.subr.mxu0 0.0
    %763 = vmatpush2.msra.mxu0 0.0
    %764 = vmatprep.subr.mxu0 0.0
    %765 = vmatpush2.msra.mxu0 0.0
    %766 = vmatprep.subr.mxu0 0.0
    %767 = vmatpush2.msra.mxu0 0.0
    %768 = vmatprep.subr.mxu0 0.0
    %769 = vmatpush2.msra.mxu0 0.0
    %770 = vmatprep.subr.mxu0 0.0
    %771 = vmatpush2.msra.mxu0 0.0
    %772 = vmatprep.subr.mxu0 0.0
    %773 = vmatpush2.msra.mxu0 0.0
    %774 = vmatprep.subr.mxu0 0.0
    %775 = vmatpush2.msra.mxu0 0.0
    %776 = vmatprep.subr.mxu0 0.0
    %777 = vmatpush2.msra.mxu0 0.0
    %778 = vmatprep.subr.mxu0 0.0
    %779 = vmatpush2.msra.mxu0 0.0
    %780 = vmatprep.mubr.f32.mxu0 0.0
    %781 = vmatmul.mubr.f32.gmra.mxu0 %v99
    %v782 = vpop.f32.mrf.mxu0
    %v783 = vadd.f32 %v715, %v782
    %v784 = vpop.f32.mrf.mxu0
    %785 = vmatprep.mubr.f32.mxu0 0.0
    %786 = vmatmul.mubr.f32.gmra.mxu0 %v102
    %v787 = vpop.f32.mrf.mxu0
    %v788 = vadd.f32 %v715, %v787
    %v789 = vpop.f32.mrf.mxu0
    %790 = vdwg.mxu0
    %v792 = vsel %vm339, %v623, 0
    %v795 = vsel %vm339, %v628, 0
    %v798 = vsel %vm339, %v703, 0
    %v801 = vsel %vm339, %v708, 0
    %803 = vmatprep.subr.mxu0 0.0
    %804 = vmatpush1.xpose.msra.mxu0 0.0
    %805 = vmatprep.subr.mxu0 0.0
    %806 = vmatpush1.xpose.msra.mxu0 0.0
    %807 = vmatprep.subr.mxu0 0.0
    %808 = vmatpush1.xpose.msra.mxu0 0.0
    %809 = vmatprep.subr.mxu0 0.0
    %810 = vmatpush1.xpose.msra.mxu0 0.0
    %811 = vmatprep.subr.mxu0 0.0
    %812 = vmatpush1.xpose.msra.mxu0 0.0
    %813 = vmatprep.subr.mxu0 0.0
    %814 = vmatpush1.xpose.msra.mxu0 0.0
    %815 = vmatprep.subr.mxu0 0.0
    %816 = vmatpush1.xpose.msra.mxu0 0.0
    %817 = vmatprep.subr.mxu0 0.0
    %818 = vmatpush1.xpose.msra.mxu0 0.0
    %819 = vmatprep.subr.mxu0 0.0
    %820 = vmatpush1.xpose.msra.mxu0 0.0
    %821 = vmatprep.subr.mxu0 0.0
    %822 = vmatpush1.xpose.msra.mxu0 0.0
    %823 = vmatprep.subr.mxu0 0.0
    %824 = vmatpush1.xpose.msra.mxu0 0.0
    %825 = vmatprep.subr.mxu0 0.0
    %826 = vmatpush1.xpose.msra.mxu0 0.0
    %827 = vmatprep.subr.mxu0 0.0
    %828 = vmatpush1.xpose.msra.mxu0 0.0
    %829 = vmatprep.subr.mxu0 0.0
    %830 = vmatpush1.xpose.msra.mxu0 0.0
    %831 = vmatprep.subr.mxu0 0.0
    %832 = vmatpush1.xpose.msra.mxu0 %v801
    %833 = vmatprep.subr.mxu0 0.0
    %834 = vmatpush1.xpose.msra.mxu0 %v798
    %835 = vmatprep.subr.mxu0 0.0
    %836 = vmatpush2.xpose.msra.mxu0 0.0
    %837 = vmatprep.subr.mxu0 0.0
    %838 = vmatpush2.xpose.msra.mxu0 0.0
    %839 = vmatprep.subr.mxu0 0.0
    %840 = vmatpush2.xpose.msra.mxu0 0.0
    %841 = vmatprep.subr.mxu0 0.0
    %842 = vmatpush2.xpose.msra.mxu0 0.0
    %843 = vmatprep.subr.mxu0 0.0
    %844 = vmatpush2.xpose.msra.mxu0 0.0
    %845 = vmatprep.subr.mxu0 0.0
    %846 = vmatpush2.xpose.msra.mxu0 0.0
    %847 = vmatprep.subr.mxu0 0.0
    %848 = vmatpush2.xpose.msra.mxu0 0.0
    %849 = vmatprep.subr.mxu0 0.0
    %850 = vmatpush2.xpose.msra.mxu0 0.0
    %851 = vmatprep.subr.mxu0 0.0
    %852 = vmatpush2.xpose.msra.mxu0 0.0
    %853 = vmatprep.subr.mxu0 0.0
    %854 = vmatpush2.xpose.msra.mxu0 0.0
    %855 = vmatprep.subr.mxu0 0.0
    %856 = vmatpush2.xpose.msra.mxu0 0.0
    %857 = vmatprep.subr.mxu0 0.0
    %858 = vmatpush2.xpose.msra.mxu0 0.0
    %859 = vmatprep.subr.mxu0 0.0
    %860 = vmatpush2.xpose.msra.mxu0 0.0
    %861 = vmatprep.subr.mxu0 0.0
    %862 = vmatpush2.xpose.msra.mxu0 0.0
    %863 = vmatprep.subr.mxu0 0.0
    %864 = vmatpush2.xpose.msra.mxu0 0.0
    %865 = vmatprep.subr.mxu0 0.0
    %866 = vmatpush2.xpose.msra.mxu0 0.0
    %867 = vmatprep.mubr.f32.mxu0 0.0
    %868 = vmatmul.mubr.f32.gmra.mxu0 %v792
    %v869 = vpop.f32.mrf.mxu0
    %v870 = vadd.f32 0.0, %v869
    %v871 = vpop.f32.mrf.mxu0
    %872 = vmatprep.mubr.f32.mxu0 0.0
    %873 = vmatmul.mubr.f32.gmra.mxu0 %v795
    %v874 = vpop.f32.mrf.mxu0
    %v875 = vadd.f32 0.0, %v874
    %v876 = vpop.f32.mrf.mxu0
    %877 = vdwg.mxu0
    %v878 = vmul.f32 %v870, 0.25
    %v879 = vmul.f32 %v875, 0.25
    %v880 = vadd.f32 %v878, %v33
    %v881 = vadd.f32 %v879, %v34
    %v882 = vsel %vm339, %v880, -inf
    %883 = vmax.xlane.f32.xlu0 %v882
    %v884 = vpop.xlane.xlu0 %883
    %v885 = vsel %vm339, %v881, -inf
    %886 = vmax.xlane.f32.xlu0 %v885
    %v887 = vpop.xlane.xlu0 %886
    %v888 = vsub.f32 %v880, %v884
    %v889 = vsub.f32 %v881, %v887
    %v890 = vmul.f32 %v888, 1.442695
    %v891 = vpow.pop %v890
    %v892 = vmul.f32 %v889, 1.442695
    %v893 = vpow.pop %v892
    %v894 = vsel %vm339, %v891, 0.0
    %895 = vadd.xlane.f32.xlu0 %v894
    %v896 = vpop.xlane.xlu0 %895
    %v897 = vsel %vm339, %v893, 0.0
    %898 = vadd.xlane.f32.xlu0 %v897
    %v899 = vpop.xlane.xlu0 %898
    %v900 = vrcp.pop %v896
    %v901 = vrcp.pop %v899
    %v902 = vmul.f32 %v891, %v900
    %v903 = vmul.f32 %v893, %v901
    %v905 = vsel %vm339, %v902, 0
    %v908 = vsel %vm339, %v903, 0
    %910 = vmatprep.subr.mxu0 0.0
    %911 = vmatpush1.msra.mxu0 0.0
    %912 = vmatprep.subr.mxu0 0.0
    %913 = vmatpush1.msra.mxu0 0.0
    %914 = vmatprep.subr.mxu0 0.0
    %915 = vmatpush1.msra.mxu0 0.0
    %916 = vmatprep.subr.mxu0 0.0
    %917 = vmatpush1.msra.mxu0 0.0
    %918 = vmatprep.subr.mxu0 0.0
    %919 = vmatpush1.msra.mxu0 0.0
    %920 = vmatprep.subr.mxu0 0.0
    %921 = vmatpush1.msra.mxu0 0.0
    %922 = vmatprep.subr.mxu0 0.0
    %923 = vmatpush1.msra.mxu0 0.0
    %924 = vmatprep.subr.mxu0 0.0
    %925 = vmatpush1.msra.mxu0 0.0
    %926 = vmatprep.subr.mxu0 0.0
    %927 = vmatpush1.msra.mxu0 0.0
    %928 = vmatprep.subr.mxu0 0.0
    %929 = vmatpush1.msra.mxu0 0.0
    %930 = vmatprep.subr.mxu0 0.0
    %931 = vmatpush1.msra.mxu0 0.0
    %932 = vmatprep.subr.mxu0 0.0
    %933 = vmatpush1.msra.mxu0 0.0
    %934 = vmatprep.subr.mxu0 0.0
    %935 = vmatpush1.msra.mxu0 0.0
    %936 = vmatprep.subr.mxu0 0.0
    %937 = vmatpush1.msra.mxu0 0.0
    %938 = vmatprep.subr.mxu0 0.0
    %939 = vmatpush1.msra.mxu0 %v788
    %940 = vmatprep.subr.mxu0 0.0
    %941 = vmatpush1.msra.mxu0 %v783
    %942 = vmatprep.subr.mxu0 0.0
    %943 = vmatpush2.msra.mxu0 0.0
    %944 = vmatprep.subr.mxu0 0.0
    %945 = vmatpush2.msra.mxu0 0.0
    %946 = vmatprep.subr.mxu0 0.0
    %947 = vmatpush2.msra.mxu0 0.0
    %948 = vmatprep.subr.mxu0 0.0
    %949 = vmatpush2.msra.mxu0 0.0
    %950 = vmatprep.subr.mxu0 0.0
    %951 = vmatpush2.msra.mxu0 0.0
    %952 = vmatprep.subr.mxu0 0.0
    %953 = vmatpush2.msra.mxu0 0.0
    %954 = vmatprep.subr.mxu0 0.0
    %955 = vmatpush2.msra.mxu0 0.0
    %956 = vmatprep.subr.mxu0 0.0
    %957 = vmatpush2.msra.mxu0 0.0
    %958 = vmatprep.subr.mxu0 0.0
    %959 = vmatpush2.msra.mxu0 0.0
    %960 = vmatprep.subr.mxu0 0.0
    %961 = vmatpush2.msra.mxu0 0.0
    %962 = vmatprep.subr.mxu0 0.0
    %963 = vmatpush2.msra.mxu0 0.0
    %964 = vmatprep.subr.mxu0 0.0
    %965 = vmatpush2.msra.mxu0 0.0
    %966 = vmatprep.subr.mxu0 0.0
    %967 = vmatpush2.msra.mxu0 0.0
    %968 = vmatprep.subr.mxu0 0.0
    %969 = vmatpush2.msra.mxu0 0.0
    %970 = vmatprep.subr.mxu0 0.0
    %971 = vmatpush2.msra.mxu0 0.0
    %972 = vmatprep.subr.mxu0 0.0
    %973 = vmatpush2.msra.mxu0 0.0
    %974 = vmatprep.mubr.f32.mxu0 0.0
    %975 = vmatmul.mubr.f32.gmra.mxu0 %v905
    %v976 = vpop.f32.mrf.mxu0
    %v977 = vadd.f32 0.0, %v976
    %v978 = vpop.f32.mrf.mxu0
    %979 = vmatprep.mubr.f32.mxu0 0.0
    %980 = vmatmul.mubr.f32.gmra.mxu0 %v908
    %v981 = vpop.f32.mrf.mxu0
    %v982 = vadd.f32 0.0, %v981
    %v983 = vpop.f32.mrf.mxu0
    %984 = vdwg.mxu0
    %s985 = scalar_lea.vmem %s3, 16
    %v986 = vld [vmem:[%s985] sm:$0xff]
    %v987 = vld [vmem:[%s985 + $0x8] sm:$0xff]
    %v989 = vsel %vm339, %v977, 0
    %v992 = vsel %vm339, %v982, 0
    %994 = vmatprep.subr.mxu0 0.0
    %995 = vmatpush1.msra.mxu0 0.0
    %996 = vmatprep.subr.mxu0 0.0
    %997 = vmatpush1.msra.mxu0 0.0
    %998 = vmatprep.subr.mxu0 0.0
    %999 = vmatpush1.msra.mxu0 0.0
    %1000 = vmatprep.subr.mxu0 0.0
    %1001 = vmatpush1.msra.mxu0 0.0
    %1002 = vmatprep.subr.mxu0 0.0
    %1003 = vmatpush1.msra.mxu0 0.0
    %1004 = vmatprep.subr.mxu0 0.0
    %1005 = vmatpush1.msra.mxu0 0.0
    %1006 = vmatprep.subr.mxu0 0.0
    %1007 = vmatpush1.msra.mxu0 0.0
    %1008 = vmatprep.subr.mxu0 0.0
    %1009 = vmatpush1.msra.mxu0 0.0
    %1010 = vmatprep.subr.mxu0 0.0
    %1011 = vmatpush1.msra.mxu0 0.0
    %1012 = vmatprep.subr.mxu0 0.0
    %1013 = vmatpush1.msra.mxu0 0.0
    %1014 = vmatprep.subr.mxu0 0.0
    %1015 = vmatpush1.msra.mxu0 0.0
    %1016 = vmatprep.subr.mxu0 0.0
    %1017 = vmatpush1.msra.mxu0 0.0
    %1018 = vmatprep.subr.mxu0 0.0
    %1019 = vmatpush1.msra.mxu0 0.0
    %1020 = vmatprep.subr.mxu0 0.0
    %1021 = vmatpush1.msra.mxu0 0.0
    %1022 = vmatprep.subr.mxu0 0.0
    %1023 = vmatpush1.msra.mxu0 %v987
    %1024 = vmatprep.subr.mxu0 0.0
    %1025 = vmatpush1.msra.mxu0 %v986
    %1026 = vmatprep.subr.mxu0 0.0
    %1027 = vmatpush2.msra.mxu0 0.0
    %1028 = vmatprep.subr.mxu0 0.0
    %1029 = vmatpush2.msra.mxu0 0.0
    %1030 = vmatprep.subr.mxu0 0.0
    %1031 = vmatpush2.msra.mxu0 0.0
    %1032 = vmatprep.subr.mxu0 0.0
    %1033 = vmatpush2.msra.mxu0 0.0
    %1034 = vmatprep.subr.mxu0 0.0
    %1035 = vmatpush2.msra.mxu0 0.0
    %1036 = vmatprep.subr.mxu0 0.0
    %1037 = vmatpush2.msra.mxu0 0.0
    %1038 = vmatprep.subr.mxu0 0.0
    %1039 = vmatpush2.msra.mxu0 0.0
    %1040 = vmatprep.subr.mxu0 0.0
    %1041 = vmatpush2.msra.mxu0 0.0
    %1042 = vmatprep.subr.mxu0 0.0
    %1043 = vmatpush2.msra.mxu0 0.0
    %1044 = vmatprep.subr.mxu0 0.0
    %1045 = vmatpush2.msra.mxu0 0.0
    %1046 = vmatprep.subr.mxu0 0.0
    %1047 = vmatpush2.msra.mxu0 0.0
    %1048 = vmatprep.subr.mxu0 0.0
    %1049 = vmatpush2.msra.mxu0 0.0
    %1050 = vmatprep.subr.mxu0 0.0
    %1051 = vmatpush2.msra.mxu0 0.0
    %1052 = vmatprep.subr.mxu0 0.0
    %1053 = vmatpush2.msra.mxu0 0.0
    %1054 = vmatprep.subr.mxu0 0.0
    %1055 = vmatpush2.msra.mxu0 0.0
    %1056 = vmatprep.subr.mxu0 0.0
    %1057 = vmatpush2.msra.mxu0 0.0
    %1058 = vmatprep.mubr.f32.mxu0 0.0
    %1059 = vmatmul.mubr.f32.gmra.mxu0 %v989
    %v1060 = vpop.f32.mrf.mxu0
    %v1061 = vadd.f32 0.0, %v1060
    %v1062 = vpop.f32.mrf.mxu0
    %1063 = vmatprep.mubr.f32.mxu0 0.0
    %1064 = vmatmul.mubr.f32.gmra.mxu0 %v992
    %v1065 = vpop.f32.mrf.mxu0
    %v1066 = vadd.f32 0.0, %v1065
    %v1067 = vpop.f32.mrf.mxu0
    %1068 = vdwg.mxu0
    %v1070 = vsel %vm339, %v526, 0
    %v1073 = vsel %vm339, %v531, 0
    %1075 = vmatprep.subr.mxu0 0.0
    %1076 = vmatpush1.msra.mxu0 0.0
    %1077 = vmatprep.subr.mxu0 0.0
    %1078 = vmatpush1.msra.mxu0 0.0
    %1079 = vmatprep.subr.mxu0 0.0
    %1080 = vmatpush1.msra.mxu0 0.0
    %1081 = vmatprep.subr.mxu0 0.0
    %1082 = vmatpush1.msra.mxu0 0.0
    %1083 = vmatprep.subr.mxu0 0.0
    %1084 = vmatpush1.msra.mxu0 0.0
    %1085 = vmatprep.subr.mxu0 0.0
    %1086 = vmatpush1.msra.mxu0 0.0
    %1087 = vmatprep.subr.mxu0 0.0
    %1088 = vmatpush1.msra.mxu0 0.0
    %1089 = vmatprep.subr.mxu0 0.0
    %1090 = vmatpush1.msra.mxu0 0.0
    %1091 = vmatprep.subr.mxu0 0.0
    %1092 = vmatpush1.msra.mxu0 0.0
    %1093 = vmatprep.subr.mxu0 0.0
    %1094 = vmatpush1.msra.mxu0 0.0
    %1095 = vmatprep.subr.mxu0 0.0
    %1096 = vmatpush1.msra.mxu0 0.0
    %1097 = vmatprep.subr.mxu0 0.0
    %1098 = vmatpush1.msra.mxu0 0.0
    %1099 = vmatprep.subr.mxu0 0.0
    %1100 = vmatpush1.msra.mxu0 0.0
    %1101 = vmatprep.subr.mxu0 0.0
    %1102 = vmatpush1.msra.mxu0 0.0
    %1103 = vmatprep.subr.mxu0 0.0
    %1104 = vmatpush1.msra.mxu0 %v535
    %1105 = vmatprep.subr.mxu0 0.0
    %1106 = vmatpush1.msra.mxu0 %v534
    %1107 = vmatprep.subr.mxu0 0.0
    %1108 = vmatpush2.msra.mxu0 0.0
    %1109 = vmatprep.subr.mxu0 0.0
    %1110 = vmatpush2.msra.mxu0 0.0
    %1111 = vmatprep.subr.mxu0 0.0
    %1112 = vmatpush2.msra.mxu0 0.0
    %1113 = vmatprep.subr.mxu0 0.0
    %1114 = vmatpush2.msra.mxu0 0.0
    %1115 = vmatprep.subr.mxu0 0.0
    %1116 = vmatpush2.msra.mxu0 0.0
    %1117 = vmatprep.subr.mxu0 0.0
    %1118 = vmatpush2.msra.mxu0 0.0
    %1119 = vmatprep.subr.mxu0 0.0
    %1120 = vmatpush2.msra.mxu0 0.0
    %1121 = vmatprep.subr.mxu0 0.0
    %1122 = vmatpush2.msra.mxu0 0.0
    %1123 = vmatprep.subr.mxu0 0.0
    %1124 = vmatpush2.msra.mxu0 0.0
    %1125 = vmatprep.subr.mxu0 0.0
    %1126 = vmatpush2.msra.mxu0 0.0
    %1127 = vmatprep.subr.mxu0 0.0
    %1128 = vmatpush2.msra.mxu0 0.0
    %1129 = vmatprep.subr.mxu0 0.0
    %1130 = vmatpush2.msra.mxu0 0.0
    %1131 = vmatprep.subr.mxu0 0.0
    %1132 = vmatpush2.msra.mxu0 0.0
    %1133 = vmatprep.subr.mxu0 0.0
    %1134 = vmatpush2.msra.mxu0 0.0
    %1135 = vmatprep.subr.mxu0 0.0
    %1136 = vmatpush2.msra.mxu0 0.0
    %1137 = vmatprep.subr.mxu0 0.0
    %1138 = vmatpush2.msra.mxu0 0.0
    %1139 = vmatprep.mubr.f32.mxu0 0.0
    %1140 = vmatmul.mubr.f32.gmra.mxu0 %v1070
    %v1141 = vpop.f32.mrf.mxu0
    %v1142 = vadd.f32 %v1061, %v1141
    %v1143 = vpop.f32.mrf.mxu0
    %1144 = vmatprep.mubr.f32.mxu0 0.0
    %1145 = vmatmul.mubr.f32.gmra.mxu0 %v1073
    %v1146 = vpop.f32.mrf.mxu0
    %v1147 = vadd.f32 %v1066, %v1146
    %v1148 = vpop.f32.mrf.mxu0
    %1149 = vdwg.mxu0
    %v1150 = vld [vmem:[%s6 + $0x8] sm:$0x1]
    %v1151 = vlaneseq
    %v1152 = vshrl.u32 %v1151, 7
    %v1153 = vsub.s32 0, %v1152
    %v1154 = vrot.slane %v1150, %v1153
    %v1155 = vadd.f32 %v1142, %v1154
    %v1156 = vadd.f32 %v1147, %v1154
    %v1157 = vadd.f32 %v1155, %v77
    %v1158 = vadd.f32 %v1156, %v78
    %v1159 = vld [vmem:[%s6 + $0x9] sm:$0x1]
    %v1160 = vld [vmem:[%s6 + $0xa] sm:$0x1]
    %v1161 = vsel %vm39, %v1157, 0.0
    %1162 = vadd.xlane.f32.xlu0 %v1161
    %v1163 = vpop.xlane.xlu0 %1162
    %v1164 = vsel %vm39, %v1158, 0.0
    %1165 = vadd.xlane.f32.xlu0 %v1164
    %v1166 = vpop.xlane.xlu0 %1165
    %v1167 = vmul.f32 %v1163, %v46
    %v1168 = vmul.f32 %v1166, %v46
    %v1169 = vsub.f32 %v1157, %v1167
    %v1170 = vsub.f32 %v1158, %v1168
    %v1171 = vmul.f32 %v1169, %v1169
    %v1172 = vmul.f32 %v1170, %v1170
    %v1173 = vsel %vm39, %v1171, 0.0
    %1174 = vadd.xlane.f32.xlu0 %v1173
    %v1175 = vpop.xlane.xlu0 %1174
    %v1176 = vsel %vm39, %v1172, 0.0
    %1177 = vadd.xlane.f32.xlu0 %v1176
    %v1178 = vpop.xlane.xlu0 %1177
    %v1179 = vmul.f32 %v1175, %v46
    %v1180 = vmul.f32 %v1178, %v46
    %v1181 = vadd.f32 %v1179, 1e-12
    %v1182 = vadd.f32 %v1180, 1e-12
    %v1183 = vrsqrt.pop %v1181
    %v1184 = vrsqrt.pop %v1182
    %v1185 = vmul.f32 %v1169, %v1183
    %v1186 = vmul.f32 %v1170, %v1184
    %v1187 = vlaneseq
    %v1188 = vshrl.u32 %v1187, 7
    %v1189 = vsub.s32 0, %v1188
    %v1190 = vrot.slane %v1159, %v1189
    %v1191 = vmul.f32 %v1185, %v1190
    %v1192 = vmul.f32 %v1186, %v1190
    %v1193 = vlaneseq
    %v1194 = vshrl.u32 %v1193, 7
    %v1195 = vsub.s32 0, %v1194
    %v1196 = vrot.slane %v1160, %v1195
    %v1197 = vadd.f32 %v1191, %v1196
    %v1198 = vadd.f32 %v1192, %v1196
    %v1199 = vld [vmem:[%s4] sm:$0xff]
    %v1200 = vld [vmem:[%s4 + $0x8] sm:$0xff]
    %v1201 = vld [vmem:[%s4 + $0x10] sm:$0xff]
    %v1202 = vld [vmem:[%s4 + $0x18] sm:$0xff]
    %v1203 = vld [vmem:[%s6 + $0xb] sm:$0x1]
    %v1204 = vlaneseq
    %v1205 = vshrl.u32 %v1204, 7
    %v1206 = vsub.s32 0, %v1205
    %v1207 = vrot.slane %v1203, %v1206
    %v1209 = vsel %vm39, %v1197, 0
    %v1212 = vsel %vm39, %v1198, 0
    %1214 = vmatprep.subr.mxu0 0.0
    %1215 = vmatpush1.msra.mxu0 0.0
    %1216 = vmatprep.subr.mxu0 0.0
    %1217 = vmatpush1.msra.mxu0 0.0
    %1218 = vmatprep.subr.mxu0 0.0
    %1219 = vmatpush1.msra.mxu0 0.0
    %1220 = vmatprep.subr.mxu0 0.0
    %1221 = vmatpush1.msra.mxu0 0.0
    %1222 = vmatprep.subr.mxu0 0.0
    %1223 = vmatpush1.msra.mxu0 0.0
    %1224 = vmatprep.subr.mxu0 0.0
    %1225 = vmatpush1.msra.mxu0 0.0
    %1226 = vmatprep.subr.mxu0 0.0
    %1227 = vmatpush1.msra.mxu0 0.0
    %1228 = vmatprep.subr.mxu0 0.0
    %1229 = vmatpush1.msra.mxu0 0.0
    %1230 = vmatprep.subr.mxu0 0.0
    %1231 = vmatpush1.msra.mxu0 0.0
    %1232 = vmatprep.subr.mxu0 0.0
    %1233 = vmatpush1.msra.mxu0 0.0
    %1234 = vmatprep.subr.mxu0 0.0
    %1235 = vmatpush1.msra.mxu0 0.0
    %1236 = vmatprep.subr.mxu0 0.0
    %1237 = vmatpush1.msra.mxu0 0.0
    %1238 = vmatprep.subr.mxu0 0.0
    %1239 = vmatpush1.msra.mxu0 %v1202
    %1240 = vmatprep.subr.mxu0 0.0
    %1241 = vmatpush1.msra.mxu0 %v1201
    %1242 = vmatprep.subr.mxu0 0.0
    %1243 = vmatpush1.msra.mxu0 %v1200
    %1244 = vmatprep.subr.mxu0 0.0
    %1245 = vmatpush1.msra.mxu0 %v1199
    %1246 = vmatprep.subr.mxu0 0.0
    %1247 = vmatpush2.msra.mxu0 0.0
    %1248 = vmatprep.subr.mxu0 0.0
    %1249 = vmatpush2.msra.mxu0 0.0
    %1250 = vmatprep.subr.mxu0 0.0
    %1251 = vmatpush2.msra.mxu0 0.0
    %1252 = vmatprep.subr.mxu0 0.0
    %1253 = vmatpush2.msra.mxu0 0.0
    %1254 = vmatprep.subr.mxu0 0.0
    %1255 = vmatpush2.msra.mxu0 0.0
    %1256 = vmatprep.subr.mxu0 0.0
    %1257 = vmatpush2.msra.mxu0 0.0
    %1258 = vmatprep.subr.mxu0 0.0
    %1259 = vmatpush2.msra.mxu0 0.0
    %1260 = vmatprep.subr.mxu0 0.0
    %1261 = vmatpush2.msra.mxu0 0.0
    %1262 = vmatprep.subr.mxu0 0.0
    %1263 = vmatpush2.msra.mxu0 0.0
    %1264 = vmatprep.subr.mxu0 0.0
    %1265 = vmatpush2.msra.mxu0 0.0
    %1266 = vmatprep.subr.mxu0 0.0
    %1267 = vmatpush2.msra.mxu0 0.0
    %1268 = vmatprep.subr.mxu0 0.0
    %1269 = vmatpush2.msra.mxu0 0.0
    %1270 = vmatprep.subr.mxu0 0.0
    %1271 = vmatpush2.msra.mxu0 0.0
    %1272 = vmatprep.subr.mxu0 0.0
    %1273 = vmatpush2.msra.mxu0 0.0
    %1274 = vmatprep.subr.mxu0 0.0
    %1275 = vmatpush2.msra.mxu0 0.0
    %1276 = vmatprep.subr.mxu0 0.0
    %1277 = vmatpush2.msra.mxu0 0.0
    %1278 = vmatprep.mubr.f32.mxu0 0.0
    %1279 = vmatmul.mubr.f32.gmra.mxu0 %v1209
    %v1280 = vpop.f32.mrf.mxu0
    %v1281 = vadd.f32 %v1207, %v1280
    %v1282 = vpop.f32.mrf.mxu0
    %1283 = vmatprep.mubr.f32.mxu0 0.0
    %1284 = vmatmul.mubr.f32.gmra.mxu0 %v1212
    %v1285 = vpop.f32.mrf.mxu0
    %v1286 = vadd.f32 %v1207, %v1285
    %v1287 = vpop.f32.mrf.mxu0
    %1288 = vdwg.mxu0
    %v1289 = vmul.f32 %v1281, %v1281
    %v1290 = vmul.f32 %v1286, %v1286
    %v1291 = vmul.f32 %v1281, %v1289
    %v1292 = vmul.f32 %v1286, %v1290
    %v1293 = vmul.f32 %v1291, 0.044715
    %v1294 = vmul.f32 %v1292, 0.044715
    %v1295 = vadd.f32 %v1281, %v1293
    %v1296 = vadd.f32 %v1286, %v1294
    %v1297 = vmul.f32 %v1295, 0.7978846
    %v1298 = vmul.f32 %v1296, 0.7978846
    %v1299 = vtanh.pop %v1297
    %v1300 = vtanh.pop %v1298
    %v1301 = vadd.f32 %v1299, 1.0
    %v1302 = vadd.f32 %v1300, 1.0
    %v1303 = vmul.f32 %v1301, 0.5
    %v1304 = vmul.f32 %v1302, 0.5
    %v1305 = vmul.f32 %v1281, %v1303
    %v1306 = vmul.f32 %v1286, %v1304
    %v1307 = vld [vmem:[%s5] sm:$0xff]
    %v1308 = vld [vmem:[%s5 + $0x8] sm:$0xff]
    %v1309 = vld [vmem:[%s5 + $0x10] sm:$0xff]
    %v1310 = vld [vmem:[%s5 + $0x18] sm:$0xff]
    %v1311 = vld [vmem:[%s5 + $0x20] sm:$0xff]
    %v1312 = vld [vmem:[%s5 + $0x28] sm:$0xff]
    %v1313 = vld [vmem:[%s5 + $0x30] sm:$0xff]
    %v1314 = vld [vmem:[%s5 + $0x38] sm:$0xff]
    %v1315 = vld [vmem:[%s6 + $0xc] sm:$0x1]
    %v1316 = vlaneseq
    %v1317 = vshrl.u32 %v1316, 7
    %v1318 = vsub.s32 0, %v1317
    %v1319 = vrot.slane %v1315, %v1318
    %vm1320 = vcmask 523264
    %v1322 = vsel %vm1320, %v1305, 0
    %v1325 = vsel %vm1320, %v1306, 0
    %1327 = vmatprep.subr.mxu0 0.0
    %1328 = vmatpush1.msra.mxu0 0.0
    %1329 = vmatprep.subr.mxu0 0.0
    %1330 = vmatpush1.msra.mxu0 0.0
    %1331 = vmatprep.subr.mxu0 0.0
    %1332 = vmatpush1.msra.mxu0 0.0
    %1333 = vmatprep.subr.mxu0 0.0
    %1334 = vmatpush1.msra.mxu0 0.0
    %1335 = vmatprep.subr.mxu0 0.0
    %1336 = vmatpush1.msra.mxu0 0.0
    %1337 = vmatprep.subr.mxu0 0.0
    %1338 = vmatpush1.msra.mxu0 0.0
    %1339 = vmatprep.subr.mxu0 0.0
    %1340 = vmatpush1.msra.mxu0 0.0
    %1341 = vmatprep.subr.mxu0 0.0
    %1342 = vmatpush1.msra.mxu0 0.0
    %1343 = vmatprep.subr.mxu0 0.0
    %1344 = vmatpush1.msra.mxu0 %v1314
    %1345 = vmatprep.subr.mxu0 0.0
    %1346 = vmatpush1.msra.mxu0 %v1313
    %1347 = vmatprep.subr.mxu0 0.0
    %1348 = vmatpush1.msra.mxu0 %v1312
    %1349 = vmatprep.subr.mxu0 0.0
    %1350 = vmatpush1.msra.mxu0 %v1311
    %1351 = vmatprep.subr.mxu0 0.0
    %1352 = vmatpush1.msra.mxu0 %v1310
    %1353 = vmatprep.subr.mxu0 0.0
    %1354 = vmatpush1.msra.mxu0 %v1309
    %1355 = vmatprep.subr.mxu0 0.0
    %1356 = vmatpush1.msra.mxu0 %v1308
    %1357 = vmatprep.subr.mxu0 0.0
    %1358 = vmatpush1.msra.mxu0 %v1307
    %1359 = vmatprep.subr.mxu0 0.0
    %1360 = vmatpush2.msra.mxu0 0.0
    %1361 = vmatprep.subr.mxu0 0.0
    %1362 = vmatpush2.msra.mxu0 0.0
    %1363 = vmatprep.subr.mxu0 0.0
    %1364 = vmatpush2.msra.mxu0 0.0
    %1365 = vmatprep.subr.mxu0 0.0
    %1366 = vmatpush2.msra.mxu0 0.0
    %1367 = vmatprep.subr.mxu0 0.0
    %1368 = vmatpush2.msra.mxu0 0.0
    %1369 = vmatprep.subr.mxu0 0.0
    %1370 = vmatpush2.msra.mxu0 0.0
    %1371 = vmatprep.subr.mxu0 0.0
    %1372 = vmatpush2.msra.mxu0 0.0
    %1373 = vmatprep.subr.mxu0 0.0
    %1374 = vmatpush2.msra.mxu0 0.0
    %1375 = vmatprep.subr.mxu0 0.0
    %1376 = vmatpush2.msra.mxu0 0.0
    %1377 = vmatprep.subr.mxu0 0.0
    %1378 = vmatpush2.msra.mxu0 0.0
    %1379 = vmatprep.subr.mxu0 0.0
    %1380 = vmatpush2.msra.mxu0 0.0
    %1381 = vmatprep.subr.mxu0 0.0
    %1382 = vmatpush2.msra.mxu0 0.0
    %1383 = vmatprep.subr.mxu0 0.0
    %1384 = vmatpush2.msra.mxu0 0.0
    %1385 = vmatprep.subr.mxu0 0.0
    %1386 = vmatpush2.msra.mxu0 0.0
    %1387 = vmatprep.subr.mxu0 0.0
    %1388 = vmatpush2.msra.mxu0 0.0
    %1389 = vmatprep.subr.mxu0 0.0
    %1390 = vmatpush2.msra.mxu0 0.0
    %1391 = vmatprep.mubr.f32.mxu0 0.0
    %1392 = vmatmul.mubr.f32.gmra.mxu0 %v1322
    %v1393 = vpop.f32.mrf.mxu0
    %v1394 = vadd.f32 %v1319, %v1393
    %v1395 = vpop.f32.mrf.mxu0
    %1396 = vmatprep.mubr.f32.mxu0 0.0
    %1397 = vmatmul.mubr.f32.gmra.mxu0 %v1325
    %v1398 = vpop.f32.mrf.mxu0
    %v1399 = vadd.f32 %v1319, %v1398
    %v1400 = vpop.f32.mrf.mxu0
    %1401 = vdwg.mxu0
    %v1402 = vadd.f32 %v1394, %v1197
    %v1403 = vadd.f32 %v1399, %v1198
    %v1404 = vld [vmem:[%s6 + $0xd] sm:$0x1]
    %v1405 = vld [vmem:[%s6 + $0xe] sm:$0x1]
    %v1406 = vsel %vm39, %v1402, 0.0
    %1407 = vadd.xlane.f32.xlu0 %v1406
    %v1408 = vpop.xlane.xlu0 %1407
    %v1409 = vsel %vm39, %v1403, 0.0
    %1410 = vadd.xlane.f32.xlu0 %v1409
    %v1411 = vpop.xlane.xlu0 %1410
    %v1412 = vmul.f32 %v1408, %v46
    %v1413 = vmul.f32 %v1411, %v46
    %v1414 = vsub.f32 %v1402, %v1412
    %v1415 = vsub.f32 %v1403, %v1413
    %v1416 = vmul.f32 %v1414, %v1414
    %v1417 = vmul.f32 %v1415, %v1415
    %v1418 = vsel %vm39, %v1416, 0.0
    %1419 = vadd.xlane.f32.xlu0 %v1418
    %v1420 = vpop.xlane.xlu0 %1419
    %v1421 = vsel %vm39, %v1417, 0.0
    %1422 = vadd.xlane.f32.xlu0 %v1421
    %v1423 = vpop.xlane.xlu0 %1422
    %v1424 = vmul.f32 %v1420, %v46
    %v1425 = vmul.f32 %v1423, %v46
    %v1426 = vadd.f32 %v1424, 1e-12
    %v1427 = vadd.f32 %v1425, 1e-12
    %v1428 = vrsqrt.pop %v1426
    %v1429 = vrsqrt.pop %v1427
    %v1430 = vmul.f32 %v1414, %v1428
    %v1431 = vmul.f32 %v1415, %v1429
    %v1432 = vlaneseq
    %v1433 = vshrl.u32 %v1432, 7
    %v1434 = vsub.s32 0, %v1433
    %v1435 = vrot.slane %v1404, %v1434
    %v1436 = vmul.f32 %v1430, %v1435
    %v1437 = vmul.f32 %v1431, %v1435
    %v1438 = vlaneseq
    %v1439 = vshrl.u32 %v1438, 7
    %v1440 = vsub.s32 0, %v1439
    %v1441 = vrot.slane %v1405, %v1440
    %v1442 = vadd.f32 %v1436, %v1441
    %v1443 = vadd.f32 %v1437, %v1441
    %s1444 = scalar_lea.vmem %s2, 192
    %v1445 = vld [vmem:[%s1444] sm:$0xff]
    %v1446 = vld [vmem:[%s1444 + $0x8] sm:$0xff]
    %v1447 = vld [vmem:[%s1444 + $0x10] sm:$0xff]
    %v1448 = vld [vmem:[%s1444 + $0x18] sm:$0xff]
    %s1449 = scalar_lea.vmem %s2, 256
    %v1450 = vld [vmem:[%s1449] sm:$0xff]
    %v1451 = vld [vmem:[%s1449 + $0x8] sm:$0xff]
    %v1452 = vld [vmem:[%s1449 + $0x10] sm:$0xff]
    %v1453 = vld [vmem:[%s1449 + $0x18] sm:$0xff]
    %s1454 = scalar_lea.vmem %s2, 320
    %v1455 = vld [vmem:[%s1454] sm:$0xff]
    %v1456 = vld [vmem:[%s1454 + $0x8] sm:$0xff]
    %v1457 = vld [vmem:[%s1454 + $0x10] sm:$0xff]
    %v1458 = vld [vmem:[%s1454 + $0x18] sm:$0xff]
    %v1459 = vld [vmem:[%s6 + $0xf] sm:$0x1]
    %v1460 = vlaneseq
    %v1461 = vshrl.u32 %v1460, 7
    %v1462 = vsub.s32 0, %v1461
    %v1463 = vrot.slane %v1459, %v1462
    %v1465 = vsel %vm39, %v1442, 0
    %v1468 = vsel %vm39, %v1443, 0
    %1470 = vmatprep.subr.mxu0 0.0
    %1471 = vmatpush1.msra.mxu0 0.0
    %1472 = vmatprep.subr.mxu0 0.0
    %1473 = vmatpush1.msra.mxu0 0.0
    %1474 = vmatprep.subr.mxu0 0.0
    %1475 = vmatpush1.msra.mxu0 0.0
    %1476 = vmatprep.subr.mxu0 0.0
    %1477 = vmatpush1.msra.mxu0 0.0
    %1478 = vmatprep.subr.mxu0 0.0
    %1479 = vmatpush1.msra.mxu0 0.0
    %1480 = vmatprep.subr.mxu0 0.0
    %1481 = vmatpush1.msra.mxu0 0.0
    %1482 = vmatprep.subr.mxu0 0.0
    %1483 = vmatpush1.msra.mxu0 0.0
    %1484 = vmatprep.subr.mxu0 0.0
    %1485 = vmatpush1.msra.mxu0 0.0
    %1486 = vmatprep.subr.mxu0 0.0
    %1487 = vmatpush1.msra.mxu0 0.0
    %1488 = vmatprep.subr.mxu0 0.0
    %1489 = vmatpush1.msra.mxu0 0.0
    %1490 = vmatprep.subr.mxu0 0.0
    %1491 = vmatpush1.msra.mxu0 0.0
    %1492 = vmatprep.subr.mxu0 0.0
    %1493 = vmatpush1.msra.mxu0 0.0
    %1494 = vmatprep.subr.mxu0 0.0
    %1495 = vmatpush1.msra.mxu0 %v1448
    %1496 = vmatprep.subr.mxu0 0.0
    %1497 = vmatpush1.msra.mxu0 %v1447
    %1498 = vmatprep.subr.mxu0 0.0
    %1499 = vmatpush1.msra.mxu0 %v1446
    %1500 = vmatprep.subr.mxu0 0.0
    %1501 = vmatpush1.msra.mxu0 %v1445
    %1502 = vmatprep.subr.mxu0 0.0
    %1503 = vmatpush2.msra.mxu0 0.0
    %1504 = vmatprep.subr.mxu0 0.0
    %1505 = vmatpush2.msra.mxu0 0.0
    %1506 = vmatprep.subr.mxu0 0.0
    %1507 = vmatpush2.msra.mxu0 0.0
    %1508 = vmatprep.subr.mxu0 0.0
    %1509 = vmatpush2.msra.mxu0 0.0
    %1510 = vmatprep.subr.mxu0 0.0
    %1511 = vmatpush2.msra.mxu0 0.0
    %1512 = vmatprep.subr.mxu0 0.0
    %1513 = vmatpush2.msra.mxu0 0.0
    %1514 = vmatprep.subr.mxu0 0.0
    %1515 = vmatpush2.msra.mxu0 0.0
    %1516 = vmatprep.subr.mxu0 0.0
    %1517 = vmatpush2.msra.mxu0 0.0
    %1518 = vmatprep.subr.mxu0 0.0
    %1519 = vmatpush2.msra.mxu0 0.0
    %1520 = vmatprep.subr.mxu0 0.0
    %1521 = vmatpush2.msra.mxu0 0.0
    %1522 = vmatprep.subr.mxu0 0.0
    %1523 = vmatpush2.msra.mxu0 0.0
    %1524 = vmatprep.subr.mxu0 0.0
    %1525 = vmatpush2.msra.mxu0 0.0
    %1526 = vmatprep.subr.mxu0 0.0
    %1527 = vmatpush2.msra.mxu0 0.0
    %1528 = vmatprep.subr.mxu0 0.0
    %1529 = vmatpush2.msra.mxu0 0.0
    %1530 = vmatprep.subr.mxu0 0.0
    %1531 = vmatpush2.msra.mxu0 0.0
    %1532 = vmatprep.subr.mxu0 0.0
    %1533 = vmatpush2.msra.mxu0 0.0
    %1534 = vmatprep.mubr.f32.mxu0 0.0
    %1535 = vmatmul.mubr.f32.gmra.mxu0 %v1465
    %v1536 = vpop.f32.mrf.mxu0
    %v1537 = vadd.f32 %v1463, %v1536
    %v1538 = vpop.f32.mrf.mxu0
    %1539 = vmatprep.mubr.f32.mxu0 0.0
    %1540 = vmatmul.mubr.f32.gmra.mxu0 %v1468
    %v1541 = vpop.f32.mrf.mxu0
    %v1542 = vadd.f32 %v1463, %v1541
    %v1543 = vpop.f32.mrf.mxu0
    %1544 = vdwg.mxu0
    %v1545 = vld [vmem:[%s6 + $0x10] sm:$0x1]
    %v1546 = vlaneseq
    %v1547 = vshrl.u32 %v1546, 7
    %v1548 = vsub.s32 0, %v1547
    %v1549 = vrot.slane %v1545, %v1548
    %1550 = vmatprep.subr.mxu0 0.0
    %1551 = vmatpush1.msra.mxu0 0.0
    %1552 = vmatprep.subr.mxu0 0.0
    %1553 = vmatpush1.msra.mxu0 0.0
    %1554 = vmatprep.subr.mxu0 0.0
    %1555 = vmatpush1.msra.mxu0 0.0
    %1556 = vmatprep.subr.mxu0 0.0
    %1557 = vmatpush1.msra.mxu0 0.0
    %1558 = vmatprep.subr.mxu0 0.0
    %1559 = vmatpush1.msra.mxu0 0.0
    %1560 = vmatprep.subr.mxu0 0.0
    %1561 = vmatpush1.msra.mxu0 0.0
    %1562 = vmatprep.subr.mxu0 0.0
    %1563 = vmatpush1.msra.mxu0 0.0
    %1564 = vmatprep.subr.mxu0 0.0
    %1565 = vmatpush1.msra.mxu0 0.0
    %1566 = vmatprep.subr.mxu0 0.0
    %1567 = vmatpush1.msra.mxu0 0.0
    %1568 = vmatprep.subr.mxu0 0.0
    %1569 = vmatpush1.msra.mxu0 0.0
    %1570 = vmatprep.subr.mxu0 0.0
    %1571 = vmatpush1.msra.mxu0 0.0
    %1572 = vmatprep.subr.mxu0 0.0
    %1573 = vmatpush1.msra.mxu0 0.0
    %1574 = vmatprep.subr.mxu0 0.0
    %1575 = vmatpush1.msra.mxu0 %v1453
    %1576 = vmatprep.subr.mxu0 0.0
    %1577 = vmatpush1.msra.mxu0 %v1452
    %1578 = vmatprep.subr.mxu0 0.0
    %1579 = vmatpush1.msra.mxu0 %v1451
    %1580 = vmatprep.subr.mxu0 0.0
    %1581 = vmatpush1.msra.mxu0 %v1450
    %1582 = vmatprep.subr.mxu0 0.0
    %1583 = vmatpush2.msra.mxu0 0.0
    %1584 = vmatprep.subr.mxu0 0.0
    %1585 = vmatpush2.msra.mxu0 0.0
    %1586 = vmatprep.subr.mxu0 0.0
    %1587 = vmatpush2.msra.mxu0 0.0
    %1588 = vmatprep.subr.mxu0 0.0
    %1589 = vmatpush2.msra.mxu0 0.0
    %1590 = vmatprep.subr.mxu0 0.0
    %1591 = vmatpush2.msra.mxu0 0.0
    %1592 = vmatprep.subr.mxu0 0.0
    %1593 = vmatpush2.msra.mxu0 0.0
    %1594 = vmatprep.subr.mxu0 0.0
    %1595 = vmatpush2.msra.mxu0 0.0
    %1596 = vmatprep.subr.mxu0 0.0
    %1597 = vmatpush2.msra.mxu0 0.0
    %1598 = vmatprep.subr.mxu0 0.0
    %1599 = vmatpush2.msra.mxu0 0.0
    %1600 = vmatprep.subr.mxu0 0.0
    %1601 = vmatpush2.msra.mxu0 0.0
    %1602 = vmatprep.subr.mxu0 0.0
    %1603 = vmatpush2.msra.mxu0 0.0
    %1604 = vmatprep.subr.mxu0 0.0
    %1605 = vmatpush2.msra.mxu0 0.0
    %1606 = vmatprep.subr.mxu0 0.0
    %1607 = vmatpush2.msra.mxu0 0.0
    %1608 = vmatprep.subr.mxu0 0.0
    %1609 = vmatpush2.msra.mxu0 0.0
    %1610 = vmatprep.subr.mxu0 0.0
    %1611 = vmatpush2.msra.mxu0 0.0
    %1612 = vmatprep.subr.mxu0 0.0
    %1613 = vmatpush2.msra.mxu0 0.0
    %1614 = vmatprep.mubr.f32.mxu0 0.0
    %1615 = vmatmul.mubr.f32.gmra.mxu0 %v1465
    %v1616 = vpop.f32.mrf.mxu0
    %v1617 = vadd.f32 %v1549, %v1616
    %v1618 = vpop.f32.mrf.mxu0
    %1619 = vmatprep.mubr.f32.mxu0 0.0
    %1620 = vmatmul.mubr.f32.gmra.mxu0 %v1468
    %v1621 = vpop.f32.mrf.mxu0
    %v1622 = vadd.f32 %v1549, %v1621
    %v1623 = vpop.f32.mrf.mxu0
    %1624 = vdwg.mxu0
    %v1625 = vld [vmem:[%s6 + $0x11] sm:$0x1]
    %v1626 = vlaneseq
    %v1627 = vshrl.u32 %v1626, 7
    %v1628 = vsub.s32 0, %v1627
    %v1629 = vrot.slane %v1625, %v1628
    %1630 = vmatprep.subr.mxu0 0.0
    %1631 = vmatpush1.msra.mxu0 0.0
    %1632 = vmatprep.subr.mxu0 0.0
    %1633 = vmatpush1.msra.mxu0 0.0
    %1634 = vmatprep.subr.mxu0 0.0
    %1635 = vmatpush1.msra.mxu0 0.0
    %1636 = vmatprep.subr.mxu0 0.0
    %1637 = vmatpush1.msra.mxu0 0.0
    %1638 = vmatprep.subr.mxu0 0.0
    %1639 = vmatpush1.msra.mxu0 0.0
    %1640 = vmatprep.subr.mxu0 0.0
    %1641 = vmatpush1.msra.mxu0 0.0
    %1642 = vmatprep.subr.mxu0 0.0
    %1643 = vmatpush1.msra.mxu0 0.0
    %1644 = vmatprep.subr.mxu0 0.0
    %1645 = vmatpush1.msra.mxu0 0.0
    %1646 = vmatprep.subr.mxu0 0.0
    %1647 = vmatpush1.msra.mxu0 0.0
    %1648 = vmatprep.subr.mxu0 0.0
    %1649 = vmatpush1.msra.mxu0 0.0
    %1650 = vmatprep.subr.mxu0 0.0
    %1651 = vmatpush1.msra.mxu0 0.0
    %1652 = vmatprep.subr.mxu0 0.0
    %1653 = vmatpush1.msra.mxu0 0.0
    %1654 = vmatprep.subr.mxu0 0.0
    %1655 = vmatpush1.msra.mxu0 %v1458
    %1656 = vmatprep.subr.mxu0 0.0
    %1657 = vmatpush1.msra.mxu0 %v1457
    %1658 = vmatprep.subr.mxu0 0.0
    %1659 = vmatpush1.msra.mxu0 %v1456
    %1660 = vmatprep.subr.mxu0 0.0
    %1661 = vmatpush1.msra.mxu0 %v1455
    %1662 = vmatprep.subr.mxu0 0.0
    %1663 = vmatpush2.msra.mxu0 0.0
    %1664 = vmatprep.subr.mxu0 0.0
    %1665 = vmatpush2.msra.mxu0 0.0
    %1666 = vmatprep.subr.mxu0 0.0
    %1667 = vmatpush2.msra.mxu0 0.0
    %1668 = vmatprep.subr.mxu0 0.0
    %1669 = vmatpush2.msra.mxu0 0.0
    %1670 = vmatprep.subr.mxu0 0.0
    %1671 = vmatpush2.msra.mxu0 0.0
    %1672 = vmatprep.subr.mxu0 0.0
    %1673 = vmatpush2.msra.mxu0 0.0
    %1674 = vmatprep.subr.mxu0 0.0
    %1675 = vmatpush2.msra.mxu0 0.0
    %1676 = vmatprep.subr.mxu0 0.0
    %1677 = vmatpush2.msra.mxu0 0.0
    %1678 = vmatprep.subr.mxu0 0.0
    %1679 = vmatpush2.msra.mxu0 0.0
    %1680 = vmatprep.subr.mxu0 0.0
    %1681 = vmatpush2.msra.mxu0 0.0
    %1682 = vmatprep.subr.mxu0 0.0
    %1683 = vmatpush2.msra.mxu0 0.0
    %1684 = vmatprep.subr.mxu0 0.0
    %1685 = vmatpush2.msra.mxu0 0.0
    %1686 = vmatprep.subr.mxu0 0.0
    %1687 = vmatpush2.msra.mxu0 0.0
    %1688 = vmatprep.subr.mxu0 0.0
    %1689 = vmatpush2.msra.mxu0 0.0
    %1690 = vmatprep.subr.mxu0 0.0
    %1691 = vmatpush2.msra.mxu0 0.0
    %1692 = vmatprep.subr.mxu0 0.0
    %1693 = vmatpush2.msra.mxu0 0.0
    %1694 = vmatprep.mubr.f32.mxu0 0.0
    %1695 = vmatmul.mubr.f32.gmra.mxu0 %v1465
    %v1696 = vpop.f32.mrf.mxu0
    %v1697 = vadd.f32 %v1629, %v1696
    %v1698 = vpop.f32.mrf.mxu0
    %1699 = vmatprep.mubr.f32.mxu0 0.0
    %1700 = vmatmul.mubr.f32.gmra.mxu0 %v1468
    %v1701 = vpop.f32.mrf.mxu0
    %v1702 = vadd.f32 %v1629, %v1701
    %v1703 = vpop.f32.mrf.mxu0
    %1704 = vdwg.mxu0
    %v1706 = vsel %vm339, %v1537, 0
    %v1709 = vsel %vm339, %v1542, 0
    %v1712 = vsel %vm339, %v1617, 0
    %v1715 = vsel %vm339, %v1622, 0
    %1717 = vmatprep.subr.mxu0 0.0
    %1718 = vmatpush1.xpose.msra.mxu0 0.0
    %1719 = vmatprep.subr.mxu0 0.0
    %1720 = vmatpush1.xpose.msra.mxu0 0.0
    %1721 = vmatprep.subr.mxu0 0.0
    %1722 = vmatpush1.xpose.msra.mxu0 0.0
    %1723 = vmatprep.subr.mxu0 0.0
    %1724 = vmatpush1.xpose.msra.mxu0 0.0
    %1725 = vmatprep.subr.mxu0 0.0
    %1726 = vmatpush1.xpose.msra.mxu0 0.0
    %1727 = vmatprep.subr.mxu0 0.0
    %1728 = vmatpush1.xpose.msra.mxu0 0.0
    %1729 = vmatprep.subr.mxu0 0.0
    %1730 = vmatpush1.xpose.msra.mxu0 0.0
    %1731 = vmatprep.subr.mxu0 0.0
    %1732 = vmatpush1.xpose.msra.mxu0 0.0
    %1733 = vmatprep.subr.mxu0 0.0
    %1734 = vmatpush1.xpose.msra.mxu0 0.0
    %1735 = vmatprep.subr.mxu0 0.0
    %1736 = vmatpush1.xpose.msra.mxu0 0.0
    %1737 = vmatprep.subr.mxu0 0.0
    %1738 = vmatpush1.xpose.msra.mxu0 0.0
    %1739 = vmatprep.subr.mxu0 0.0
    %1740 = vmatpush1.xpose.msra.mxu0 0.0
    %1741 = vmatprep.subr.mxu0 0.0
    %1742 = vmatpush1.xpose.msra.mxu0 0.0
    %1743 = vmatprep.subr.mxu0 0.0
    %1744 = vmatpush1.xpose.msra.mxu0 0.0
    %1745 = vmatprep.subr.mxu0 0.0
    %1746 = vmatpush1.xpose.msra.mxu0 %v1715
    %1747 = vmatprep.subr.mxu0 0.0
    %1748 = vmatpush1.xpose.msra.mxu0 %v1712
    %1749 = vmatprep.subr.mxu0 0.0
    %1750 = vmatpush2.xpose.msra.mxu0 0.0
    %1751 = vmatprep.subr.mxu0 0.0
    %1752 = vmatpush2.xpose.msra.mxu0 0.0
    %1753 = vmatprep.subr.mxu0 0.0
    %1754 = vmatpush2.xpose.msra.mxu0 0.0
    %1755 = vmatprep.subr.mxu0 0.0
    %1756 = vmatpush2.xpose.msra.mxu0 0.0
    %1757 = vmatprep.subr.mxu0 0.0
    %1758 = vmatpush2.xpose.msra.mxu0 0.0
    %1759 = vmatprep.subr.mxu0 0.0
    %1760 = vmatpush2.xpose.msra.mxu0 0.0
    %1761 = vmatprep.subr.mxu0 0.0
    %1762 = vmatpush2.xpose.msra.mxu0 0.0
    %1763 = vmatprep.subr.mxu0 0.0
    %1764 = vmatpush2.xpose.msra.mxu0 0.0
    %1765 = vmatprep.subr.mxu0 0.0
    %1766 = vmatpush2.xpose.msra.mxu0 0.0
    %1767 = vmatprep.subr.mxu0 0.0
    %1768 = vmatpush2.xpose.msra.mxu0 0.0
    %1769 = vmatprep.subr.mxu0 0.0
    %1770 = vmatpush2.xpose.msra.mxu0 0.0
    %1771 = vmatprep.subr.mxu0 0.0
    %1772 = vmatpush2.xpose.msra.mxu0 0.0
    %1773 = vmatprep.subr.mxu0 0.0
    %1774 = vmatpush2.xpose.msra.mxu0 0.0
    %1775 = vmatprep.subr.mxu0 0.0
    %1776 = vmatpush2.xpose.msra.mxu0 0.0
    %1777 = vmatprep.subr.mxu0 0.0
    %1778 = vmatpush2.xpose.msra.mxu0 0.0
    %1779 = vmatprep.subr.mxu0 0.0
    %1780 = vmatpush2.xpose.msra.mxu0 0.0
    %1781 = vmatprep.mubr.f32.mxu0 0.0
    %1782 = vmatmul.mubr.f32.gmra.mxu0 %v1706
    %v1783 = vpop.f32.mrf.mxu0
    %v1784 = vadd.f32 0.0, %v1783
    %v1785 = vpop.f32.mrf.mxu0
    %1786 = vmatprep.mubr.f32.mxu0 0.0
    %1787 = vmatmul.mubr.f32.gmra.mxu0 %v1709
    %v1788 = vpop.f32.mrf.mxu0
    %v1789 = vadd.f32 0.0, %v1788
    %v1790 = vpop.f32.mrf.mxu0
    %1791 = vdwg.mxu0
    %v1792 = vmul.f32 %v1784, 0.25
    %v1793 = vmul.f32 %v1789, 0.25
    %v1794 = vadd.f32 %v1792, %v33
    %v1795 = vadd.f32 %v1793, %v34
    %v1796 = vsel %vm339, %v1794, -inf
    %1797 = vmax.xlane.f32.xlu0 %v1796
    %v1798 = vpop.xlane.xlu0 %1797
    %v1799 = vsel %vm339, %v1795, -inf
    %1800 = vmax.xlane.f32.xlu0 %v1799
    %v1801 = vpop.xlane.xlu0 %1800
    %v1802 = vsub.f32 %v1794, %v1798
    %v1803 = vsub.f32 %v1795, %v1801
    %v1804 = vmul.f32 %v1802, 1.442695
    %v1805 = vpow.pop %v1804
    %v1806 = vmul.f32 %v1803, 1.442695
    %v1807 = vpow.pop %v1806
    %v1808 = vsel %vm339, %v1805, 0.0
    %1809 = vadd.xlane.f32.xlu0 %v1808
    %v1810 = vpop.xlane.xlu0 %1809
    %v1811 = vsel %vm339, %v1807, 0.0
    %1812 = vadd.xlane.f32.xlu0 %v1811
    %v1813 = vpop.xlane.xlu0 %1812
    %v1814 = vrcp.pop %v1810
    %v1815 = vrcp.pop %v1813
    %v1816 = vmul.f32 %v1805, %v1814
    %v1817 = vmul.f32 %v1807, %v1815
    %v1819 = vsel %vm339, %v1816, 0
    %v1822 = vsel %vm339, %v1817, 0
    %1824 = vmatprep.subr.mxu0 0.0
    %1825 = vmatpush1.msra.mxu0 0.0
    %1826 = vmatprep.subr.mxu0 0.0
    %1827 = vmatpush1.msra.mxu0 0.0
    %1828 = vmatprep.subr.mxu0 0.0
    %1829 = vmatpush1.msra.mxu0 0.0
    %1830 = vmatprep.subr.mxu0 0.0
    %1831 = vmatpush1.msra.mxu0 0.0
    %1832 = vmatprep.subr.mxu0 0.0
    %1833 = vmatpush1.msra.mxu0 0.0
    %1834 = vmatprep.subr.mxu0 0.0
    %1835 = vmatpush1.msra.mxu0 0.0
    %1836 = vmatprep.subr.mxu0 0.0
    %1837 = vmatpush1.msra.mxu0 0.0
    %1838 = vmatprep.subr.mxu0 0.0
    %1839 = vmatpush1.msra.mxu0 0.0
    %1840 = vmatprep.subr.mxu0 0.0
    %1841 = vmatpush1.msra.mxu0 0.0
    %1842 = vmatprep.subr.mxu0 0.0
    %1843 = vmatpush1.msra.mxu0 0.0
    %1844 = vmatprep.subr.mxu0 0.0
    %1845 = vmatpush1.msra.mxu0 0.0
    %1846 = vmatprep.subr.mxu0 0.0
    %1847 = vmatpush1.msra.mxu0 0.0
    %1848 = vmatprep.subr.mxu0 0.0
    %1849 = vmatpush1.msra.mxu0 0.0
    %1850 = vmatprep.subr.mxu0 0.0
    %1851 = vmatpush1.msra.mxu0 0.0
    %1852 = vmatprep.subr.mxu0 0.0
    %1853 = vmatpush1.msra.mxu0 %v1702
    %1854 = vmatprep.subr.mxu0 0.0
    %1855 = vmatpush1.msra.mxu0 %v1697
    %1856 = vmatprep.subr.mxu0 0.0
    %1857 = vmatpush2.msra.mxu0 0.0
    %1858 = vmatprep.subr.mxu0 0.0
    %1859 = vmatpush2.msra.mxu0 0.0
    %1860 = vmatprep.subr.mxu0 0.0
    %1861 = vmatpush2.msra.mxu0 0.0
    %1862 = vmatprep.subr.mxu0 0.0
    %1863 = vmatpush2.msra.mxu0 0.0
    %1864 = vmatprep.subr.mxu0 0.0
    %1865 = vmatpush2.msra.mxu0 0.0
    %1866 = vmatprep.subr.mxu0 0.0
    %1867 = vmatpush2.msra.mxu0 0.0
    %1868 = vmatprep.subr.mxu0 0.0
    %1869 = vmatpush2.msra.mxu0 0.0
    %1870 = vmatprep.subr.mxu0 0.0
    %1871 = vmatpush2.msra.mxu0 0.0
    %1872 = vmatprep.subr.mxu0 0.0
    %1873 = vmatpush2.msra.mxu0 0.0
    %1874 = vmatprep.subr.mxu0 0.0
    %1875 = vmatpush2.msra.mxu0 0.0
    %1876 = vmatprep.subr.mxu0 0.0
    %1877 = vmatpush2.msra.mxu0 0.0
    %1878 = vmatprep.subr.mxu0 0.0
    %1879 = vmatpush2.msra.mxu0 0.0
    %1880 = vmatprep.subr.mxu0 0.0
    %1881 = vmatpush2.msra.mxu0 0.0
    %1882 = vmatprep.subr.mxu0 0.0
    %1883 = vmatpush2.msra.mxu0 0.0
    %1884 = vmatprep.subr.mxu0 0.0
    %1885 = vmatpush2.msra.mxu0 0.0
    %1886 = vmatprep.subr.mxu0 0.0
    %1887 = vmatpush2.msra.mxu0 0.0
    %1888 = vmatprep.mubr.f32.mxu0 0.0
    %1889 = vmatmul.mubr.f32.gmra.mxu0 %v1819
    %v1890 = vpop.f32.mrf.mxu0
    %v1891 = vadd.f32 0.0, %v1890
    %v1892 = vpop.f32.mrf.mxu0
    %1893 = vmatprep.mubr.f32.mxu0 0.0
    %1894 = vmatmul.mubr.f32.gmra.mxu0 %v1822
    %v1895 = vpop.f32.mrf.mxu0
    %v1896 = vadd.f32 0.0, %v1895
    %v1897 = vpop.f32.mrf.mxu0
    %1898 = vdwg.mxu0
    %s1899 = scalar_lea.vmem %s3, 32
    %v1900 = vld [vmem:[%s1899] sm:$0xff]
    %v1901 = vld [vmem:[%s1899 + $0x8] sm:$0xff]
    %s1902 = scalar_lea.vmem %s2, 224
    %v1903 = vld [vmem:[%s1902] sm:$0xff]
    %v1904 = vld [vmem:[%s1902 + $0x8] sm:$0xff]
    %v1905 = vld [vmem:[%s1902 + $0x10] sm:$0xff]
    %v1906 = vld [vmem:[%s1902 + $0x18] sm:$0xff]
    %s1907 = scalar_lea.vmem %s2, 288
    %v1908 = vld [vmem:[%s1907] sm:$0xff]
    %v1909 = vld [vmem:[%s1907 + $0x8] sm:$0xff]
    %v1910 = vld [vmem:[%s1907 + $0x10] sm:$0xff]
    %v1911 = vld [vmem:[%s1907 + $0x18] sm:$0xff]
    %s1912 = scalar_lea.vmem %s2, 352
    %v1913 = vld [vmem:[%s1912] sm:$0xff]
    %v1914 = vld [vmem:[%s1912 + $0x8] sm:$0xff]
    %v1915 = vld [vmem:[%s1912 + $0x10] sm:$0xff]
    %v1916 = vld [vmem:[%s1912 + $0x18] sm:$0xff]
    %v1917 = vld [vmem:[%s6 + $0x12] sm:$0x1]
    %v1918 = vlaneseq
    %v1919 = vshrl.u32 %v1918, 7
    %v1920 = vsub.s32 0, %v1919
    %v1921 = vrot.slane %v1917, %v1920
    %1922 = vmatprep.subr.mxu0 0.0
    %1923 = vmatpush1.msra.mxu0 0.0
    %1924 = vmatprep.subr.mxu0 0.0
    %1925 = vmatpush1.msra.mxu0 0.0
    %1926 = vmatprep.subr.mxu0 0.0
    %1927 = vmatpush1.msra.mxu0 0.0
    %1928 = vmatprep.subr.mxu0 0.0
    %1929 = vmatpush1.msra.mxu0 0.0
    %1930 = vmatprep.subr.mxu0 0.0
    %1931 = vmatpush1.msra.mxu0 0.0
    %1932 = vmatprep.subr.mxu0 0.0
    %1933 = vmatpush1.msra.mxu0 0.0
    %1934 = vmatprep.subr.mxu0 0.0
    %1935 = vmatpush1.msra.mxu0 0.0
    %1936 = vmatprep.subr.mxu0 0.0
    %1937 = vmatpush1.msra.mxu0 0.0
    %1938 = vmatprep.subr.mxu0 0.0
    %1939 = vmatpush1.msra.mxu0 0.0
    %1940 = vmatprep.subr.mxu0 0.0
    %1941 = vmatpush1.msra.mxu0 0.0
    %1942 = vmatprep.subr.mxu0 0.0
    %1943 = vmatpush1.msra.mxu0 0.0
    %1944 = vmatprep.subr.mxu0 0.0
    %1945 = vmatpush1.msra.mxu0 0.0
    %1946 = vmatprep.subr.mxu0 0.0
    %1947 = vmatpush1.msra.mxu0 %v1906
    %1948 = vmatprep.subr.mxu0 0.0
    %1949 = vmatpush1.msra.mxu0 %v1905
    %1950 = vmatprep.subr.mxu0 0.0
    %1951 = vmatpush1.msra.mxu0 %v1904
    %1952 = vmatprep.subr.mxu0 0.0
    %1953 = vmatpush1.msra.mxu0 %v1903
    %1954 = vmatprep.subr.mxu0 0.0
    %1955 = vmatpush2.msra.mxu0 0.0
    %1956 = vmatprep.subr.mxu0 0.0
    %1957 = vmatpush2.msra.mxu0 0.0
    %1958 = vmatprep.subr.mxu0 0.0
    %1959 = vmatpush2.msra.mxu0 0.0
    %1960 = vmatprep.subr.mxu0 0.0
    %1961 = vmatpush2.msra.mxu0 0.0
    %1962 = vmatprep.subr.mxu0 0.0
    %1963 = vmatpush2.msra.mxu0 0.0
    %1964 = vmatprep.subr.mxu0 0.0
    %1965 = vmatpush2.msra.mxu0 0.0
    %1966 = vmatprep.subr.mxu0 0.0
    %1967 = vmatpush2.msra.mxu0 0.0
    %1968 = vmatprep.subr.mxu0 0.0
    %1969 = vmatpush2.msra.mxu0 0.0
    %1970 = vmatprep.subr.mxu0 0.0
    %1971 = vmatpush2.msra.mxu0 0.0
    %1972 = vmatprep.subr.mxu0 0.0
    %1973 = vmatpush2.msra.mxu0 0.0
    %1974 = vmatprep.subr.mxu0 0.0
    %1975 = vmatpush2.msra.mxu0 0.0
    %1976 = vmatprep.subr.mxu0 0.0
    %1977 = vmatpush2.msra.mxu0 0.0
    %1978 = vmatprep.subr.mxu0 0.0
    %1979 = vmatpush2.msra.mxu0 0.0
    %1980 = vmatprep.subr.mxu0 0.0
    %1981 = vmatpush2.msra.mxu0 0.0
    %1982 = vmatprep.subr.mxu0 0.0
    %1983 = vmatpush2.msra.mxu0 0.0
    %1984 = vmatprep.subr.mxu0 0.0
    %1985 = vmatpush2.msra.mxu0 0.0
    %1986 = vmatprep.mubr.f32.mxu0 0.0
    %1987 = vmatmul.mubr.f32.gmra.mxu0 %v1465
    %v1988 = vpop.f32.mrf.mxu0
    %v1989 = vadd.f32 %v1921, %v1988
    %v1990 = vpop.f32.mrf.mxu0
    %1991 = vmatprep.mubr.f32.mxu0 0.0
    %1992 = vmatmul.mubr.f32.gmra.mxu0 %v1468
    %v1993 = vpop.f32.mrf.mxu0
    %v1994 = vadd.f32 %v1921, %v1993
    %v1995 = vpop.f32.mrf.mxu0
    %1996 = vdwg.mxu0
    %v1997 = vld [vmem:[%s6 + $0x13] sm:$0x1]
    %v1998 = vlaneseq
    %v1999 = vshrl.u32 %v1998, 7
    %v2000 = vsub.s32 0, %v1999
    %v2001 = vrot.slane %v1997, %v2000
    %2002 = vmatprep.subr.mxu0 0.0
    %2003 = vmatpush1.msra.mxu0 0.0
    %2004 = vmatprep.subr.mxu0 0.0
    %2005 = vmatpush1.msra.mxu0 0.0
    %2006 = vmatprep.subr.mxu0 0.0
    %2007 = vmatpush1.msra.mxu0 0.0
    %2008 = vmatprep.subr.mxu0 0.0
    %2009 = vmatpush1.msra.mxu0 0.0
    %2010 = vmatprep.subr.mxu0 0.0
    %2011 = vmatpush1.msra.mxu0 0.0
    %2012 = vmatprep.subr.mxu0 0.0
    %2013 = vmatpush1.msra.mxu0 0.0
    %2014 = vmatprep.subr.mxu0 0.0
    %2015 = vmatpush1.msra.mxu0 0.0
    %2016 = vmatprep.subr.mxu0 0.0
    %2017 = vmatpush1.msra.mxu0 0.0
    %2018 = vmatprep.subr.mxu0 0.0
    %2019 = vmatpush1.msra.mxu0 0.0
    %2020 = vmatprep.subr.mxu0 0.0
    %2021 = vmatpush1.msra.mxu0 0.0
    %2022 = vmatprep.subr.mxu0 0.0
    %2023 = vmatpush1.msra.mxu0 0.0
    %2024 = vmatprep.subr.mxu0 0.0
    %2025 = vmatpush1.msra.mxu0 0.0
    %2026 = vmatprep.subr.mxu0 0.0
    %2027 = vmatpush1.msra.mxu0 %v1911
    %2028 = vmatprep.subr.mxu0 0.0
    %2029 = vmatpush1.msra.mxu0 %v1910
    %2030 = vmatprep.subr.mxu0 0.0
    %2031 = vmatpush1.msra.mxu0 %v1909
    %2032 = vmatprep.subr.mxu0 0.0
    %2033 = vmatpush1.msra.mxu0 %v1908
    %2034 = vmatprep.subr.mxu0 0.0
    %2035 = vmatpush2.msra.mxu0 0.0
    %2036 = vmatprep.subr.mxu0 0.0
    %2037 = vmatpush2.msra.mxu0 0.0
    %2038 = vmatprep.subr.mxu0 0.0
    %2039 = vmatpush2.msra.mxu0 0.0
    %2040 = vmatprep.subr.mxu0 0.0
    %2041 = vmatpush2.msra.mxu0 0.0
    %2042 = vmatprep.subr.mxu0 0.0
    %2043 = vmatpush2.msra.mxu0 0.0
    %2044 = vmatprep.subr.mxu0 0.0
    %2045 = vmatpush2.msra.mxu0 0.0
    %2046 = vmatprep.subr.mxu0 0.0
    %2047 = vmatpush2.msra.mxu0 0.0
    %2048 = vmatprep.subr.mxu0 0.0
    %2049 = vmatpush2.msra.mxu0 0.0
    %2050 = vmatprep.subr.mxu0 0.0
    %2051 = vmatpush2.msra.mxu0 0.0
    %2052 = vmatprep.subr.mxu0 0.0
    %2053 = vmatpush2.msra.mxu0 0.0
    %2054 = vmatprep.subr.mxu0 0.0
    %2055 = vmatpush2.msra.mxu0 0.0
    %2056 = vmatprep.subr.mxu0 0.0
    %2057 = vmatpush2.msra.mxu0 0.0
    %2058 = vmatprep.subr.mxu0 0.0
    %2059 = vmatpush2.msra.mxu0 0.0
    %2060 = vmatprep.subr.mxu0 0.0
    %2061 = vmatpush2.msra.mxu0 0.0
    %2062 = vmatprep.subr.mxu0 0.0
    %2063 = vmatpush2.msra.mxu0 0.0
    %2064 = vmatprep.subr.mxu0 0.0
    %2065 = vmatpush2.msra.mxu0 0.0
    %2066 = vmatprep.mubr.f32.mxu0 0.0
    %2067 = vmatmul.mubr.f32.gmra.mxu0 %v1465
    %v2068 = vpop.f32.mrf.mxu0
    %v2069 = vadd.f32 %v2001, %v2068
    %v2070 = vpop.f32.mrf.mxu0
    %2071 = vmatprep.mubr.f32.mxu0 0.0
    %2072 = vmatmul.mubr.f32.gmra.mxu0 %v1468
    %v2073 = vpop.f32.mrf.mxu0
    %v2074 = vadd.f32 %v2001, %v2073
    %v2075 = vpop.f32.mrf.mxu0
    %2076 = vdwg.mxu0
    %v2077 = vld [vmem:[%s6 + $0x14] sm:$0x1]
    %v2078 = vlaneseq
    %v2079 = vshrl.u32 %v2078, 7
    %v2080 = vsub.s32 0, %v2079
    %v2081 = vrot.slane %v2077, %v2080
    %2082 = vmatprep.subr.mxu0 0.0
    %2083 = vmatpush1.msra.mxu0 0.0
    %2084 = vmatprep.subr.mxu0 0.0
    %2085 = vmatpush1.msra.mxu0 0.0
    %2086 = vmatprep.subr.mxu0 0.0
    %2087 = vmatpush1.msra.mxu0 0.0
    %2088 = vmatprep.subr.mxu0 0.0
    %2089 = vmatpush1.msra.mxu0 0.0
    %2090 = vmatprep.subr.mxu0 0.0
    %2091 = vmatpush1.msra.mxu0 0.0
    %2092 = vmatprep.subr.mxu0 0.0
    %2093 = vmatpush1.msra.mxu0 0.0
    %2094 = vmatprep.subr.mxu0 0.0
    %2095 = vmatpush1.msra.mxu0 0.0
    %2096 = vmatprep.subr.mxu0 0.0
    %2097 = vmatpush1.msra.mxu0 0.0
    %2098 = vmatprep.subr.mxu0 0.0
    %2099 = vmatpush1.msra.mxu0 0.0
    %2100 = vmatprep.subr.mxu0 0.0
    %2101 = vmatpush1.msra.mxu0 0.0
    %2102 = vmatprep.subr.mxu0 0.0
    %2103 = vmatpush1.msra.mxu0 0.0
    %2104 = vmatprep.subr.mxu0 0.0
    %2105 = vmatpush1.msra.mxu0 0.0
    %2106 = vmatprep.subr.mxu0 0.0
    %2107 = vmatpush1.msra.mxu0 %v1916
    %2108 = vmatprep.subr.mxu0 0.0
    %2109 = vmatpush1.msra.mxu0 %v1915
    %2110 = vmatprep.subr.mxu0 0.0
    %2111 = vmatpush1.msra.mxu0 %v1914
    %2112 = vmatprep.subr.mxu0 0.0
    %2113 = vmatpush1.msra.mxu0 %v1913
    %2114 = vmatprep.subr.mxu0 0.0
    %2115 = vmatpush2.msra.mxu0 0.0
    %2116 = vmatprep.subr.mxu0 0.0
    %2117 = vmatpush2.msra.mxu0 0.0
    %2118 = vmatprep.subr.mxu0 0.0
    %2119 = vmatpush2.msra.mxu0 0.0
    %2120 = vmatprep.subr.mxu0 0.0
    %2121 = vmatpush2.msra.mxu0 0.0
    %2122 = vmatprep.subr.mxu0 0.0
    %2123 = vmatpush2.msra.mxu0 0.0
    %2124 = vmatprep.subr.mxu0 0.0
    %2125 = vmatpush2.msra.mxu0 0.0
    %2126 = vmatprep.subr.mxu0 0.0
    %2127 = vmatpush2.msra.mxu0 0.0
    %2128 = vmatprep.subr.mxu0 0.0
    %2129 = vmatpush2.msra.mxu0 0.0
    %2130 = vmatprep.subr.mxu0 0.0
    %2131 = vmatpush2.msra.mxu0 0.0
    %2132 = vmatprep.subr.mxu0 0.0
    %2133 = vmatpush2.msra.mxu0 0.0
    %2134 = vmatprep.subr.mxu0 0.0
    %2135 = vmatpush2.msra.mxu0 0.0
    %2136 = vmatprep.subr.mxu0 0.0
    %2137 = vmatpush2.msra.mxu0 0.0
    %2138 = vmatprep.subr.mxu0 0.0
    %2139 = vmatpush2.msra.mxu0 0.0
    %2140 = vmatprep.subr.mxu0 0.0
    %2141 = vmatpush2.msra.mxu0 0.0
    %2142 = vmatprep.subr.mxu0 0.0
    %2143 = vmatpush2.msra.mxu0 0.0
    %2144 = vmatprep.subr.mxu0 0.0
    %2145 = vmatpush2.msra.mxu0 0.0
    %2146 = vmatprep.mubr.f32.mxu0 0.0
    %2147 = vmatmul.mubr.f32.gmra.mxu0 %v1465
    %v2148 = vpop.f32.mrf.mxu0
    %v2149 = vadd.f32 %v2081, %v2148
    %v2150 = vpop.f32.mrf.mxu0
    %2151 = vmatprep.mubr.f32.mxu0 0.0
    %2152 = vmatmul.mubr.f32.gmra.mxu0 %v1468
    %v2153 = vpop.f32.mrf.mxu0
    %v2154 = vadd.f32 %v2081, %v2153
    %v2155 = vpop.f32.mrf.mxu0
    %2156 = vdwg.mxu0
    %v2158 = vsel %vm339, %v1989, 0
    %v2161 = vsel %vm339, %v1994, 0
    %v2164 = vsel %vm339, %v2069, 0
    %v2167 = vsel %vm339, %v2074, 0
    %2169 = vmatprep.subr.mxu0 0.0
    %2170 = vmatpush1.xpose.msra.mxu0 0.0
    %2171 = vmatprep.subr.mxu0 0.0
    %2172 = vmatpush1.xpose.msra.mxu0 0.0
    %2173 = vmatprep.subr.mxu0 0.0
    %2174 = vmatpush1.xpose.msra.mxu0 0.0
    %2175 = vmatprep.subr.mxu0 0.0
    %2176 = vmatpush1.xpose.msra.mxu0 0.0
    %2177 = vmatprep.subr.mxu0 0.0
    %2178 = vmatpush1.xpose.msra.mxu0 0.0
    %2179 = vmatprep.subr.mxu0 0.0
    %2180 = vmatpush1.xpose.msra.mxu0 0.0
    %2181 = vmatprep.subr.mxu0 0.0
    %2182 = vmatpush1.xpose.msra.mxu0 0.0
    %2183 = vmatprep.subr.mxu0 0.0
    %2184 = vmatpush1.xpose.msra.mxu0 0.0
    %2185 = vmatprep.subr.mxu0 0.0
    %2186 = vmatpush1.xpose.msra.mxu0 0.0
    %2187 = vmatprep.subr.mxu0 0.0
    %2188 = vmatpush1.xpose.msra.mxu0 0.0
    %2189 = vmatprep.subr.mxu0 0.0
    %2190 = vmatpush1.xpose.msra.mxu0 0.0
    %2191 = vmatprep.subr.mxu0 0.0
    %2192 = vmatpush1.xpose.msra.mxu0 0.0
    %2193 = vmatprep.subr.mxu0 0.0
    %2194 = vmatpush1.xpose.msra.mxu0 0.0
    %2195 = vmatprep.subr.mxu0 0.0
    %2196 = vmatpush1.xpose.msra.mxu0 0.0
    %2197 = vmatprep.subr.mxu0 0.0
    %2198 = vmatpush1.xpose.msra.mxu0 %v2167
    %2199 = vmatprep.subr.mxu0 0.0
    %2200 = vmatpush1.xpose.msra.mxu0 %v2164
    %2201 = vmatprep.subr.mxu0 0.0
    %2202 = vmatpush2.xpose.msra.mxu0 0.0
    %2203 = vmatprep.subr.mxu0 0.0
    %2204 = vmatpush2.xpose.msra.mxu0 0.0
    %2205 = vmatprep.subr.mxu0 0.0
    %2206 = vmatpush2.xpose.msra.mxu0 0.0
    %2207 = vmatprep.subr.mxu0 0.0
    %2208 = vmatpush2.xpose.msra.mxu0 0.0
    %2209 = vmatprep.subr.mxu0 0.0
    %2210 = vmatpush2.xpose.msra.mxu0 0.0
    %2211 = vmatprep.subr.mxu0 0.0
    %2212 = vmatpush2.xpose.msra.mxu0 0.0
    %2213 = vmatprep.subr.mxu0 0.0
    %2214 = vmatpush2.xpose.msra.mxu0 0.0
    %2215 = vmatprep.subr.mxu0 0.0
    %2216 = vmatpush2.xpose.msra.mxu0 0.0
    %2217 = vmatprep.subr.mxu0 0.0
    %2218 = vmatpush2.xpose.msra.mxu0 0.0
    %2219 = vmatprep.subr.mxu0 0.0
    %2220 = vmatpush2.xpose.msra.mxu0 0.0
    %2221 = vmatprep.subr.mxu0 0.0
    %2222 = vmatpush2.xpose.msra.mxu0 0.0
    %2223 = vmatprep.subr.mxu0 0.0
    %2224 = vmatpush2.xpose.msra.mxu0 0.0
    %2225 = vmatprep.subr.mxu0 0.0
    %2226 = vmatpush2.xpose.msra.mxu0 0.0
    %2227 = vmatprep.subr.mxu0 0.0
    %2228 = vmatpush2.xpose.msra.mxu0 0.0
    %2229 = vmatprep.subr.mxu0 0.0
    %2230 = vmatpush2.xpose.msra.mxu0 0.0
    %2231 = vmatprep.subr.mxu0 0.0
    %2232 = vmatpush2.xpose.msra.mxu0 0.0
    %2233 = vmatprep.mubr.f32.mxu0 0.0
    %2234 = vmatmul.mubr.f32.gmra.mxu0 %v2158
    %v2235 = vpop.f32.mrf.mxu0
    %v2236 = vadd.f32 0.0, %v2235
    %v2237 = vpop.f32.mrf.mxu0
    %2238 = vmatprep.mubr.f32.mxu0 0.0
    %2239 = vmatmul.mubr.f32.gmra.mxu0 %v2161
    %v2240 = vpop.f32.mrf.mxu0
    %v2241 = vadd.f32 0.0, %v2240
    %v2242 = vpop.f32.mrf.mxu0
    %2243 = vdwg.mxu0
    %v2244 = vmul.f32 %v2236, 0.25
    %v2245 = vmul.f32 %v2241, 0.25
    %v2246 = vadd.f32 %v2244, %v33
    %v2247 = vadd.f32 %v2245, %v34
    %v2248 = vsel %vm339, %v2246, -inf
    %2249 = vmax.xlane.f32.xlu0 %v2248
    %v2250 = vpop.xlane.xlu0 %2249
    %v2251 = vsel %vm339, %v2247, -inf
    %2252 = vmax.xlane.f32.xlu0 %v2251
    %v2253 = vpop.xlane.xlu0 %2252
    %v2254 = vsub.f32 %v2246, %v2250
    %v2255 = vsub.f32 %v2247, %v2253
    %v2256 = vmul.f32 %v2254, 1.442695
    %v2257 = vpow.pop %v2256
    %v2258 = vmul.f32 %v2255, 1.442695
    %v2259 = vpow.pop %v2258
    %v2260 = vsel %vm339, %v2257, 0.0
    %2261 = vadd.xlane.f32.xlu0 %v2260
    %v2262 = vpop.xlane.xlu0 %2261
    %v2263 = vsel %vm339, %v2259, 0.0
    %2264 = vadd.xlane.f32.xlu0 %v2263
    %v2265 = vpop.xlane.xlu0 %2264
    %v2266 = vrcp.pop %v2262
    %v2267 = vrcp.pop %v2265
    %v2268 = vmul.f32 %v2257, %v2266
    %v2269 = vmul.f32 %v2259, %v2267
    %v2271 = vsel %vm339, %v2268, 0
    %v2274 = vsel %vm339, %v2269, 0
    %2276 = vmatprep.subr.mxu0 0.0
    %2277 = vmatpush1.msra.mxu0 0.0
    %2278 = vmatprep.subr.mxu0 0.0
    %2279 = vmatpush1.msra.mxu0 0.0
    %2280 = vmatprep.subr.mxu0 0.0
    %2281 = vmatpush1.msra.mxu0 0.0
    %2282 = vmatprep.subr.mxu0 0.0
    %2283 = vmatpush1.msra.mxu0 0.0
    %2284 = vmatprep.subr.mxu0 0.0
    %2285 = vmatpush1.msra.mxu0 0.0
    %2286 = vmatprep.subr.mxu0 0.0
    %2287 = vmatpush1.msra.mxu0 0.0
    %2288 = vmatprep.subr.mxu0 0.0
    %2289 = vmatpush1.msra.mxu0 0.0
    %2290 = vmatprep.subr.mxu0 0.0
    %2291 = vmatpush1.msra.mxu0 0.0
    %2292 = vmatprep.subr.mxu0 0.0
    %2293 = vmatpush1.msra.mxu0 0.0
    %2294 = vmatprep.subr.mxu0 0.0
    %2295 = vmatpush1.msra.mxu0 0.0
    %2296 = vmatprep.subr.mxu0 0.0
    %2297 = vmatpush1.msra.mxu0 0.0
    %2298 = vmatprep.subr.mxu0 0.0
    %2299 = vmatpush1.msra.mxu0 0.0
    %2300 = vmatprep.subr.mxu0 0.0
    %2301 = vmatpush1.msra.mxu0 0.0
    %2302 = vmatprep.subr.mxu0 0.0
    %2303 = vmatpush1.msra.mxu0 0.0
    %2304 = vmatprep.subr.mxu0 0.0
    %2305 = vmatpush1.msra.mxu0 %v2154
    %2306 = vmatprep.subr.mxu0 0.0
    %2307 = vmatpush1.msra.mxu0 %v2149
    %2308 = vmatprep.subr.mxu0 0.0
    %2309 = vmatpush2.msra.mxu0 0.0
    %2310 = vmatprep.subr.mxu0 0.0
    %2311 = vmatpush2.msra.mxu0 0.0
    %2312 = vmatprep.subr.mxu0 0.0
    %2313 = vmatpush2.msra.mxu0 0.0
    %2314 = vmatprep.subr.mxu0 0.0
    %2315 = vmatpush2.msra.mxu0 0.0
    %2316 = vmatprep.subr.mxu0 0.0
    %2317 = vmatpush2.msra.mxu0 0.0
    %2318 = vmatprep.subr.mxu0 0.0
    %2319 = vmatpush2.msra.mxu0 0.0
    %2320 = vmatprep.subr.mxu0 0.0
    %2321 = vmatpush2.msra.mxu0 0.0
    %2322 = vmatprep.subr.mxu0 0.0
    %2323 = vmatpush2.msra.mxu0 0.0
    %2324 = vmatprep.subr.mxu0 0.0
    %2325 = vmatpush2.msra.mxu0 0.0
    %2326 = vmatprep.subr.mxu0 0.0
    %2327 = vmatpush2.msra.mxu0 0.0
    %2328 = vmatprep.subr.mxu0 0.0
    %2329 = vmatpush2.msra.mxu0 0.0
    %2330 = vmatprep.subr.mxu0 0.0
    %2331 = vmatpush2.msra.mxu0 0.0
    %2332 = vmatprep.subr.mxu0 0.0
    %2333 = vmatpush2.msra.mxu0 0.0
    %2334 = vmatprep.subr.mxu0 0.0
    %2335 = vmatpush2.msra.mxu0 0.0
    %2336 = vmatprep.subr.mxu0 0.0
    %2337 = vmatpush2.msra.mxu0 0.0
    %2338 = vmatprep.subr.mxu0 0.0
    %2339 = vmatpush2.msra.mxu0 0.0
    %2340 = vmatprep.mubr.f32.mxu0 0.0
    %2341 = vmatmul.mubr.f32.gmra.mxu0 %v2271
    %v2342 = vpop.f32.mrf.mxu0
    %v2343 = vadd.f32 0.0, %v2342
    %v2344 = vpop.f32.mrf.mxu0
    %2345 = vmatprep.mubr.f32.mxu0 0.0
    %2346 = vmatmul.mubr.f32.gmra.mxu0 %v2274
    %v2347 = vpop.f32.mrf.mxu0
    %v2348 = vadd.f32 0.0, %v2347
    %v2349 = vpop.f32.mrf.mxu0
    %2350 = vdwg.mxu0
    %s2351 = scalar_lea.vmem %s3, 48
    %v2352 = vld [vmem:[%s2351] sm:$0xff]
    %v2353 = vld [vmem:[%s2351 + $0x8] sm:$0xff]
    %v2355 = vsel %vm339, %v2343, 0
    %v2358 = vsel %vm339, %v2348, 0
    %2360 = vmatprep.subr.mxu0 0.0
    %2361 = vmatpush1.msra.mxu0 0.0
    %2362 = vmatprep.subr.mxu0 0.0
    %2363 = vmatpush1.msra.mxu0 0.0
    %2364 = vmatprep.subr.mxu0 0.0
    %2365 = vmatpush1.msra.mxu0 0.0
    %2366 = vmatprep.subr.mxu0 0.0
    %2367 = vmatpush1.msra.mxu0 0.0
    %2368 = vmatprep.subr.mxu0 0.0
    %2369 = vmatpush1.msra.mxu0 0.0
    %2370 = vmatprep.subr.mxu0 0.0
    %2371 = vmatpush1.msra.mxu0 0.0
    %2372 = vmatprep.subr.mxu0 0.0
    %2373 = vmatpush1.msra.mxu0 0.0
    %2374 = vmatprep.subr.mxu0 0.0
    %2375 = vmatpush1.msra.mxu0 0.0
    %2376 = vmatprep.subr.mxu0 0.0
    %2377 = vmatpush1.msra.mxu0 0.0
    %2378 = vmatprep.subr.mxu0 0.0
    %2379 = vmatpush1.msra.mxu0 0.0
    %2380 = vmatprep.subr.mxu0 0.0
    %2381 = vmatpush1.msra.mxu0 0.0
    %2382 = vmatprep.subr.mxu0 0.0
    %2383 = vmatpush1.msra.mxu0 0.0
    %2384 = vmatprep.subr.mxu0 0.0
    %2385 = vmatpush1.msra.mxu0 0.0
    %2386 = vmatprep.subr.mxu0 0.0
    %2387 = vmatpush1.msra.mxu0 0.0
    %2388 = vmatprep.subr.mxu0 0.0
    %2389 = vmatpush1.msra.mxu0 %v2353
    %2390 = vmatprep.subr.mxu0 0.0
    %2391 = vmatpush1.msra.mxu0 %v2352
    %2392 = vmatprep.subr.mxu0 0.0
    %2393 = vmatpush2.msra.mxu0 0.0
    %2394 = vmatprep.subr.mxu0 0.0
    %2395 = vmatpush2.msra.mxu0 0.0
    %2396 = vmatprep.subr.mxu0 0.0
    %2397 = vmatpush2.msra.mxu0 0.0
    %2398 = vmatprep.subr.mxu0 0.0
    %2399 = vmatpush2.msra.mxu0 0.0
    %2400 = vmatprep.subr.mxu0 0.0
    %2401 = vmatpush2.msra.mxu0 0.0
    %2402 = vmatprep.subr.mxu0 0.0
    %2403 = vmatpush2.msra.mxu0 0.0
    %2404 = vmatprep.subr.mxu0 0.0
    %2405 = vmatpush2.msra.mxu0 0.0
    %2406 = vmatprep.subr.mxu0 0.0
    %2407 = vmatpush2.msra.mxu0 0.0
    %2408 = vmatprep.subr.mxu0 0.0
    %2409 = vmatpush2.msra.mxu0 0.0
    %2410 = vmatprep.subr.mxu0 0.0
    %2411 = vmatpush2.msra.mxu0 0.0
    %2412 = vmatprep.subr.mxu0 0.0
    %2413 = vmatpush2.msra.mxu0 0.0
    %2414 = vmatprep.subr.mxu0 0.0
    %2415 = vmatpush2.msra.mxu0 0.0
    %2416 = vmatprep.subr.mxu0 0.0
    %2417 = vmatpush2.msra.mxu0 0.0
    %2418 = vmatprep.subr.mxu0 0.0
    %2419 = vmatpush2.msra.mxu0 0.0
    %2420 = vmatprep.subr.mxu0 0.0
    %2421 = vmatpush2.msra.mxu0 0.0
    %2422 = vmatprep.subr.mxu0 0.0
    %2423 = vmatpush2.msra.mxu0 0.0
    %2424 = vmatprep.mubr.f32.mxu0 0.0
    %2425 = vmatmul.mubr.f32.gmra.mxu0 %v2355
    %v2426 = vpop.f32.mrf.mxu0
    %v2427 = vadd.f32 0.0, %v2426
    %v2428 = vpop.f32.mrf.mxu0
    %2429 = vmatprep.mubr.f32.mxu0 0.0
    %2430 = vmatmul.mubr.f32.gmra.mxu0 %v2358
    %v2431 = vpop.f32.mrf.mxu0
    %v2432 = vadd.f32 0.0, %v2431
    %v2433 = vpop.f32.mrf.mxu0
    %2434 = vdwg.mxu0
    %v2436 = vsel %vm339, %v1891, 0
    %v2439 = vsel %vm339, %v1896, 0
    %2441 = vmatprep.subr.mxu0 0.0
    %2442 = vmatpush1.msra.mxu0 0.0
    %2443 = vmatprep.subr.mxu0 0.0
    %2444 = vmatpush1.msra.mxu0 0.0
    %2445 = vmatprep.subr.mxu0 0.0
    %2446 = vmatpush1.msra.mxu0 0.0
    %2447 = vmatprep.subr.mxu0 0.0
    %2448 = vmatpush1.msra.mxu0 0.0
    %2449 = vmatprep.subr.mxu0 0.0
    %2450 = vmatpush1.msra.mxu0 0.0
    %2451 = vmatprep.subr.mxu0 0.0
    %2452 = vmatpush1.msra.mxu0 0.0
    %2453 = vmatprep.subr.mxu0 0.0
    %2454 = vmatpush1.msra.mxu0 0.0
    %2455 = vmatprep.subr.mxu0 0.0
    %2456 = vmatpush1.msra.mxu0 0.0
    %2457 = vmatprep.subr.mxu0 0.0
    %2458 = vmatpush1.msra.mxu0 0.0
    %2459 = vmatprep.subr.mxu0 0.0
    %2460 = vmatpush1.msra.mxu0 0.0
    %2461 = vmatprep.subr.mxu0 0.0
    %2462 = vmatpush1.msra.mxu0 0.0
    %2463 = vmatprep.subr.mxu0 0.0
    %2464 = vmatpush1.msra.mxu0 0.0
    %2465 = vmatprep.subr.mxu0 0.0
    %2466 = vmatpush1.msra.mxu0 0.0
    %2467 = vmatprep.subr.mxu0 0.0
    %2468 = vmatpush1.msra.mxu0 0.0
    %2469 = vmatprep.subr.mxu0 0.0
    %2470 = vmatpush1.msra.mxu0 %v1901
    %2471 = vmatprep.subr.mxu0 0.0
    %2472 = vmatpush1.msra.mxu0 %v1900
    %2473 = vmatprep.subr.mxu0 0.0
    %2474 = vmatpush2.msra.mxu0 0.0
    %2475 = vmatprep.subr.mxu0 0.0
    %2476 = vmatpush2.msra.mxu0 0.0
    %2477 = vmatprep.subr.mxu0 0.0
    %2478 = vmatpush2.msra.mxu0 0.0
    %2479 = vmatprep.subr.mxu0 0.0
    %2480 = vmatpush2.msra.mxu0 0.0
    %2481 = vmatprep.subr.mxu0 0.0
    %2482 = vmatpush2.msra.mxu0 0.0
    %2483 = vmatprep.subr.mxu0 0.0
    %2484 = vmatpush2.msra.mxu0 0.0
    %2485 = vmatprep.subr.mxu0 0.0
    %2486 = vmatpush2.msra.mxu0 0.0
    %2487 = vmatprep.subr.mxu0 0.0
    %2488 = vmatpush2.msra.mxu0 0.0
    %2489 = vmatprep.subr.mxu0 0.0
    %2490 = vmatpush2.msra.mxu0 0.0
    %2491 = vmatprep.subr.mxu0 0.0
    %2492 = vmatpush2.msra.mxu0 0.0
    %2493 = vmatprep.subr.mxu0 0.0
    %2494 = vmatpush2.msra.mxu0 0.0
    %2495 = vmatprep.subr.mxu0 0.0
    %2496 = vmatpush2.msra.mxu0 0.0
    %2497 = vmatprep.subr.mxu0 0.0
    %2498 = vmatpush2.msra.mxu0 0.0
    %2499 = vmatprep.subr.mxu0 0.0
    %2500 = vmatpush2.msra.mxu0 0.0
    %2501 = vmatprep.subr.mxu0 0.0
    %2502 = vmatpush2.msra.mxu0 0.0
    %2503 = vmatprep.subr.mxu0 0.0
    %2504 = vmatpush2.msra.mxu0 0.0
    %2505 = vmatprep.mubr.f32.mxu0 0.0
    %2506 = vmatmul.mubr.f32.gmra.mxu0 %v2436
    %v2507 = vpop.f32.mrf.mxu0
    %v2508 = vadd.f32 %v2427, %v2507
    %v2509 = vpop.f32.mrf.mxu0
    %2510 = vmatprep.mubr.f32.mxu0 0.0
    %2511 = vmatmul.mubr.f32.gmra.mxu0 %v2439
    %v2512 = vpop.f32.mrf.mxu0
    %v2513 = vadd.f32 %v2432, %v2512
    %v2514 = vpop.f32.mrf.mxu0
    %2515 = vdwg.mxu0
    %v2516 = vld [vmem:[%s6 + $0x15] sm:$0x1]
    %v2517 = vlaneseq
    %v2518 = vshrl.u32 %v2517, 7
    %v2519 = vsub.s32 0, %v2518
    %v2520 = vrot.slane %v2516, %v2519
    %v2521 = vadd.f32 %v2508, %v2520
    %v2522 = vadd.f32 %v2513, %v2520
    %v2523 = vadd.f32 %v2521, %v1442
    %v2524 = vadd.f32 %v2522, %v1443
    %v2525 = vld [vmem:[%s6 + $0x16] sm:$0x1]
    %v2526 = vld [vmem:[%s6 + $0x17] sm:$0x1]
    %v2527 = vsel %vm39, %v2523, 0.0
    %2528 = vadd.xlane.f32.xlu0 %v2527
    %v2529 = vpop.xlane.xlu0 %2528
    %v2530 = vsel %vm39, %v2524, 0.0
    %2531 = vadd.xlane.f32.xlu0 %v2530
    %v2532 = vpop.xlane.xlu0 %2531
    %v2533 = vmul.f32 %v2529, %v46
    %v2534 = vmul.f32 %v2532, %v46
    %v2535 = vsub.f32 %v2523, %v2533
    %v2536 = vsub.f32 %v2524, %v2534
    %v2537 = vmul.f32 %v2535, %v2535
    %v2538 = vmul.f32 %v2536, %v2536
    %v2539 = vsel %vm39, %v2537, 0.0
    %2540 = vadd.xlane.f32.xlu0 %v2539
    %v2541 = vpop.xlane.xlu0 %2540
    %v2542 = vsel %vm39, %v2538, 0.0
    %2543 = vadd.xlane.f32.xlu0 %v2542
    %v2544 = vpop.xlane.xlu0 %2543
    %v2545 = vmul.f32 %v2541, %v46
    %v2546 = vmul.f32 %v2544, %v46
    %v2547 = vadd.f32 %v2545, 1e-12
    %v2548 = vadd.f32 %v2546, 1e-12
    %v2549 = vrsqrt.pop %v2547
    %v2550 = vrsqrt.pop %v2548
    %v2551 = vmul.f32 %v2535, %v2549
    %v2552 = vmul.f32 %v2536, %v2550
    %v2553 = vlaneseq
    %v2554 = vshrl.u32 %v2553, 7
    %v2555 = vsub.s32 0, %v2554
    %v2556 = vrot.slane %v2525, %v2555
    %v2557 = vmul.f32 %v2551, %v2556
    %v2558 = vmul.f32 %v2552, %v2556
    %v2559 = vlaneseq
    %v2560 = vshrl.u32 %v2559, 7
    %v2561 = vsub.s32 0, %v2560
    %v2562 = vrot.slane %v2526, %v2561
    %v2563 = vadd.f32 %v2557, %v2562
    %v2564 = vadd.f32 %v2558, %v2562
    %s2565 = scalar_lea.vmem %s4, 32
    %v2566 = vld [vmem:[%s2565] sm:$0xff]
    %v2567 = vld [vmem:[%s2565 + $0x8] sm:$0xff]
    %v2568 = vld [vmem:[%s2565 + $0x10] sm:$0xff]
    %v2569 = vld [vmem:[%s2565 + $0x18] sm:$0xff]
    %v2570 = vld [vmem:[%s6 + $0x18] sm:$0x1]
    %v2571 = vlaneseq
    %v2572 = vshrl.u32 %v2571, 7
    %v2573 = vsub.s32 0, %v2572
    %v2574 = vrot.slane %v2570, %v2573
    %v2576 = vsel %vm39, %v2563, 0
    %v2579 = vsel %vm39, %v2564, 0
    %2581 = vmatprep.subr.mxu0 0.0
    %2582 = vmatpush1.msra.mxu0 0.0
    %2583 = vmatprep.subr.mxu0 0.0
    %2584 = vmatpush1.msra.mxu0 0.0
    %2585 = vmatprep.subr.mxu0 0.0
    %2586 = vmatpush1.msra.mxu0 0.0
    %2587 = vmatprep.subr.mxu0 0.0
    %2588 = vmatpush1.msra.mxu0 0.0
    %2589 = vmatprep.subr.mxu0 0.0
    %2590 = vmatpush1.msra.mxu0 0.0
    %2591 = vmatprep.subr.mxu0 0.0
    %2592 = vmatpush1.msra.mxu0 0.0
    %2593 = vmatprep.subr.mxu0 0.0
    %2594 = vmatpush1.msra.mxu0 0.0
    %2595 = vmatprep.subr.mxu0 0.0
    %2596 = vmatpush1.msra.mxu0 0.0
    %2597 = vmatprep.subr.mxu0 0.0
    %2598 = vmatpush1.msra.mxu0 0.0
    %2599 = vmatprep.subr.mxu0 0.0
    %2600 = vmatpush1.msra.mxu0 0.0
    %2601 = vmatprep.subr.mxu0 0.0
    %2602 = vmatpush1.msra.mxu0 0.0
    %2603 = vmatprep.subr.mxu0 0.0
    %2604 = vmatpush1.msra.mxu0 0.0
    %2605 = vmatprep.subr.mxu0 0.0
    %2606 = vmatpush1.msra.mxu0 %v2569
    %2607 = vmatprep.subr.mxu0 0.0
    %2608 = vmatpush1.msra.mxu0 %v2568
    %2609 = vmatprep.subr.mxu0 0.0
    %2610 = vmatpush1.msra.mxu0 %v2567
    %2611 = vmatprep.subr.mxu0 0.0
    %2612 = vmatpush1.msra.mxu0 %v2566
    %2613 = vmatprep.subr.mxu0 0.0
    %2614 = vmatpush2.msra.mxu0 0.0
    %2615 = vmatprep.subr.mxu0 0.0
    %2616 = vmatpush2.msra.mxu0 0.0
    %2617 = vmatprep.subr.mxu0 0.0
    %2618 = vmatpush2.msra.mxu0 0.0
    %2619 = vmatprep.subr.mxu0 0.0
    %2620 = vmatpush2.msra.mxu0 0.0
    %2621 = vmatprep.subr.mxu0 0.0
    %2622 = vmatpush2.msra.mxu0 0.0
    %2623 = vmatprep.subr.mxu0 0.0
    %2624 = vmatpush2.msra.mxu0 0.0
    %2625 = vmatprep.subr.mxu0 0.0
    %2626 = vmatpush2.msra.mxu0 0.0
    %2627 = vmatprep.subr.mxu0 0.0
    %2628 = vmatpush2.msra.mxu0 0.0
    %2629 = vmatprep.subr.mxu0 0.0
    %2630 = vmatpush2.msra.mxu0 0.0
    %2631 = vmatprep.subr.mxu0 0.0
    %2632 = vmatpush2.msra.mxu0 0.0
    %2633 = vmatprep.subr.mxu0 0.0
    %2634 = vmatpush2.msra.mxu0 0.0
    %2635 = vmatprep.subr.mxu0 0.0
    %2636 = vmatpush2.msra.mxu0 0.0
    %2637 = vmatprep.subr.mxu0 0.0
    %2638 = vmatpush2.msra.mxu0 0.0
    %2639 = vmatprep.subr.mxu0 0.0
    %2640 = vmatpush2.msra.mxu0 0.0
    %2641 = vmatprep.subr.mxu0 0.0
    %2642 = vmatpush2.msra.mxu0 0.0
    %2643 = vmatprep.subr.mxu0 0.0
    %2644 = vmatpush2.msra.mxu0 0.0
    %2645 = vmatprep.mubr.f32.mxu0 0.0
    %2646 = vmatmul.mubr.f32.gmra.mxu0 %v2576
    %v2647 = vpop.f32.mrf.mxu0
    %v2648 = vadd.f32 %v2574, %v2647
    %v2649 = vpop.f32.mrf.mxu0
    %2650 = vmatprep.mubr.f32.mxu0 0.0
    %2651 = vmatmul.mubr.f32.gmra.mxu0 %v2579
    %v2652 = vpop.f32.mrf.mxu0
    %v2653 = vadd.f32 %v2574, %v2652
    %v2654 = vpop.f32.mrf.mxu0
    %2655 = vdwg.mxu0
    %v2656 = vmul.f32 %v2648, %v2648
    %v2657 = vmul.f32 %v2653, %v2653
    %v2658 = vmul.f32 %v2648, %v2656
    %v2659 = vmul.f32 %v2653, %v2657
    %v2660 = vmul.f32 %v2658, 0.044715
    %v2661 = vmul.f32 %v2659, 0.044715
    %v2662 = vadd.f32 %v2648, %v2660
    %v2663 = vadd.f32 %v2653, %v2661
    %v2664 = vmul.f32 %v2662, 0.7978846
    %v2665 = vmul.f32 %v2663, 0.7978846
    %v2666 = vtanh.pop %v2664
    %v2667 = vtanh.pop %v2665
    %v2668 = vadd.f32 %v2666, 1.0
    %v2669 = vadd.f32 %v2667, 1.0
    %v2670 = vmul.f32 %v2668, 0.5
    %v2671 = vmul.f32 %v2669, 0.5
    %v2672 = vmul.f32 %v2648, %v2670
    %v2673 = vmul.f32 %v2653, %v2671
    %s2674 = scalar_lea.vmem %s5, 64
    %v2675 = vld [vmem:[%s2674] sm:$0xff]
    %v2676 = vld [vmem:[%s2674 + $0x8] sm:$0xff]
    %v2677 = vld [vmem:[%s2674 + $0x10] sm:$0xff]
    %v2678 = vld [vmem:[%s2674 + $0x18] sm:$0xff]
    %v2679 = vld [vmem:[%s2674 + $0x20] sm:$0xff]
    %v2680 = vld [vmem:[%s2674 + $0x28] sm:$0xff]
    %v2681 = vld [vmem:[%s2674 + $0x30] sm:$0xff]
    %v2682 = vld [vmem:[%s2674 + $0x38] sm:$0xff]
    %v2683 = vld [vmem:[%s6 + $0x19] sm:$0x1]
    %v2684 = vlaneseq
    %v2685 = vshrl.u32 %v2684, 7
    %v2686 = vsub.s32 0, %v2685
    %v2687 = vrot.slane %v2683, %v2686
    %v2689 = vsel %vm1320, %v2672, 0
    %v2692 = vsel %vm1320, %v2673, 0
    %2694 = vmatprep.subr.mxu0 0.0
    %2695 = vmatpush1.msra.mxu0 0.0
    %2696 = vmatprep.subr.mxu0 0.0
    %2697 = vmatpush1.msra.mxu0 0.0
    %2698 = vmatprep.subr.mxu0 0.0
    %2699 = vmatpush1.msra.mxu0 0.0
    %2700 = vmatprep.subr.mxu0 0.0
    %2701 = vmatpush1.msra.mxu0 0.0
    %2702 = vmatprep.subr.mxu0 0.0
    %2703 = vmatpush1.msra.mxu0 0.0
    %2704 = vmatprep.subr.mxu0 0.0
    %2705 = vmatpush1.msra.mxu0 0.0
    %2706 = vmatprep.subr.mxu0 0.0
    %2707 = vmatpush1.msra.mxu0 0.0
    %2708 = vmatprep.subr.mxu0 0.0
    %2709 = vmatpush1.msra.mxu0 0.0
    %2710 = vmatprep.subr.mxu0 0.0
    %2711 = vmatpush1.msra.mxu0 %v2682
    %2712 = vmatprep.subr.mxu0 0.0
    %2713 = vmatpush1.msra.mxu0 %v2681
    %2714 = vmatprep.subr.mxu0 0.0
    %2715 = vmatpush1.msra.mxu0 %v2680
    %2716 = vmatprep.subr.mxu0 0.0
    %2717 = vmatpush1.msra.mxu0 %v2679
    %2718 = vmatprep.subr.mxu0 0.0
    %2719 = vmatpush1.msra.mxu0 %v2678
    %2720 = vmatprep.subr.mxu0 0.0
    %2721 = vmatpush1.msra.mxu0 %v2677
    %2722 = vmatprep.subr.mxu0 0.0
    %2723 = vmatpush1.msra.mxu0 %v2676
    %2724 = vmatprep.subr.mxu0 0.0
    %2725 = vmatpush1.msra.mxu0 %v2675
    %2726 = vmatprep.subr.mxu0 0.0
    %2727 = vmatpush2.msra.mxu0 0.0
    %2728 = vmatprep.subr.mxu0 0.0
    %2729 = vmatpush2.msra.mxu0 0.0
    %2730 = vmatprep.subr.mxu0 0.0
    %2731 = vmatpush2.msra.mxu0 0.0
    %2732 = vmatprep.subr.mxu0 0.0
    %2733 = vmatpush2.msra.mxu0 0.0
    %2734 = vmatprep.subr.mxu0 0.0
    %2735 = vmatpush2.msra.mxu0 0.0
    %2736 = vmatprep.subr.mxu0 0.0
    %2737 = vmatpush2.msra.mxu0 0.0
    %2738 = vmatprep.subr.mxu0 0.0
    %2739 = vmatpush2.msra.mxu0 0.0
    %2740 = vmatprep.subr.mxu0 0.0
    %2741 = vmatpush2.msra.mxu0 0.0
    %2742 = vmatprep.subr.mxu0 0.0
    %2743 = vmatpush2.msra.mxu0 0.0
    %2744 = vmatprep.subr.mxu0 0.0
    %2745 = vmatpush2.msra.mxu0 0.0
    %2746 = vmatprep.subr.mxu0 0.0
    %2747 = vmatpush2.msra.mxu0 0.0
    %2748 = vmatprep.subr.mxu0 0.0
    %2749 = vmatpush2.msra.mxu0 0.0
    %2750 = vmatprep.subr.mxu0 0.0
    %2751 = vmatpush2.msra.mxu0 0.0
    %2752 = vmatprep.subr.mxu0 0.0
    %2753 = vmatpush2.msra.mxu0 0.0
    %2754 = vmatprep.subr.mxu0 0.0
    %2755 = vmatpush2.msra.mxu0 0.0
    %2756 = vmatprep.subr.mxu0 0.0
    %2757 = vmatpush2.msra.mxu0 0.0
    %2758 = vmatprep.mubr.f32.mxu0 0.0
    %2759 = vmatmul.mubr.f32.gmra.mxu0 %v2689
    %v2760 = vpop.f32.mrf.mxu0
    %v2761 = vadd.f32 %v2687, %v2760
    %v2762 = vpop.f32.mrf.mxu0
    %2763 = vmatprep.mubr.f32.mxu0 0.0
    %2764 = vmatmul.mubr.f32.gmra.mxu0 %v2692
    %v2765 = vpop.f32.mrf.mxu0
    %v2766 = vadd.f32 %v2687, %v2765
    %v2767 = vpop.f32.mrf.mxu0
    %2768 = vdwg.mxu0
    %v2769 = vadd.f32 %v2761, %v2563
    %v2770 = vadd.f32 %v2766, %v2564
    %v2771 = vld [vmem:[%s6 + $0x1a] sm:$0x1]
    %v2772 = vld [vmem:[%s6 + $0x1b] sm:$0x1]
    %v2773 = vsel %vm39, %v2769, 0.0
    %2774 = vadd.xlane.f32.xlu0 %v2773
    %v2775 = vpop.xlane.xlu0 %2774
    %v2776 = vsel %vm39, %v2770, 0.0
    %2777 = vadd.xlane.f32.xlu0 %v2776
    %v2778 = vpop.xlane.xlu0 %2777
    %v2779 = vmul.f32 %v2775, %v46
    %v2780 = vmul.f32 %v2778, %v46
    %v2781 = vsub.f32 %v2769, %v2779
    %v2782 = vsub.f32 %v2770, %v2780
    %v2783 = vmul.f32 %v2781, %v2781
    %v2784 = vmul.f32 %v2782, %v2782
    %v2785 = vsel %vm39, %v2783, 0.0
    %2786 = vadd.xlane.f32.xlu0 %v2785
    %v2787 = vpop.xlane.xlu0 %2786
    %v2788 = vsel %vm39, %v2784, 0.0
    %2789 = vadd.xlane.f32.xlu0 %v2788
    %v2790 = vpop.xlane.xlu0 %2789
    %v2791 = vmul.f32 %v2787, %v46
    %v2792 = vmul.f32 %v2790, %v46
    %v2793 = vadd.f32 %v2791, 1e-12
    %v2794 = vadd.f32 %v2792, 1e-12
    %v2795 = vrsqrt.pop %v2793
    %v2796 = vrsqrt.pop %v2794
    %v2797 = vmul.f32 %v2781, %v2795
    %v2798 = vmul.f32 %v2782, %v2796
    %v2799 = vlaneseq
    %v2800 = vshrl.u32 %v2799, 7
    %v2801 = vsub.s32 0, %v2800
    %v2802 = vrot.slane %v2771, %v2801
    %v2803 = vmul.f32 %v2797, %v2802
    %v2804 = vmul.f32 %v2798, %v2802
    %v2805 = vlaneseq
    %v2806 = vshrl.u32 %v2805, 7
    %v2807 = vsub.s32 0, %v2806
    %v2808 = vrot.slane %v2772, %v2807
    %v2809 = vadd.f32 %v2803, %v2808
    %v2810 = vadd.f32 %v2804, %v2808
    %2811 = vst.msk [vmem:[#allocation2] sm:$0xff] %vm39, %v2809
    %2812 = vst.msk [vmem:[#allocation2 + $0x8] sm:$0xff] %vm39, %v2810
    %v2813 = vld [vmem:[#allocation2] ss:$8 sm:$0x3]
    %v2814 = vld [vmem:[%s7] sm:$0xff]
    %v2815 = vld [vmem:[%s7 + $0x8] sm:$0xff]
    %v2816 = vld [vmem:[%s7 + $0x10] sm:$0xff]
    %v2817 = vld [vmem:[%s7 + $0x18] sm:$0xff]
    %v2818 = vld [vmem:[%s7 + $0x20] sm:$0xff]
    %v2819 = vld [vmem:[%s7 + $0x28] sm:$0xff]
    %v2820 = vld [vmem:[%s7 + $0x30] sm:$0xff]
    %v2821 = vld [vmem:[%s7 + $0x38] sm:$0xff]
    %v2822 = vld [vmem:[%s7 + $0x40] sm:$0xff]
    %v2823 = vld [vmem:[%s7 + $0x48] sm:$0xff]
    %v2824 = vld [vmem:[%s7 + $0x50] sm:$0xff]
    %v2825 = vld [vmem:[%s7 + $0x58] sm:$0xff]
    %v2826 = vld [vmem:[%s7 + $0x60] sm:$0xff]
    %v2827 = vld [vmem:[%s7 + $0x68] sm:$0xff]
    %v2828 = vld [vmem:[%s7 + $0x70] sm:$0xff]
    %v2829 = vld [vmem:[%s7 + $0x78] sm:$0xff]
    %v2830 = vld [vmem:[%s7 + $0x80] sm:$0xff]
    %v2831 = vld [vmem:[%s7 + $0x88] sm:$0xff]
    %v2832 = vld [vmem:[%s7 + $0x90] sm:$0xff]
    %v2833 = vld [vmem:[%s7 + $0x98] sm:$0xff]
    %v2834 = vld [vmem:[%s6 + $0x1c] sm:$0x1]
    %v2835 = vlaneseq
    %v2836 = vshrl.u32 %v2835, 7
    %v2837 = vsub.s32 0, %v2836
    %v2838 = vrot.slane %v2834, %v2837
    %v2840 = vsel %vm39, %v2813, 0
    %2842 = vmatprep.subr.mxu0 0.0
    %2843 = vmatpush1.msra.mxu0 0.0
    %2844 = vmatprep.subr.mxu0 0.0
    %2845 = vmatpush1.msra.mxu0 0.0
    %2846 = vmatprep.subr.mxu0 0.0
    %2847 = vmatpush1.msra.mxu0 0.0
    %2848 = vmatprep.subr.mxu0 0.0
    %2849 = vmatpush1.msra.mxu0 0.0
    %2850 = vmatprep.subr.mxu0 0.0
    %2851 = vmatpush1.msra.mxu0 0.0
    %2852 = vmatprep.subr.mxu0 0.0
    %2853 = vmatpush1.msra.mxu0 0.0
    %2854 = vmatprep.subr.mxu0 0.0
    %2855 = vmatpush1.msra.mxu0 0.0
    %2856 = vmatprep.subr.mxu0 0.0
    %2857 = vmatpush1.msra.mxu0 0.0
    %2858 = vmatprep.subr.mxu0 0.0
    %2859 = vmatpush1.msra.mxu0 0.0
    %2860 = vmatprep.subr.mxu0 0.0
    %2861 = vmatpush1.msra.mxu0 0.0
    %2862 = vmatprep.subr.mxu0 0.0
    %2863 = vmatpush1.msra.mxu0 0.0
    %2864 = vmatprep.subr.mxu0 0.0
    %2865 = vmatpush1.msra.mxu0 0.0
    %2866 = vmatprep.subr.mxu0 0.0
    %2867 = vmatpush1.msra.mxu0 %v2817
    %2868 = vmatprep.subr.mxu0 0.0
    %2869 = vmatpush1.msra.mxu0 %v2816
    %2870 = vmatprep.subr.mxu0 0.0
    %2871 = vmatpush1.msra.mxu0 %v2815
    %2872 = vmatprep.subr.mxu0 0.0
    %2873 = vmatpush1.msra.mxu0 %v2814
    %2874 = vmatprep.subr.mxu0 0.0
    %2875 = vmatpush2.msra.mxu0 0.0
    %2876 = vmatprep.subr.mxu0 0.0
    %2877 = vmatpush2.msra.mxu0 0.0
    %2878 = vmatprep.subr.mxu0 0.0
    %2879 = vmatpush2.msra.mxu0 0.0
    %2880 = vmatprep.subr.mxu0 0.0
    %2881 = vmatpush2.msra.mxu0 0.0
    %2882 = vmatprep.subr.mxu0 0.0
    %2883 = vmatpush2.msra.mxu0 0.0
    %2884 = vmatprep.subr.mxu0 0.0
    %2885 = vmatpush2.msra.mxu0 0.0
    %2886 = vmatprep.subr.mxu0 0.0
    %2887 = vmatpush2.msra.mxu0 0.0
    %2888 = vmatprep.subr.mxu0 0.0
    %2889 = vmatpush2.msra.mxu0 0.0
    %2890 = vmatprep.subr.mxu0 0.0
    %2891 = vmatpush2.msra.mxu0 0.0
    %2892 = vmatprep.subr.mxu0 0.0
    %2893 = vmatpush2.msra.mxu0 0.0
    %2894 = vmatprep.subr.mxu0 0.0
    %2895 = vmatpush2.msra.mxu0 0.0
    %2896 = vmatprep.subr.mxu0 0.0
    %2897 = vmatpush2.msra.mxu0 0.0
    %2898 = vmatprep.subr.mxu0 0.0
    %2899 = vmatpush2.msra.mxu0 0.0
    %2900 = vmatprep.subr.mxu0 0.0
    %2901 = vmatpush2.msra.mxu0 0.0
    %2902 = vmatprep.subr.mxu0 0.0
    %2903 = vmatpush2.msra.mxu0 0.0
    %2904 = vmatprep.subr.mxu0 0.0
    %2905 = vmatpush2.msra.mxu0 0.0
    %2906 = vmatprep.mubr.f32.mxu0 0.0
    %2907 = vmatmul.mubr.f32.gmra.mxu0 %v2840
    %v2908 = vpop.f32.mrf.mxu0
    %v2909 = vadd.f32 %v2838, %v2908
    %v2910 = vpop.f32.mrf.mxu0
    %2911 = vdwg.mxu0
    %v2912 = vtanh.pop %v2909
    %2913 = vst [vmem:[#allocation3] sm:$0x3] %v2912
    %v2914 = vld [vmem:[%s6 + $0x1d] sm:$0x1]
    %v2915 = vlaneseq
    %v2916 = vshrl.u32 %v2915, 7
    %v2917 = vsub.s32 0, %v2916
    %v2918 = vrot.slane %v2914, %v2917
    %2919 = vmatprep.subr.mxu0 0.0
    %2920 = vmatpush1.msra.mxu0 %v2833
    %2921 = vmatprep.subr.mxu0 0.0
    %2922 = vmatpush1.msra.mxu0 %v2832
    %2923 = vmatprep.subr.mxu0 0.0
    %2924 = vmatpush1.msra.mxu0 %v2831
    %2925 = vmatprep.subr.mxu0 0.0
    %2926 = vmatpush1.msra.mxu0 %v2830
    %2927 = vmatprep.subr.mxu0 0.0
    %2928 = vmatpush1.msra.mxu0 %v2829
    %2929 = vmatprep.subr.mxu0 0.0
    %2930 = vmatpush1.msra.mxu0 %v2828
    %2931 = vmatprep.subr.mxu0 0.0
    %2932 = vmatpush1.msra.mxu0 %v2827
    %2933 = vmatprep.subr.mxu0 0.0
    %2934 = vmatpush1.msra.mxu0 %v2826
    %2935 = vmatprep.subr.mxu0 0.0
    %2936 = vmatpush1.msra.mxu0 %v2825
    %2937 = vmatprep.subr.mxu0 0.0
    %2938 = vmatpush1.msra.mxu0 %v2824
    %2939 = vmatprep.subr.mxu0 0.0
    %2940 = vmatpush1.msra.mxu0 %v2823
    %2941 = vmatprep.subr.mxu0 0.0
    %2942 = vmatpush1.msra.mxu0 %v2822
    %2943 = vmatprep.subr.mxu0 0.0
    %2944 = vmatpush1.msra.mxu0 %v2821
    %2945 = vmatprep.subr.mxu0 0.0
    %2946 = vmatpush1.msra.mxu0 %v2820
    %2947 = vmatprep.subr.mxu0 0.0
    %2948 = vmatpush1.msra.mxu0 %v2819
    %2949 = vmatprep.subr.mxu0 0.0
    %2950 = vmatpush1.msra.mxu0 %v2818
    %2951 = vmatprep.subr.mxu0 0.0
    %2952 = vmatpush2.msra.mxu0 0.0
    %2953 = vmatprep.subr.mxu0 0.0
    %2954 = vmatpush2.msra.mxu0 0.0
    %2955 = vmatprep.subr.mxu0 0.0
    %2956 = vmatpush2.msra.mxu0 0.0
    %2957 = vmatprep.subr.mxu0 0.0
    %2958 = vmatpush2.msra.mxu0 0.0
    %2959 = vmatprep.subr.mxu0 0.0
    %2960 = vmatpush2.msra.mxu0 0.0
    %2961 = vmatprep.subr.mxu0 0.0
    %2962 = vmatpush2.msra.mxu0 0.0
    %2963 = vmatprep.subr.mxu0 0.0
    %2964 = vmatpush2.msra.mxu0 0.0
    %2965 = vmatprep.subr.mxu0 0.0
    %2966 = vmatpush2.msra.mxu0 0.0
    %2967 = vmatprep.subr.mxu0 0.0
    %2968 = vmatpush2.msra.mxu0 0.0
    %2969 = vmatprep.subr.mxu0 0.0
    %2970 = vmatpush2.msra.mxu0 0.0
    %2971 = vmatprep.subr.mxu0 0.0
    %2972 = vmatpush2.msra.mxu0 0.0
    %2973 = vmatprep.subr.mxu0 0.0
    %2974 = vmatpush2.msra.mxu0 0.0
    %2975 = vmatprep.subr.mxu0 0.0
    %2976 = vmatpush2.msra.mxu0 0.0
    %2977 = vmatprep.subr.mxu0 0.0
    %2978 = vmatpush2.msra.mxu0 0.0
    %2979 = vmatprep.subr.mxu0 0.0
    %2980 = vmatpush2.msra.mxu0 0.0
    %2981 = vmatprep.subr.mxu0 0.0
    %2982 = vmatpush2.msra.mxu0 0.0
    %2983 = vmatprep.mubr.f32.mxu0 0.0
    %2984 = vmatmul.mubr.f32.gmra.mxu0 %v2912
    %v2985 = vpop.f32.mrf.mxu0
    %v2986 = vadd.f32 %v2918, %v2985
    %v2987 = vpop.f32.mrf.mxu0
    %2988 = vdwg.mxu0
    %2989 = vst [vmem:[#allocation5] sm:$0x3] %v2986
    // Predicated region
    $region34: #{bert_classify_forward.1} parent=1 // pred_check
      _
    $region35: #{bert_classify_forward.1} parent=1 // pred_check_branch
      %2991 = sbr.rel (0) target = $region37
    $region36: #{bert_classify_forward.1} parent=1 // pred_region
      %s2993 = ssub.s32 32, 32
      %2994 = vsyncadd [#allocation4], %s2993
      %s2996 = sshll.u32 [#allocation3], 4
      %s2997 = int_to_ptr.vmem [resolvable:$true] %s2996
      %2999 = dma.vmem_to_hbm [thread:$0]  %s2997, 32, %s8, [#allocation4]
    $region37: #{bert_classify_forward.1} parent=1 // pred_fallthru
      _
    // Predicated region
    $region38: #{bert_classify_forward.1} parent=1 // pred_check
      _
    $region39: #{bert_classify_forward.1} parent=1 // pred_check_branch
      %3001 = sbr.rel (0) target = $region41
    $region40: #{bert_classify_forward.1} parent=1 // pred_region
      %s3003 = ssub.s32 32, 32
      %3004 = vsyncadd [#allocation6], %s3003
      %s3006 = sshll.u32 [#allocation5], 4
      %s3007 = int_to_ptr.vmem [resolvable:$true] %s3006
      %3009 = dma.vmem_to_hbm [thread:$0]  %s3007, 32, %s9, [#allocation6]
    $region41: #{bert_classify_forward.1} parent=1 // pred_fallthru
      _
    // Predicated region
    $region42: #{bert_classify_forward.1} parent=1 // pred_check
      _
    $region43: #{bert_classify_forward.1} parent=1 // pred_check_branch
      %3011 = sbr.rel (0) target = $region45
    $region44: #{bert_classify_forward.1} parent=1 // pred_region
      %3012 = dma.done [#allocation4], 32
    $region45: #{bert_classify_forward.1} parent=1 // pred_fallthru
      _
    // Predicated region
    $region46: #{bert_classify_forward.1} parent=1 // pred_check
      _
    $region47: #{bert_classify_forward.1} parent=1 // pred_check_branch
      %3014 = sbr.rel (0) target = $region49
    $region48: #{bert_classify_forward.1} parent=1 // pred_region
      %3015 = dma.done [#allocation6], 32
    $region49: #{bert_classify_forward.1} parent=1 // pred_fallthru
      _
    %3016 = vsyncpa [#allocation4], 1
    %3017 = vsyncpa [#allocation6], 1

</llo_original>
